<compile_context>
chip_gen: v6e
topology: v6e:2x2x1
jax: 0.10.0
libtpu: 0.0.40
codegen_flags: <defaults>
</compile_context>

<pallas_src>
import jax
import jax.numpy as jnp
from jax import lax
from jax.experimental import pallas as pl
from jax.experimental.pallas import tpu as pltpu


# ----------------------------------------------------------------------------
# Fused LeNet5 kernel: B images per grid step
# ----------------------------------------------------------------------------
def _lenet5_kernel(xw_ref, w1_ref, b1_ref, w2_ref, b2_ref,
                   wfc1_ref, bfc1_ref, wfc2_ref, bfc2_ref,
                   wfc3_ref, bfc3_ref, out_ref, pool1_s, c2_s):
    f32 = jnp.float32
    bf16 = jnp.bfloat16
    B = out_ref.shape[0]          # images in this grid step
    B16 = 16 * B                  # rows: 16 per image (14 valid pool1 rows)

    # ---- conv1 (5x5, 1->6) + ReLU + 2x2 maxpool: ONE dot --------------------
    # xw_ref row b*16+t holds input rows 2t..2t+5 (192 lanes); the banded
    # weight produces all 4 pool parity combos in 4 lane groups of 128.
    pre = jnp.dot(xw_ref[...], w1_ref[...],
                  preferred_element_type=f32)               # (B16, 512)
    m1 = jnp.maximum(jnp.maximum(pre[:, 0:128], pre[:, 128:256]),
                     jnp.maximum(pre[:, 256:384], pre[:, 384:512]))
    pool1 = jnp.maximum(m1 + b1_ref[...], 0.0)               # (B16, 128)
    # pool1 row b*16+t, lane xp*6+c  (lanes 84..127 are zero)

    pool1_s[0:B16, :] = pool1
    pool1_s[B16:B16 + 8, :] = jnp.zeros((8, 128), f32)       # pad rows

    # ---- conv2 (5x5, 6->16), column-parity folded into 256 lanes ------------
    # Row y of image b needs pool1 rows y..y+4: shifted contiguous slabs.
    c2 = None
    for i in range(5):
        slab = pool1_s[i:i + B16, :].astype(bf16)            # (B16, 128)
        d = jnp.dot(slab, w2_ref[i], preferred_element_type=f32)
        c2 = d if c2 is None else c2 + d                     # (B16, 256)
    c2_s[...] = jnp.maximum(c2[:, 0:128], c2[:, 128:256])    # col-pair max

    # ---- pool2 (height) + bias + ReLU folded into fc1 -----------------------
    # pool2 row t of image b = max(c2 rows 2t, 2t+1) -> stride-16 row gathers.
    fc1 = None
    for t in range(5):
        r0 = c2_s[pl.ds(2 * t, B, stride=16), :]             # (B, 128)
        r1 = c2_s[pl.ds(2 * t + 1, B, stride=16), :]
        p2 = jnp.maximum(jnp.maximum(r0, r1) + b2_ref[...], 0.0)
        d = jnp.dot(p2.astype(bf16), wfc1_ref[t],
                    preferred_element_type=f32)              # (B, 128)
        fc1 = d if fc1 is None else fc1 + d

    # ---- fc tail, fully batched ---------------------------------------------
    h1 = jnp.maximum(fc1 + bfc1_ref[...], 0.0)               # (B, 128)
    h2 = jnp.dot(h1.astype(bf16), wfc2_ref[...], preferred_element_type=f32)
    h2 = jnp.maximum(h2 + bfc2_ref[...], 0.0)                # (B, 128)
    logits = jnp.dot(h2.astype(bf16), wfc3_ref[...],
                     preferred_element_type=f32) + bfc3_ref[...]
    out_ref[...] = logits.astype(out_ref.dtype)              # (B, 128)


# ----------------------------------------------------------------------------
# Wrapper-side weight preparation (pure JAX glue, tiny)
# ----------------------------------------------------------------------------
def _prepare(params):
    f32, bf16 = jnp.float32, jnp.bfloat16
    w1 = params["conv1_w"].astype(f32)        # (6, 1, 5, 5)
    b1 = params["conv1_b"].astype(f32)
    w2 = params["conv2_w"].astype(f32)        # (16, 6, 5, 5)
    b2 = params["conv2_b"].astype(f32)

    # conv1 banded weight over the 6-row window; 4 pool-parity combos folded
    # into 4 lane groups of 128 (valid lane = xp*6 + oc, xp<14, oc<6).
    def band1(q, p):
        r = jnp.arange(6)[:, None, None]            # window-local input row
        xin = jnp.arange(32)[None, :, None]          # input col
        xp = jnp.arange(14)[None, None, :]           # pooled output col
        i = r - q
        j = xin - 2 * xp - p
        valid = (i >= 0) & (i < 5) & (j >= 0) & (j < 5)
        w = w1[:, 0]                                 # (oc, kh, kw)
        g = w[:, jnp.clip(i, 0, 4), jnp.clip(j, 0, 4)]   # (oc, 6, 32, 14)
        g = jnp.where(valid[None], g, 0.0)
        g = jnp.transpose(g, (1, 2, 3, 0))           # (r, xin, xp, oc)
        return g.reshape(192, 84)

    w1big = jnp.zeros((192, 512), f32)
    for gi, (q, p) in enumerate(((0, 0), (0, 1), (1, 0), (1, 1))):
        w1big = w1big.at[:, gi * 128:gi * 128 + 84].set(band1(q, p))
    b1t = jnp.zeros((1, 128), f32).at[0, :84].set(jnp.tile(b1, 14))

    # conv2 banded weight per kernel-row offset, col parity folded into lanes
    # (valid out lane = p*128 + xp2*16 + oc; valid in lane = xp1*6 + ic).
    def band2(p):
        xp1 = jnp.arange(14)[:, None]
        xp2 = jnp.arange(5)[None, :]
        j = xp1 - 2 * xp2 - p
        valid = (j >= 0) & (j < 5)
        wt = jnp.transpose(w2, (2, 3, 1, 0))         # (kh, kw, ic, oc)
        g = wt[:, jnp.clip(j, 0, 4)]                 # (kh, xp1, xp2, ic, oc)
        g = jnp.where(valid[None, :, :, None, None], g, 0.0)
        g = jnp.transpose(g, (0, 1, 3, 2, 4))        # (kh, xp1, ic, xp2, oc)
        return g.reshape(5, 84, 80)

    w2big = jnp.zeros((5, 128, 256), f32)
    for p in (0, 1):
        w2big = w2big.at[:, :84, p * 128:p * 128 + 80].set(band2(p))
    b2t = jnp.zeros((1, 128), f32).at[0, :80].set(jnp.tile(b2, 5))

    # fc1: per pool2-row weight, matching PyTorch's view(-1, 400) order
    # (flat index = oc*25 + t2*5 + xp2) against our lane layout xp2*16+oc.
    fw = params["fc1_w"].astype(f32).reshape(120, 16, 5, 5)  # (k, oc, t2, xp2)
    wfc1 = jnp.transpose(fw, (2, 3, 1, 0)).reshape(5, 80, 120)
    wfc1p = jnp.zeros((5, 128, 128), f32).at[:, :80, :120].set(wfc1)
    bfc1 = jnp.zeros((1, 128), f32).at[0, :120].set(params["fc1_b"].astype(f32))

    wfc2 = jnp.zeros((128, 128), f32).at[:120, :84].set(
        params["fc2_w"].astype(f32).T)
    bfc2 = jnp.zeros((1, 128), f32).at[0, :84].set(params["fc2_b"].astype(f32))
    wfc3 = jnp.zeros((128, 128), f32).at[:84, :10].set(
        params["fc3_w"].astype(f32).T)
    bfc3 = jnp.zeros((1, 128), f32).at[0, :10].set(params["fc3_b"].astype(f32))

    return dict(
        w1=w1big.astype(bf16), b1=b1t,
        w2=w2big.astype(bf16), b2=b2t,
        wfc1=wfc1p.astype(bf16), bfc1=bfc1,
        wfc2=wfc2.astype(bf16), bfc2=bfc2,
        wfc3=wfc3.astype(bf16), bfc3=bfc3,
    )


def _pick_block(n):
    # Keep >=2 grid steps when possible (v7x megacore), otherwise one step.
    for b in (32, 16):
        if n >= 2 * b:
            return b
    return 8


# ----------------------------------------------------------------------------
# Forward pass
# ----------------------------------------------------------------------------
def lenet5_forward(params, x_nchw):
    # x_nchw: (N, 1, 32, 32) float32 (PyTorch NCHW convention)
    n = x_nchw.shape[0]
    B = _pick_block(n)
    n_pad = -(-n // B) * B
    p = _prepare(params)

    x2 = x_nchw[:, 0].astype(jnp.float32)                    # (N, 32, 32)
    if n_pad != n:
        x2 = jnp.pad(x2, ((0, n_pad - n), (0, 0), (0, 0)))

    # Row-windowed input: pool1 row t needs input rows 2t..2t+5.
    win = jnp.stack([x2[:, 2 * t:2 * t + 6, :] for t in range(14)], axis=1)
    win = jnp.pad(win, ((0, 0), (0, 2), (0, 0), (0, 0)))     # 14 -> 16 rows
    xw = win.reshape(n_pad * 16, 6 * 32).astype(jnp.bfloat16)

    def const_spec(a):
        nd = a.ndim
        return pl.BlockSpec(a.shape, lambda g, _nd=nd: (0,) * _nd)

    weight_keys = ("w1", "b1", "w2", "b2",
                   "wfc1", "bfc1", "wfc2", "bfc2", "wfc3", "bfc3")

    out = pl.pallas_call(
        _lenet5_kernel,
        out_shape=jax.ShapeDtypeStruct((n_pad, 128), jnp.float32),
        grid=(n_pad // B,),
        in_specs=[pl.BlockSpec((B * 16, 192), lambda g: (g, 0))]
                 + [const_spec(p[k]) for k in weight_keys],
        out_specs=pl.BlockSpec((B, 128), lambda g: (g, 0)),
        scratch_shapes=[pltpu.VMEM((B * 16 + 8, 128), jnp.float32),  # pool1
                        pltpu.VMEM((B * 16, 128), jnp.float32)],     # conv2
        compiler_params=pltpu.CompilerParams(
            dimension_semantics=("parallel",)),
    )(xw, *[p[k] for k in weight_keys])

    return out[:n, :10]                                       # (N, 10)


# ----------------------------------------------------------------------------
# Parameters and a pure-JAX reference for validation
# ----------------------------------------------------------------------------
def init_params(key):
    keys = jax.random.split(key, 10)

    def init(k, shape, fan_in):
        return jax.random.normal(k, shape, jnp.float32) / jnp.sqrt(
            jnp.float32(fan_in))

    return {
        "conv1_w": init(keys[0], (6, 1, 5, 5), 1 * 5 * 5),
        "conv1_b": init(keys[1], (6,), 1 * 5 * 5),
        "conv2_w": init(keys[2], (16, 6, 5, 5), 6 * 5 * 5),
        "conv2_b": init(keys[3], (16,), 6 * 5 * 5),
        "fc1_w": init(keys[4], (120, 400), 400),
        "fc1_b": init(keys[5], (120,), 400),
        "fc2_w": init(keys[6], (84, 120), 120),
        "fc2_b": init(keys[7], (84,), 120),
        "fc3_w": init(keys[8], (10, 84), 84),
        "fc3_b": init(keys[9], (10,), 84),
    }


def _reference_forward(params, x):
    def conv(x, w, b):
        y = lax.conv_general_dilated(
            x, w, (1, 1), "VALID",
            dimension_numbers=("NCHW", "OIHW", "NCHW"))
        return y + b[None, :, None, None]

    def pool(x):
        return lax.reduce_window(x, -jnp.inf, lax.max,
                                 (1, 1, 2, 2), (1, 1, 2, 2), "VALID")

    x = pool(jax.nn.relu(conv(x, params["conv1_w"], params["conv1_b"])))
    x = pool(jax.nn.relu(conv(x, params["conv2_w"], params["conv2_b"])))
    x = x.reshape(x.shape[0], 16 * 5 * 5)
    x = jax.nn.relu(x @ params["fc1_w"].T + params["fc1_b"])
    x = jax.nn.relu(x @ params["fc2_w"].T + params["fc2_b"])
    return x @ params["fc3_w"].T + params["fc3_b"]


if __name__ == "__main__":
    key = jax.random.PRNGKey(0)
    k_param, k_x = jax.random.split(key)
    params = init_params(k_param)

    # LeNet5 requires 32x32 single-channel spatial input; small batch.
    x = jax.random.normal(k_x, (2, 1, 32, 32), jnp.float32)

    fwd = jax.jit(lenet5_forward)
    out = jax.block_until_ready(fwd(params, x))

    assert out.shape == (2, 10), out.shape
    assert out.dtype == jnp.float32

    ref = _reference_forward(params, x)
    # bf16 MXU inputs with f32 accumulation -> loose tolerance.
    assert jnp.allclose(out, ref, atol=5e-2, rtol=5e-2), (
        float(jnp.max(jnp.abs(out - ref))))

    print("KERNEL_OK")
</pallas_src>

<mosaic_0001>
module attributes {stable_mosaic.version = 11 : i64} {
  func.func @_lenet5_kernel(%arg0: i32, %arg1: memref<128x192xbf16, #tpu.memory_space<vmem>>, %arg2: memref<192x512xbf16, #tpu.memory_space<vmem>>, %arg3: memref<1x128xf32, #tpu.memory_space<vmem>>, %arg4: memref<5x128x256xbf16, #tpu.memory_space<vmem>>, %arg5: memref<1x128xf32, #tpu.memory_space<vmem>>, %arg6: memref<5x128x128xbf16, #tpu.memory_space<vmem>>, %arg7: memref<1x128xf32, #tpu.memory_space<vmem>>, %arg8: memref<128x128xbf16, #tpu.memory_space<vmem>>, %arg9: memref<1x128xf32, #tpu.memory_space<vmem>>, %arg10: memref<128x128xbf16, #tpu.memory_space<vmem>>, %arg11: memref<1x128xf32, #tpu.memory_space<vmem>>, %arg12: memref<8x128xf32, #tpu.memory_space<vmem>>, %arg13: memref<136x128xf32, #tpu.memory_space<vmem>>, %arg14: memref<128x128xf32, #tpu.memory_space<vmem>>) attributes {dimension_semantics = [#tpu.dimension_semantics<parallel>], iteration_bounds = array<i64: 1>, scalar_prefetch = 0 : i64, scratch_operands = 2 : i64, tpu.core_type = #tpu.core_type<tc>, window_params = [{transform_indices = @transform_0, window_bounds = array<i64: 128, 192>}, {pipeline_mode = #tpu.pipeline_mode<synchronous>, transform_indices = @transform_1, window_bounds = array<i64: 192, 512>}, {pipeline_mode = #tpu.pipeline_mode<synchronous>, transform_indices = @transform_2, window_bounds = array<i64: 1, 128>}, {pipeline_mode = #tpu.pipeline_mode<synchronous>, transform_indices = @transform_3, window_bounds = array<i64: 5, 128, 256>}, {pipeline_mode = #tpu.pipeline_mode<synchronous>, transform_indices = @transform_4, window_bounds = array<i64: 1, 128>}, {pipeline_mode = #tpu.pipeline_mode<synchronous>, transform_indices = @transform_5, window_bounds = array<i64: 5, 128, 128>}, {pipeline_mode = #tpu.pipeline_mode<synchronous>, transform_indices = @transform_6, window_bounds = array<i64: 1, 128>}, {pipeline_mode = #tpu.pipeline_mode<synchronous>, transform_indices = @transform_7, window_bounds = array<i64: 128, 128>}, {pipeline_mode = #tpu.pipeline_mode<synchronous>, transform_indices = @transform_8, window_bounds = array<i64: 1, 128>}, {pipeline_mode = #tpu.pipeline_mode<synchronous>, transform_indices = @transform_9, window_bounds = array<i64: 128, 128>}, {pipeline_mode = #tpu.pipeline_mode<synchronous>, transform_indices = @transform_10, window_bounds = array<i64: 1, 128>}, {transform_indices = @transform_11, window_bounds = array<i64: 8, 128>}]} {
    %c0 = arith.constant 0 : index
    %c0_0 = arith.constant 0 : index
    %0 = vector.load %arg1[%c0, %c0_0] : memref<128x192xbf16, #tpu.memory_space<vmem>>, vector<128x192xbf16>
    %c0_1 = arith.constant 0 : index
    %c0_2 = arith.constant 0 : index
    %1 = vector.load %arg2[%c0_1, %c0_2] : memref<192x512xbf16, #tpu.memory_space<vmem>>, vector<192x512xbf16>
    %cst = arith.constant dense<0.000000e+00> : vector<128x512xf32>
    %2 = tpu.matmul %0, %1, %cst {dimension_numbers = #tpu.dot_dimension_numbers<[1], [0], [0], [1], [0, 0, 1, 1], [], []>} : vector<128x192xbf16>, vector<192x512xbf16>, vector<128x512xf32> -> vector<128x512xf32>
    %3 = vector.extract_strided_slice %2 {offsets = [0, 0], sizes = [128, 128], strides = [1, 1]} : vector<128x512xf32> to vector<128x128xf32>
    %4 = vector.extract_strided_slice %2 {offsets = [0, 128], sizes = [128, 128], strides = [1, 1]} : vector<128x512xf32> to vector<128x128xf32>
    %5 = arith.maximumf %3, %4 : vector<128x128xf32>
    %6 = vector.extract_strided_slice %2 {offsets = [0, 256], sizes = [128, 128], strides = [1, 1]} : vector<128x512xf32> to vector<128x128xf32>
    %7 = vector.extract_strided_slice %2 {offsets = [0, 384], sizes = [128, 128], strides = [1, 1]} : vector<128x512xf32> to vector<128x128xf32>
    %8 = arith.maximumf %6, %7 : vector<128x128xf32>
    %9 = arith.maximumf %5, %8 : vector<128x128xf32>
    %c0_3 = arith.constant 0 : index
    %c0_4 = arith.constant 0 : index
    %10 = vector.load %arg3[%c0_3, %c0_4] : memref<1x128xf32, #tpu.memory_space<vmem>>, vector<1x128xf32>
    %11 = vector.broadcast %10 : vector<1x128xf32> to vector<128x128xf32>
    %12 = arith.addf %9, %11 : vector<128x128xf32>
    %cst_5 = arith.constant 0.000000e+00 : f32
    %13 = vector.broadcast %cst_5 : f32 to vector<128x128xf32>
    %14 = arith.maximumf %12, %13 : vector<128x128xf32>
    %c0_6 = arith.constant 0 : index
    %c0_7 = arith.constant 0 : index
    %15 = vector.load %arg13[%c0_6, %c0_7] : memref<136x128xf32, #tpu.memory_space<vmem>>, vector<128x128xf32>
    tpu.vector_store %arg13[%c0_6, %c0_7], %14 {strides = array<i32>} : memref<136x128xf32, #tpu.memory_space<vmem>>, vector<128x128xf32>,
    %cst_8 = arith.constant 0.000000e+00 : f32
    %16 = vector.broadcast %cst_8 : f32 to vector<8x128xf32>
    %c128 = arith.constant 128 : index
    %c0_9 = arith.constant 0 : index
    %17 = vector.load %arg13[%c128, %c0_9] : memref<136x128xf32, #tpu.memory_space<vmem>>, vector<8x128xf32>
    tpu.vector_store %arg13[%c128, %c0_9], %16 {strides = array<i32>} : memref<136x128xf32, #tpu.memory_space<vmem>>, vector<8x128xf32>,
    %c0_10 = arith.constant 0 : index
    %c0_11 = arith.constant 0 : index
    %18 = vector.load %arg13[%c0_10, %c0_11] : memref<136x128xf32, #tpu.memory_space<vmem>>, vector<128x128xf32>
    %19 = arith.truncf %18 : vector<128x128xf32> to vector<128x128xbf16>
    %c0_12 = arith.constant 0 : index
    %c0_13 = arith.constant 0 : index
    %c0_14 = arith.constant 0 : index
    %20 = vector.load %arg4[%c0_12, %c0_13, %c0_14] : memref<5x128x256xbf16, #tpu.memory_space<vmem>>, vector<1x128x256xbf16>
    %21 = vector.shape_cast %20 : vector<1x128x256xbf16> to vector<128x256xbf16>
    %cst_15 = arith.constant dense<0.000000e+00> : vector<128x256xf32>
    %22 = tpu.matmul %19, %21, %cst_15 {dimension_numbers = #tpu.dot_dimension_numbers<[1], [0], [0], [1], [0, 0, 1, 1], [], []>} : vector<128x128xbf16>, vector<128x256xbf16>, vector<128x256xf32> -> vector<128x256xf32>
    %c1 = arith.constant 1 : index
    %c0_16 = arith.constant 0 : index
    %23 = vector.load %arg13[%c1, %c0_16] : memref<136x128xf32, #tpu.memory_space<vmem>>, vector<128x128xf32>
    %24 = arith.truncf %23 : vector<128x128xf32> to vector<128x128xbf16>
    %c1_17 = arith.constant 1 : index
    %c0_18 = arith.constant 0 : index
    %c0_19 = arith.constant 0 : index
    %25 = vector.load %arg4[%c1_17, %c0_18, %c0_19] : memref<5x128x256xbf16, #tpu.memory_space<vmem>>, vector<1x128x256xbf16>
    %26 = vector.shape_cast %25 : vector<1x128x256xbf16> to vector<128x256xbf16>
    %cst_20 = arith.constant dense<0.000000e+00> : vector<128x256xf32>
    %27 = tpu.matmul %24, %26, %cst_20 {dimension_numbers = #tpu.dot_dimension_numbers<[1], [0], [0], [1], [0, 0, 1, 1], [], []>} : vector<128x128xbf16>, vector<128x256xbf16>, vector<128x256xf32> -> vector<128x256xf32>
    %28 = arith.addf %22, %27 : vector<128x256xf32>
    %c2 = arith.constant 2 : index
    %c0_21 = arith.constant 0 : index
    %29 = vector.load %arg13[%c2, %c0_21] : memref<136x128xf32, #tpu.memory_space<vmem>>, vector<128x128xf32>
    %30 = arith.truncf %29 : vector<128x128xf32> to vector<128x128xbf16>
    %c2_22 = arith.constant 2 : index
    %c0_23 = arith.constant 0 : index
    %c0_24 = arith.constant 0 : index
    %31 = vector.load %arg4[%c2_22, %c0_23, %c0_24] : memref<5x128x256xbf16, #tpu.memory_space<vmem>>, vector<1x128x256xbf16>
    %32 = vector.shape_cast %31 : vector<1x128x256xbf16> to vector<128x256xbf16>
    %cst_25 = arith.constant dense<0.000000e+00> : vector<128x256xf32>
    %33 = tpu.matmul %30, %32, %cst_25 {dimension_numbers = #tpu.dot_dimension_numbers<[1], [0], [0], [1], [0, 0, 1, 1], [], []>} : vector<128x128xbf16>, vector<128x256xbf16>, vector<128x256xf32> -> vector<128x256xf32>
    %34 = arith.addf %28, %33 : vector<128x256xf32>
    %c3 = arith.constant 3 : index
    %c0_26 = arith.constant 0 : index
    %35 = vector.load %arg13[%c3, %c0_26] : memref<136x128xf32, #tpu.memory_space<vmem>>, vector<128x128xf32>
    %36 = arith.truncf %35 : vector<128x128xf32> to vector<128x128xbf16>
    %c3_27 = arith.constant 3 : index
    %c0_28 = arith.constant 0 : index
    %c0_29 = arith.constant 0 : index
    %37 = vector.load %arg4[%c3_27, %c0_28, %c0_29] : memref<5x128x256xbf16, #tpu.memory_space<vmem>>, vector<1x128x256xbf16>
    %38 = vector.shape_cast %37 : vector<1x128x256xbf16> to vector<128x256xbf16>
    %cst_30 = arith.constant dense<0.000000e+00> : vector<128x256xf32>
    %39 = tpu.matmul %36, %38, %cst_30 {dimension_numbers = #tpu.dot_dimension_numbers<[1], [0], [0], [1], [0, 0, 1, 1], [], []>} : vector<128x128xbf16>, vector<128x256xbf16>, vector<128x256xf32> -> vector<128x256xf32>
    %40 = arith.addf %34, %39 : vector<128x256xf32>
    %c4 = arith.constant 4 : index
    %c0_31 = arith.constant 0 : index
    %41 = vector.load %arg13[%c4, %c0_31] : memref<136x128xf32, #tpu.memory_space<vmem>>, vector<128x128xf32>
    %42 = arith.truncf %41 : vector<128x128xf32> to vector<128x128xbf16>
    %c4_32 = arith.constant 4 : index
    %c0_33 = arith.constant 0 : index
    %c0_34 = arith.constant 0 : index
    %43 = vector.load %arg4[%c4_32, %c0_33, %c0_34] : memref<5x128x256xbf16, #tpu.memory_space<vmem>>, vector<1x128x256xbf16>
    %44 = vector.shape_cast %43 : vector<1x128x256xbf16> to vector<128x256xbf16>
    %cst_35 = arith.constant dense<0.000000e+00> : vector<128x256xf32>
    %45 = tpu.matmul %42, %44, %cst_35 {dimension_numbers = #tpu.dot_dimension_numbers<[1], [0], [0], [1], [0, 0, 1, 1], [], []>} : vector<128x128xbf16>, vector<128x256xbf16>, vector<128x256xf32> -> vector<128x256xf32>
    %46 = arith.addf %40, %45 : vector<128x256xf32>
    %47 = vector.extract_strided_slice %46 {offsets = [0, 0], sizes = [128, 128], strides = [1, 1]} : vector<128x256xf32> to vector<128x128xf32>
    %48 = vector.extract_strided_slice %46 {offsets = [0, 128], sizes = [128, 128], strides = [1, 1]} : vector<128x256xf32> to vector<128x128xf32>
    %49 = arith.maximumf %47, %48 : vector<128x128xf32>
    %c0_36 = arith.constant 0 : index
    %c0_37 = arith.constant 0 : index
    %50 = vector.load %arg14[%c0_36, %c0_37] : memref<128x128xf32, #tpu.memory_space<vmem>>, vector<128x128xf32>
    tpu.vector_store %arg14[%c0_36, %c0_37], %49 {strides = array<i32>} : memref<128x128xf32, #tpu.memory_space<vmem>>, vector<128x128xf32>,
    %c0_38 = arith.constant 0 : index
    %c0_39 = arith.constant 0 : index
    %51 = tpu.strided_load %arg14[%c0_38, %c0_39] {strides = array<i32: 16, 1>} : memref<128x128xf32, #tpu.memory_space<vmem>>, vector<8x128xf32>
    %c1_40 = arith.constant 1 : index
    %c0_41 = arith.constant 0 : index
    %52 = tpu.strided_load %arg14[%c1_40, %c0_41] {strides = array<i32: 16, 1>} : memref<128x128xf32, #tpu.memory_space<vmem>>, vector<8x128xf32>
    %53 = arith.maximumf %51, %52 : vector<8x128xf32>
    %c0_42 = arith.constant 0 : index
    %c0_43 = arith.constant 0 : index
    %54 = vector.load %arg5[%c0_42, %c0_43] : memref<1x128xf32, #tpu.memory_space<vmem>>, vector<1x128xf32>
    %55 = vector.broadcast %54 : vector<1x128xf32> to vector<8x128xf32>
    %56 = arith.addf %53, %55 : vector<8x128xf32>
    %cst_44 = arith.constant 0.000000e+00 : f32
    %57 = vector.broadcast %cst_44 : f32 to vector<8x128xf32>
    %58 = arith.maximumf %56, %57 : vector<8x128xf32>
    %59 = arith.truncf %58 : vector<8x128xf32> to vector<8x128xbf16>
    %c0_45 = arith.constant 0 : index
    %c0_46 = arith.constant 0 : index
    %c0_47 = arith.constant 0 : index
    %60 = vector.load %arg6[%c0_45, %c0_46, %c0_47] : memref<5x128x128xbf16, #tpu.memory_space<vmem>>, vector<1x128x128xbf16>
    %61 = vector.shape_cast %60 : vector<1x128x128xbf16> to vector<128x128xbf16>
    %cst_48 = arith.constant dense<0.000000e+00> : vector<8x128xf32>
    %62 = tpu.matmul %59, %61, %cst_48 {dimension_numbers = #tpu.dot_dimension_numbers<[1], [0], [0], [1], [0, 0, 1, 1], [], []>} : vector<8x128xbf16>, vector<128x128xbf16>, vector<8x128xf32> -> vector<8x128xf32>
    %c2_49 = arith.constant 2 : index
    %c0_50 = arith.constant 0 : index
    %63 = tpu.strided_load %arg14[%c2_49, %c0_50] {strides = array<i32: 16, 1>} : memref<128x128xf32, #tpu.memory_space<vmem>>, vector<8x128xf32>
    %c3_51 = arith.constant 3 : index
    %c0_52 = arith.constant 0 : index
    %64 = tpu.strided_load %arg14[%c3_51, %c0_52] {strides = array<i32: 16, 1>} : memref<128x128xf32, #tpu.memory_space<vmem>>, vector<8x128xf32>
    %65 = arith.maximumf %63, %64 : vector<8x128xf32>
    %c0_53 = arith.constant 0 : index
    %c0_54 = arith.constant 0 : index
    %66 = vector.load %arg5[%c0_53, %c0_54] : memref<1x128xf32, #tpu.memory_space<vmem>>, vector<1x128xf32>
    %67 = vector.broadcast %66 : vector<1x128xf32> to vector<8x128xf32>
    %68 = arith.addf %65, %67 : vector<8x128xf32>
    %cst_55 = arith.constant 0.000000e+00 : f32
    %69 = vector.broadcast %cst_55 : f32 to vector<8x128xf32>
    %70 = arith.maximumf %68, %69 : vector<8x128xf32>
    %71 = arith.truncf %70 : vector<8x128xf32> to vector<8x128xbf16>
    %c1_56 = arith.constant 1 : index
    %c0_57 = arith.constant 0 : index
    %c0_58 = arith.constant 0 : index
    %72 = vector.load %arg6[%c1_56, %c0_57, %c0_58] : memref<5x128x128xbf16, #tpu.memory_space<vmem>>, vector<1x128x128xbf16>
    %73 = vector.shape_cast %72 : vector<1x128x128xbf16> to vector<128x128xbf16>
    %cst_59 = arith.constant dense<0.000000e+00> : vector<8x128xf32>
    %74 = tpu.matmul %71, %73, %cst_59 {dimension_numbers = #tpu.dot_dimension_numbers<[1], [0], [0], [1], [0, 0, 1, 1], [], []>} : vector<8x128xbf16>, vector<128x128xbf16>, vector<8x128xf32> -> vector<8x128xf32>
    %75 = arith.addf %62, %74 : vector<8x128xf32>
    %c4_60 = arith.constant 4 : index
    %c0_61 = arith.constant 0 : index
    %76 = tpu.strided_load %arg14[%c4_60, %c0_61] {strides = array<i32: 16, 1>} : memref<128x128xf32, #tpu.memory_space<vmem>>, vector<8x128xf32>
    %c5 = arith.constant 5 : index
    %c0_62 = arith.constant 0 : index
    %77 = tpu.strided_load %arg14[%c5, %c0_62] {strides = array<i32: 16, 1>} : memref<128x128xf32, #tpu.memory_space<vmem>>, vector<8x128xf32>
    %78 = arith.maximumf %76, %77 : vector<8x128xf32>
    %c0_63 = arith.constant 0 : index
    %c0_64 = arith.constant 0 : index
    %79 = vector.load %arg5[%c0_63, %c0_64] : memref<1x128xf32, #tpu.memory_space<vmem>>, vector<1x128xf32>
    %80 = vector.broadcast %79 : vector<1x128xf32> to vector<8x128xf32>
    %81 = arith.addf %78, %80 : vector<8x128xf32>
    %cst_65 = arith.constant 0.000000e+00 : f32
    %82 = vector.broadcast %cst_65 : f32 to vector<8x128xf32>
    %83 = arith.maximumf %81, %82 : vector<8x128xf32>
    %84 = arith.truncf %83 : vector<8x128xf32> to vector<8x128xbf16>
    %c2_66 = arith.constant 2 : index
    %c0_67 = arith.constant 0 : index
    %c0_68 = arith.constant 0 : index
    %85 = vector.load %arg6[%c2_66, %c0_67, %c0_68] : memref<5x128x128xbf16, #tpu.memory_space<vmem>>, vector<1x128x128xbf16>
    %86 = vector.shape_cast %85 : vector<1x128x128xbf16> to vector<128x128xbf16>
    %cst_69 = arith.constant dense<0.000000e+00> : vector<8x128xf32>
    %87 = tpu.matmul %84, %86, %cst_69 {dimension_numbers = #tpu.dot_dimension_numbers<[1], [0], [0], [1], [0, 0, 1, 1], [], []>} : vector<8x128xbf16>, vector<128x128xbf16>, vector<8x128xf32> -> vector<8x128xf32>
    %88 = arith.addf %75, %87 : vector<8x128xf32>
    %c6 = arith.constant 6 : index
    %c0_70 = arith.constant 0 : index
    %89 = tpu.strided_load %arg14[%c6, %c0_70] {strides = array<i32: 16, 1>} : memref<128x128xf32, #tpu.memory_space<vmem>>, vector<8x128xf32>
    %c7 = arith.constant 7 : index
    %c0_71 = arith.constant 0 : index
    %90 = tpu.strided_load %arg14[%c7, %c0_71] {strides = array<i32: 16, 1>} : memref<128x128xf32, #tpu.memory_space<vmem>>, vector<8x128xf32>
    %91 = arith.maximumf %89, %90 : vector<8x128xf32>
    %c0_72 = arith.constant 0 : index
    %c0_73 = arith.constant 0 : index
    %92 = vector.load %arg5[%c0_72, %c0_73] : memref<1x128xf32, #tpu.memory_space<vmem>>, vector<1x128xf32>
    %93 = vector.broadcast %92 : vector<1x128xf32> to vector<8x128xf32>
    %94 = arith.addf %91, %93 : vector<8x128xf32>
    %cst_74 = arith.constant 0.000000e+00 : f32
    %95 = vector.broadcast %cst_74 : f32 to vector<8x128xf32>
    %96 = arith.maximumf %94, %95 : vector<8x128xf32>
    %97 = arith.truncf %96 : vector<8x128xf32> to vector<8x128xbf16>
    %c3_75 = arith.constant 3 : index
    %c0_76 = arith.constant 0 : index
    %c0_77 = arith.constant 0 : index
    %98 = vector.load %arg6[%c3_75, %c0_76, %c0_77] : memref<5x128x128xbf16, #tpu.memory_space<vmem>>, vector<1x128x128xbf16>
    %99 = vector.shape_cast %98 : vector<1x128x128xbf16> to vector<128x128xbf16>
    %cst_78 = arith.constant dense<0.000000e+00> : vector<8x128xf32>
    %100 = tpu.matmul %97, %99, %cst_78 {dimension_numbers = #tpu.dot_dimension_numbers<[1], [0], [0], [1], [0, 0, 1, 1], [], []>} : vector<8x128xbf16>, vector<128x128xbf16>, vector<8x128xf32> -> vector<8x128xf32>
    %101 = arith.addf %88, %100 : vector<8x128xf32>
    %c8 = arith.constant 8 : index
    %c0_79 = arith.constant 0 : index
    %102 = tpu.strided_load %arg14[%c8, %c0_79] {strides = array<i32: 16, 1>} : memref<128x128xf32, #tpu.memory_space<vmem>>, vector<8x128xf32>
    %c9 = arith.constant 9 : index
    %c0_80 = arith.constant 0 : index
    %103 = tpu.strided_load %arg14[%c9, %c0_80] {strides = array<i32: 16, 1>} : memref<128x128xf32, #tpu.memory_space<vmem>>, vector<8x128xf32>
    %104 = arith.maximumf %102, %103 : vector<8x128xf32>
    %c0_81 = arith.constant 0 : index
    %c0_82 = arith.constant 0 : index
    %105 = vector.load %arg5[%c0_81, %c0_82] : memref<1x128xf32, #tpu.memory_space<vmem>>, vector<1x128xf32>
    %106 = vector.broadcast %105 : vector<1x128xf32> to vector<8x128xf32>
    %107 = arith.addf %104, %106 : vector<8x128xf32>
    %cst_83 = arith.constant 0.000000e+00 : f32
    %108 = vector.broadcast %cst_83 : f32 to vector<8x128xf32>
    %109 = arith.maximumf %107, %108 : vector<8x128xf32>
    %110 = arith.truncf %109 : vector<8x128xf32> to vector<8x128xbf16>
    %c4_84 = arith.constant 4 : index
    %c0_85 = arith.constant 0 : index
    %c0_86 = arith.constant 0 : index
    %111 = vector.load %arg6[%c4_84, %c0_85, %c0_86] : memref<5x128x128xbf16, #tpu.memory_space<vmem>>, vector<1x128x128xbf16>
    %112 = vector.shape_cast %111 : vector<1x128x128xbf16> to vector<128x128xbf16>
    %cst_87 = arith.constant dense<0.000000e+00> : vector<8x128xf32>
    %113 = tpu.matmul %110, %112, %cst_87 {dimension_numbers = #tpu.dot_dimension_numbers<[1], [0], [0], [1], [0, 0, 1, 1], [], []>} : vector<8x128xbf16>, vector<128x128xbf16>, vector<8x128xf32> -> vector<8x128xf32>
    %114 = arith.addf %101, %113 : vector<8x128xf32>
    %c0_88 = arith.constant 0 : index
    %c0_89 = arith.constant 0 : index
    %115 = vector.load %arg7[%c0_88, %c0_89] : memref<1x128xf32, #tpu.memory_space<vmem>>, vector<1x128xf32>
    %116 = vector.broadcast %115 : vector<1x128xf32> to vector<8x128xf32>
    %117 = arith.addf %114, %116 : vector<8x128xf32>
    %cst_90 = arith.constant 0.000000e+00 : f32
    %118 = vector.broadcast %cst_90 : f32 to vector<8x128xf32>
    %119 = arith.maximumf %117, %118 : vector<8x128xf32>
    %120 = arith.truncf %119 : vector<8x128xf32> to vector<8x128xbf16>
    %c0_91 = arith.constant 0 : index
    %c0_92 = arith.constant 0 : index
    %121 = vector.load %arg8[%c0_91, %c0_92] : memref<128x128xbf16, #tpu.memory_space<vmem>>, vector<128x128xbf16>
    %cst_93 = arith.constant dense<0.000000e+00> : vector<8x128xf32>
    %122 = tpu.matmul %120, %121, %cst_93 {dimension_numbers = #tpu.dot_dimension_numbers<[1], [0], [0], [1], [0, 0, 1, 1], [], []>} : vector<8x128xbf16>, vector<128x128xbf16>, vector<8x128xf32> -> vector<8x128xf32>
    %c0_94 = arith.constant 0 : index
    %c0_95 = arith.constant 0 : index
    %123 = vector.load %arg9[%c0_94, %c0_95] : memref<1x128xf32, #tpu.memory_space<vmem>>, vector<1x128xf32>
    %124 = vector.broadcast %123 : vector<1x128xf32> to vector<8x128xf32>
    %125 = arith.addf %122, %124 : vector<8x128xf32>
    %cst_96 = arith.constant 0.000000e+00 : f32
    %126 = vector.broadcast %cst_96 : f32 to vector<8x128xf32>
    %127 = arith.maximumf %125, %126 : vector<8x128xf32>
    %128 = arith.truncf %127 : vector<8x128xf32> to vector<8x128xbf16>
    %c0_97 = arith.constant 0 : index
    %c0_98 = arith.constant 0 : index
    %129 = vector.load %arg10[%c0_97, %c0_98] : memref<128x128xbf16, #tpu.memory_space<vmem>>, vector<128x128xbf16>
    %cst_99 = arith.constant dense<0.000000e+00> : vector<8x128xf32>
    %130 = tpu.matmul %128, %129, %cst_99 {dimension_numbers = #tpu.dot_dimension_numbers<[1], [0], [0], [1], [0, 0, 1, 1], [], []>} : vector<8x128xbf16>, vector<128x128xbf16>, vector<8x128xf32> -> vector<8x128xf32>
    %c0_100 = arith.constant 0 : index
    %c0_101 = arith.constant 0 : index
    %131 = vector.load %arg11[%c0_100, %c0_101] : memref<1x128xf32, #tpu.memory_space<vmem>>, vector<1x128xf32>
    %132 = vector.broadcast %131 : vector<1x128xf32> to vector<8x128xf32>
    %133 = arith.addf %130, %132 : vector<8x128xf32>
    %c0_102 = arith.constant 0 : index
    %c0_103 = arith.constant 0 : index
    %134 = vector.load %arg12[%c0_102, %c0_103] : memref<8x128xf32, #tpu.memory_space<vmem>>, vector<8x128xf32>
    tpu.vector_store %arg12[%c0_102, %c0_103], %133 {strides = array<i32>} : memref<8x128xf32, #tpu.memory_space<vmem>>, vector<8x128xf32>,
    return
  }
  func.func @transform_0(%arg0: i32) -> (i32, i32) {
    %c0_i32 = arith.constant 0 : i32
    %c0_i32_0 = arith.constant 0 : i32
    return %arg0, %c0_i32 : i32, i32
  }
  func.func @transform_1(%arg0: i32) -> (i32, i32) {
    %c0_i32 = arith.constant 0 : i32
    %c0_i32_0 = arith.constant 0 : i32
    %c0_i32_1 = arith.constant 0 : i32
    return %c0_i32, %c0_i32_0 : i32, i32
  }
  func.func @transform_2(%arg0: i32) -> (i32, i32) {
    %c0_i32 = arith.constant 0 : i32
    %c0_i32_0 = arith.constant 0 : i32
    %c0_i32_1 = arith.constant 0 : i32
    return %c0_i32, %c0_i32_0 : i32, i32
  }
  func.func @transform_3(%arg0: i32) -> (i32, i32, i32) {
    %c0_i32 = arith.constant 0 : i32
    %c0_i32_0 = arith.constant 0 : i32
    %c0_i32_1 = arith.constant 0 : i32
    %c0_i32_2 = arith.constant 0 : i32
    return %c0_i32, %c0_i32_0, %c0_i32_1 : i32, i32, i32
  }
  func.func @transform_4(%arg0: i32) -> (i32, i32) {
    %c0_i32 = arith.constant 0 : i32
    %c0_i32_0 = arith.constant 0 : i32
    %c0_i32_1 = arith.constant 0 : i32
    return %c0_i32, %c0_i32_0 : i32, i32
  }
  func.func @transform_5(%arg0: i32) -> (i32, i32, i32) {
    %c0_i32 = arith.constant 0 : i32
    %c0_i32_0 = arith.constant 0 : i32
    %c0_i32_1 = arith.constant 0 : i32
    %c0_i32_2 = arith.constant 0 : i32
    return %c0_i32, %c0_i32_0, %c0_i32_1 : i32, i32, i32
  }
  func.func @transform_6(%arg0: i32) -> (i32, i32) {
    %c0_i32 = arith.constant 0 : i32
    %c0_i32_0 = arith.constant 0 : i32
    %c0_i32_1 = arith.constant 0 : i32
    return %c0_i32, %c0_i32_0 : i32, i32
  }
  func.func @transform_7(%arg0: i32) -> (i32, i32) {
    %c0_i32 = arith.constant 0 : i32
    %c0_i32_0 = arith.constant 0 : i32
    %c0_i32_1 = arith.constant 0 : i32
    return %c0_i32, %c0_i32_0 : i32, i32
  }
  func.func @transform_8(%arg0: i32) -> (i32, i32) {
    %c0_i32 = arith.constant 0 : i32
    %c0_i32_0 = arith.constant 0 : i32
    %c0_i32_1 = arith.constant 0 : i32
    return %c0_i32, %c0_i32_0 : i32, i32
  }
  func.func @transform_9(%arg0: i32) -> (i32, i32) {
    %c0_i32 = arith.constant 0 : i32
    %c0_i32_0 = arith.constant 0 : i32
    %c0_i32_1 = arith.constant 0 : i32
    return %c0_i32, %c0_i32_0 : i32, i32
  }
  func.func @transform_10(%arg0: i32) -> (i32, i32) {
    %c0_i32 = arith.constant 0 : i32
    %c0_i32_0 = arith.constant 0 : i32
    %c0_i32_1 = arith.constant 0 : i32
    return %c0_i32, %c0_i32_0 : i32, i32
  }
  func.func @transform_11(%arg0: i32) -> (i32, i32) {
    %c0_i32 = arith.constant 0 : i32
    %c0_i32_0 = arith.constant 0 : i32
    return %arg0, %c0_i32 : i32, i32
  }
}

</mosaic_0001>

<llo_original>
// kernel: lenet5_forward.1
$region0: #{lenet5_forward.1}
  #allocation0 [shape = 'u32[]', space=smem, size = 0x4, offset = 0x4, fixed_abs, tag = 'smem constant byte address 0x4 - core index']
  #allocation1 [shape = 'u32[144,128]{1,0:T(1,128)}', space=vmem, size = 0x12000, scoped, tag = 'internal scratch']
  #allocation2 [shape = 'f32[136,128]{1,0:T(8,128)}', space=vmem, size = 0x11000, scoped, tag = 'scratch operand']
  #allocation3 [shape = 'f32[128,128]{1,0:T(8,128)}', space=vmem, size = 0x10000, scoped, tag = 'scratch operand']
  %s0 = inlined_call_operand.vmem [shape: bf16[128,192], index: 0, kind: input, shape index: {}]
  %s1 = inlined_call_operand.vmem [shape: bf16[192,512], index: 1, kind: input, shape index: {}]
  %s2 = inlined_call_operand.vmem [shape: f32[1,128], index: 2, kind: input, shape index: {}]
  %s3 = inlined_call_operand.vmem [shape: bf16[5,128,256], index: 3, kind: input, shape index: {}]
  %s4 = inlined_call_operand.vmem [shape: f32[1,128], index: 4, kind: input, shape index: {}]
  %s5 = inlined_call_operand.vmem [shape: bf16[5,128,128], index: 5, kind: input, shape index: {}]
  %s6 = inlined_call_operand.vmem [shape: f32[1,128], index: 6, kind: input, shape index: {}]
  %s7 = inlined_call_operand.vmem [shape: bf16[128,128], index: 7, kind: input, shape index: {}]
  %s8 = inlined_call_operand.vmem [shape: f32[1,128], index: 8, kind: input, shape index: {}]
  %s9 = inlined_call_operand.vmem [shape: bf16[128,128], index: 9, kind: input, shape index: {}]
  %s10 = inlined_call_operand.vmem [shape: f32[1,128], index: 10, kind: input, shape index: {}]
  %s11 = inlined_call_operand.vmem [shape: f32[8,128], index: 11, kind: output, shape index: {}]
  %s12 = sld [smem:[#allocation0]]
  $region54: #{lenet5_forward.1} parent=0
    _
  %s14 = ssub.s32 1, %s12
  %s15 = scalar_select 0, %s14, %s12
  // Predicated region
  $region2: #{lenet5_forward.1} parent=0 // pred_check
    _
  $region3: #{lenet5_forward.1} parent=0 // pred_check_branch
    %17 = sbr.rel (0) target = $region5
  $region4: #{lenet5_forward.1} parent=0 // pred_region
    _
  $region5: #{lenet5_forward.1} parent=0 // pred_fallthru
    _
  // Predicated region
  $region6: #{lenet5_forward.1} parent=0 // pred_check
    _
  $region7: #{lenet5_forward.1} parent=0 // pred_check_branch
    %19 = sbr.rel (0) target = $region9
  $region8: #{lenet5_forward.1} parent=0 // pred_region
    _
  $region9: #{lenet5_forward.1} parent=0 // pred_fallthru
    _
  // Predicated region
  $region10: #{lenet5_forward.1} parent=0 // pred_check
    _
  $region11: #{lenet5_forward.1} parent=0 // pred_check_branch
    %21 = sbr.rel (0) target = $region13
  $region12: #{lenet5_forward.1} parent=0 // pred_region
    _
  $region13: #{lenet5_forward.1} parent=0 // pred_fallthru
    _
  // Predicated region
  $region14: #{lenet5_forward.1} parent=0 // pred_check
    _
  $region15: #{lenet5_forward.1} parent=0 // pred_check_branch
    %23 = sbr.rel (0) target = $region17
  $region16: #{lenet5_forward.1} parent=0 // pred_region
    _
  $region17: #{lenet5_forward.1} parent=0 // pred_fallthru
    _
  // Predicated region
  $region18: #{lenet5_forward.1} parent=0 // pred_check
    _
  $region19: #{lenet5_forward.1} parent=0 // pred_check_branch
    %25 = sbr.rel (0) target = $region21
  $region20: #{lenet5_forward.1} parent=0 // pred_region
    _
  $region21: #{lenet5_forward.1} parent=0 // pred_fallthru
    _
  // Predicated region
  $region22: #{lenet5_forward.1} parent=0 // pred_check
    _
  $region23: #{lenet5_forward.1} parent=0 // pred_check_branch
    %27 = sbr.rel (0) target = $region25
  $region24: #{lenet5_forward.1} parent=0 // pred_region
    _
  $region25: #{lenet5_forward.1} parent=0 // pred_fallthru
    _
  // Predicated region
  $region26: #{lenet5_forward.1} parent=0 // pred_check
    _
  $region27: #{lenet5_forward.1} parent=0 // pred_check_branch
    %29 = sbr.rel (0) target = $region29
  $region28: #{lenet5_forward.1} parent=0 // pred_region
    _
  $region29: #{lenet5_forward.1} parent=0 // pred_fallthru
    _
  // Predicated region
  $region30: #{lenet5_forward.1} parent=0 // pred_check
    _
  $region31: #{lenet5_forward.1} parent=0 // pred_check_branch
    %31 = sbr.rel (0) target = $region33
  $region32: #{lenet5_forward.1} parent=0 // pred_region
    _
  $region33: #{lenet5_forward.1} parent=0 // pred_fallthru
    _
  // Predicated region
  $region34: #{lenet5_forward.1} parent=0 // pred_check
    _
  $region35: #{lenet5_forward.1} parent=0 // pred_check_branch
    %33 = sbr.rel (0) target = $region37
  $region36: #{lenet5_forward.1} parent=0 // pred_region
    _
  $region37: #{lenet5_forward.1} parent=0 // pred_fallthru
    _
  // Predicated region
  $region38: #{lenet5_forward.1} parent=0 // pred_check
    _
  $region39: #{lenet5_forward.1} parent=0 // pred_check_branch
    %35 = sbr.rel (0) target = $region41
  $region40: #{lenet5_forward.1} parent=0 // pred_region
    _
  $region41: #{lenet5_forward.1} parent=0 // pred_fallthru
    _
  // Predicated region
  $region42: #{lenet5_forward.1} parent=0 // pred_check
    _
  $region43: #{lenet5_forward.1} parent=0 // pred_check_branch
    %37 = sbr.rel (0) target = $region45
  $region44: #{lenet5_forward.1} parent=0 // pred_region
    _
  $region45: #{lenet5_forward.1} parent=0 // pred_fallthru
    _
  %v39 = vld [vmem:[%s0] sm:$0xff]
  %v40 = vld [vmem:[%s0 + $0x8] sm:$0xff]
  %v41 = vld [vmem:[%s0 + $0x10] sm:$0xff]
  %v42 = vld [vmem:[%s0 + $0x18] sm:$0xff]
  %v43 = vld [vmem:[%s0 + $0x20] sm:$0xff]
  %v44 = vld [vmem:[%s0 + $0x28] sm:$0xff]
  %v45 = vld [vmem:[%s0 + $0x30] sm:$0xff]
  %v46 = vld [vmem:[%s0 + $0x38] sm:$0xff]
  %v47 = vld [vmem:[%s0 + $0x40] sm:$0xff]
  %v48 = vld [vmem:[%s0 + $0x48] sm:$0xff]
  %v49 = vld [vmem:[%s0 + $0x50] sm:$0xff]
  %v50 = vld [vmem:[%s0 + $0x58] sm:$0xff]
  %v51 = vld [vmem:[%s0 + $0x60] sm:$0xff]
  %v52 = vld [vmem:[%s0 + $0x68] sm:$0xff]
  %v53 = vld [vmem:[%s0 + $0x70] sm:$0xff]
  %v54 = vld [vmem:[%s0 + $0x78] sm:$0xff]
  %v55 = vld [vmem:[%s1] sm:$0xff]
  %v56 = vld [vmem:[%s1 + $0x8] sm:$0xff]
  %v57 = vld [vmem:[%s1 + $0x10] sm:$0xff]
  %v58 = vld [vmem:[%s1 + $0x18] sm:$0xff]
  %v59 = vld [vmem:[%s1 + $0x20] sm:$0xff]
  %v60 = vld [vmem:[%s1 + $0x28] sm:$0xff]
  %v61 = vld [vmem:[%s1 + $0x30] sm:$0xff]
  %v62 = vld [vmem:[%s1 + $0x38] sm:$0xff]
  %v63 = vld [vmem:[%s1 + $0x40] sm:$0xff]
  %v64 = vld [vmem:[%s1 + $0x48] sm:$0xff]
  %v65 = vld [vmem:[%s1 + $0x50] sm:$0xff]
  %v66 = vld [vmem:[%s1 + $0x58] sm:$0xff]
  %v67 = vld [vmem:[%s1 + $0x60] sm:$0xff]
  %v68 = vld [vmem:[%s1 + $0x68] sm:$0xff]
  %v69 = vld [vmem:[%s1 + $0x70] sm:$0xff]
  %v70 = vld [vmem:[%s1 + $0x78] sm:$0xff]
  %v71 = vld [vmem:[%s1 + $0x80] sm:$0xff]
  %v72 = vld [vmem:[%s1 + $0x88] sm:$0xff]
  %v73 = vld [vmem:[%s1 + $0x90] sm:$0xff]
  %v74 = vld [vmem:[%s1 + $0x98] sm:$0xff]
  %v75 = vld [vmem:[%s1 + $0xa0] sm:$0xff]
  %v76 = vld [vmem:[%s1 + $0xa8] sm:$0xff]
  %v77 = vld [vmem:[%s1 + $0xb0] sm:$0xff]
  %v78 = vld [vmem:[%s1 + $0xb8] sm:$0xff]
  %v79 = vld [vmem:[%s1 + $0xc0] sm:$0xff]
  %v80 = vld [vmem:[%s1 + $0xc8] sm:$0xff]
  %v81 = vld [vmem:[%s1 + $0xd0] sm:$0xff]
  %v82 = vld [vmem:[%s1 + $0xd8] sm:$0xff]
  %v83 = vld [vmem:[%s1 + $0xe0] sm:$0xff]
  %v84 = vld [vmem:[%s1 + $0xe8] sm:$0xff]
  %v85 = vld [vmem:[%s1 + $0xf0] sm:$0xff]
  %v86 = vld [vmem:[%s1 + $0xf8] sm:$0xff]
  %v87 = vld [vmem:[%s1 + $0x100] sm:$0xff]
  %v88 = vld [vmem:[%s1 + $0x108] sm:$0xff]
  %v89 = vld [vmem:[%s1 + $0x110] sm:$0xff]
  %v90 = vld [vmem:[%s1 + $0x118] sm:$0xff]
  %v91 = vld [vmem:[%s1 + $0x120] sm:$0xff]
  %v92 = vld [vmem:[%s1 + $0x128] sm:$0xff]
  %v93 = vld [vmem:[%s1 + $0x130] sm:$0xff]
  %v94 = vld [vmem:[%s1 + $0x138] sm:$0xff]
  %v95 = vld [vmem:[%s1 + $0x140] sm:$0xff]
  %v96 = vld [vmem:[%s1 + $0x148] sm:$0xff]
  %v97 = vld [vmem:[%s1 + $0x150] sm:$0xff]
  %v98 = vld [vmem:[%s1 + $0x158] sm:$0xff]
  %v99 = vld [vmem:[%s1 + $0x160] sm:$0xff]
  %v100 = vld [vmem:[%s1 + $0x168] sm:$0xff]
  %v101 = vld [vmem:[%s1 + $0x170] sm:$0xff]
  %v102 = vld [vmem:[%s1 + $0x178] sm:$0xff]
  %v119 = vunpack.c.l.b16 %v39
  %v120 = vunpack.c.h.b16 %v39
  %v121 = vunpack.c.l.b16 %v40
  %v122 = vunpack.c.h.b16 %v40
  %v123 = vunpack.c.l.b16 %v41
  %v124 = vunpack.c.h.b16 %v41
  %v125 = vunpack.c.l.b16 %v42
  %v126 = vunpack.c.h.b16 %v42
  %v127 = vunpack.c.l.b16 %v43
  %v128 = vunpack.c.h.b16 %v43
  %v129 = vunpack.c.l.b16 %v44
  %v130 = vunpack.c.h.b16 %v44
  %v131 = vunpack.c.l.b16 %v45
  %v132 = vunpack.c.h.b16 %v45
  %v133 = vunpack.c.l.b16 %v46
  %v134 = vunpack.c.h.b16 %v46
  %v135 = vunpack.c.l.b16 %v47
  %v136 = vunpack.c.h.b16 %v47
  %v137 = vunpack.c.l.b16 %v48
  %v138 = vunpack.c.h.b16 %v48
  %v139 = vunpack.c.l.b16 %v49
  %v140 = vunpack.c.h.b16 %v49
  %v141 = vunpack.c.l.b16 %v50
  %v142 = vunpack.c.h.b16 %v50
  %v143 = vunpack.c.l.b16 %v51
  %v144 = vunpack.c.h.b16 %v51
  %v145 = vunpack.c.l.b16 %v52
  %v146 = vunpack.c.h.b16 %v52
  %v147 = vunpack.c.l.b16 %v53
  %v148 = vunpack.c.h.b16 %v53
  %v149 = vunpack.c.l.b16 %v54
  %v150 = vunpack.c.h.b16 %v54
  %v151 = vpack.c.b16 %v121, %v119
  %v152 = vpack.c.b16 %v122, %v120
  %v153 = vpack.c.b16 %v125, %v123
  %v154 = vpack.c.b16 %v126, %v124
  %v155 = vpack.c.b16 %v129, %v127
  %v156 = vpack.c.b16 %v130, %v128
  %v157 = vpack.c.b16 %v133, %v131
  %v158 = vpack.c.b16 %v134, %v132
  %v159 = vpack.c.b16 %v137, %v135
  %v160 = vpack.c.b16 %v138, %v136
  %v161 = vpack.c.b16 %v141, %v139
  %v162 = vpack.c.b16 %v142, %v140
  %v163 = vpack.c.b16 %v145, %v143
  %v164 = vpack.c.b16 %v146, %v144
  %v165 = vpack.c.b16 %v149, %v147
  %v166 = vpack.c.b16 %v150, %v148
  %v223 = vunpack.c.l.b16 %v55
  %v224 = vunpack.c.h.b16 %v55
  %v225 = vunpack.c.l.b16 %v56
  %v226 = vunpack.c.h.b16 %v56
  %v227 = vunpack.c.l.b16 %v57
  %v228 = vunpack.c.h.b16 %v57
  %v229 = vunpack.c.l.b16 %v58
  %v230 = vunpack.c.h.b16 %v58
  %v231 = vunpack.c.l.b16 %v59
  %v232 = vunpack.c.h.b16 %v59
  %v233 = vunpack.c.l.b16 %v60
  %v234 = vunpack.c.h.b16 %v60
  %v235 = vunpack.c.l.b16 %v61
  %v236 = vunpack.c.h.b16 %v61
  %v237 = vunpack.c.l.b16 %v62
  %v238 = vunpack.c.h.b16 %v62
  %v239 = vunpack.c.l.b16 %v63
  %v240 = vunpack.c.h.b16 %v63
  %v241 = vunpack.c.l.b16 %v64
  %v242 = vunpack.c.h.b16 %v64
  %v243 = vunpack.c.l.b16 %v65
  %v244 = vunpack.c.h.b16 %v65
  %v245 = vunpack.c.l.b16 %v66
  %v246 = vunpack.c.h.b16 %v66
  %v247 = vunpack.c.l.b16 %v67
  %v248 = vunpack.c.h.b16 %v67
  %v249 = vunpack.c.l.b16 %v68
  %v250 = vunpack.c.h.b16 %v68
  %v251 = vunpack.c.l.b16 %v69
  %v252 = vunpack.c.h.b16 %v69
  %v253 = vunpack.c.l.b16 %v70
  %v254 = vunpack.c.h.b16 %v70
  %v255 = vunpack.c.l.b16 %v71
  %v256 = vunpack.c.h.b16 %v71
  %v257 = vunpack.c.l.b16 %v72
  %v258 = vunpack.c.h.b16 %v72
  %v259 = vunpack.c.l.b16 %v73
  %v260 = vunpack.c.h.b16 %v73
  %v261 = vunpack.c.l.b16 %v74
  %v262 = vunpack.c.h.b16 %v74
  %v263 = vunpack.c.l.b16 %v75
  %v264 = vunpack.c.h.b16 %v75
  %v265 = vunpack.c.l.b16 %v76
  %v266 = vunpack.c.h.b16 %v76
  %v267 = vunpack.c.l.b16 %v77
  %v268 = vunpack.c.h.b16 %v77
  %v269 = vunpack.c.l.b16 %v78
  %v270 = vunpack.c.h.b16 %v78
  %v271 = vunpack.c.l.b16 %v79
  %v272 = vunpack.c.h.b16 %v79
  %v273 = vunpack.c.l.b16 %v80
  %v274 = vunpack.c.h.b16 %v80
  %v275 = vunpack.c.l.b16 %v81
  %v276 = vunpack.c.h.b16 %v81
  %v277 = vunpack.c.l.b16 %v82
  %v278 = vunpack.c.h.b16 %v82
  %v279 = vunpack.c.l.b16 %v83
  %v280 = vunpack.c.h.b16 %v83
  %v281 = vunpack.c.l.b16 %v84
  %v282 = vunpack.c.h.b16 %v84
  %v283 = vunpack.c.l.b16 %v85
  %v284 = vunpack.c.h.b16 %v85
  %v285 = vunpack.c.l.b16 %v86
  %v286 = vunpack.c.h.b16 %v86
  %v287 = vunpack.c.l.b16 %v87
  %v288 = vunpack.c.h.b16 %v87
  %v289 = vunpack.c.l.b16 %v88
  %v290 = vunpack.c.h.b16 %v88
  %v291 = vunpack.c.l.b16 %v89
  %v292 = vunpack.c.h.b16 %v89
  %v293 = vunpack.c.l.b16 %v90
  %v294 = vunpack.c.h.b16 %v90
  %v295 = vunpack.c.l.b16 %v91
  %v296 = vunpack.c.h.b16 %v91
  %v297 = vunpack.c.l.b16 %v92
  %v298 = vunpack.c.h.b16 %v92
  %v299 = vunpack.c.l.b16 %v93
  %v300 = vunpack.c.h.b16 %v93
  %v301 = vunpack.c.l.b16 %v94
  %v302 = vunpack.c.h.b16 %v94
  %v303 = vunpack.c.l.b16 %v95
  %v304 = vunpack.c.h.b16 %v95
  %v305 = vunpack.c.l.b16 %v96
  %v306 = vunpack.c.h.b16 %v96
  %v307 = vunpack.c.l.b16 %v97
  %v308 = vunpack.c.h.b16 %v97
  %v309 = vunpack.c.l.b16 %v98
  %v310 = vunpack.c.h.b16 %v98
  %v311 = vunpack.c.l.b16 %v99
  %v312 = vunpack.c.h.b16 %v99
  %v313 = vunpack.c.l.b16 %v100
  %v314 = vunpack.c.h.b16 %v100
  %v315 = vunpack.c.l.b16 %v101
  %v316 = vunpack.c.h.b16 %v101
  %v317 = vunpack.c.l.b16 %v102
  %v318 = vunpack.c.h.b16 %v102
  %v319 = vpack.c.b16 %v227, %v223
  %v320 = vpack.c.b16 %v228, %v224
  %v321 = vpack.c.b16 %v229, %v225
  %v322 = vpack.c.b16 %v230, %v226
  %v323 = vpack.c.b16 %v235, %v231
  %v324 = vpack.c.b16 %v236, %v232
  %v325 = vpack.c.b16 %v237, %v233
  %v326 = vpack.c.b16 %v238, %v234
  %v327 = vpack.c.b16 %v243, %v239
  %v328 = vpack.c.b16 %v244, %v240
  %v329 = vpack.c.b16 %v245, %v241
  %v330 = vpack.c.b16 %v246, %v242
  %v331 = vpack.c.b16 %v251, %v247
  %v332 = vpack.c.b16 %v252, %v248
  %v333 = vpack.c.b16 %v253, %v249
  %v334 = vpack.c.b16 %v254, %v250
  %v335 = vpack.c.b16 %v259, %v255
  %v336 = vpack.c.b16 %v260, %v256
  %v337 = vpack.c.b16 %v261, %v257
  %v338 = vpack.c.b16 %v262, %v258
  %v339 = vpack.c.b16 %v267, %v263
  %v340 = vpack.c.b16 %v268, %v264
  %v341 = vpack.c.b16 %v269, %v265
  %v342 = vpack.c.b16 %v270, %v266
  %v343 = vpack.c.b16 %v275, %v271
  %v344 = vpack.c.b16 %v276, %v272
  %v345 = vpack.c.b16 %v277, %v273
  %v346 = vpack.c.b16 %v278, %v274
  %v347 = vpack.c.b16 %v283, %v279
  %v348 = vpack.c.b16 %v284, %v280
  %v349 = vpack.c.b16 %v285, %v281
  %v350 = vpack.c.b16 %v286, %v282
  %v351 = vpack.c.b16 %v291, %v287
  %v352 = vpack.c.b16 %v292, %v288
  %v353 = vpack.c.b16 %v293, %v289
  %v354 = vpack.c.b16 %v294, %v290
  %v355 = vpack.c.b16 %v299, %v295
  %v356 = vpack.c.b16 %v300, %v296
  %v357 = vpack.c.b16 %v301, %v297
  %v358 = vpack.c.b16 %v302, %v298
  %v359 = vpack.c.b16 %v307, %v303
  %v360 = vpack.c.b16 %v308, %v304
  %v361 = vpack.c.b16 %v309, %v305
  %v362 = vpack.c.b16 %v310, %v306
  %v363 = vpack.c.b16 %v315, %v311
  %v364 = vpack.c.b16 %v316, %v312
  %v365 = vpack.c.b16 %v317, %v313
  %v366 = vpack.c.b16 %v318, %v314
  %vm415 = vcmask 523264
  %v417 = vsel %vm415, %v152, 0
  %v420 = vsel %vm415, %v154, 0
  %v423 = vsel %vm415, %v156, 0
  %v426 = vsel %vm415, %v158, 0
  %v429 = vsel %vm415, %v160, 0
  %v432 = vsel %vm415, %v162, 0
  %v435 = vsel %vm415, %v164, 0
  %v438 = vsel %vm415, %v166, 0
  %440 = vmatprep.subr.bf16.mxu0 %v348
  %441 = vmatpush1.bf16.msra.mxu0 %v347
  %442 = vmatprep.subr.bf16.mxu0 %v344
  %443 = vmatpush1.bf16.msra.mxu0 %v343
  %444 = vmatprep.subr.bf16.mxu0 %v340
  %445 = vmatpush1.bf16.msra.mxu0 %v339
  %446 = vmatprep.subr.bf16.mxu0 %v336
  %447 = vmatpush1.bf16.msra.mxu0 %v335
  %448 = vmatprep.subr.bf16.mxu0 %v332
  %449 = vmatpush1.bf16.msra.mxu0 %v331
  %450 = vmatprep.subr.bf16.mxu0 %v328
  %451 = vmatpush1.bf16.msra.mxu0 %v327
  %452 = vmatprep.subr.bf16.mxu0 %v324
  %453 = vmatpush1.bf16.msra.mxu0 %v323
  %454 = vmatprep.subr.bf16.mxu0 %v320
  %455 = vmatpush1.bf16.msra.mxu0 %v319
  %456 = vmatprep.subr.bf16.mxu0 0
  %457 = vmatpush2.bf16.msra.mxu0 0
  %458 = vmatprep.subr.bf16.mxu0 0
  %459 = vmatpush2.bf16.msra.mxu0 0
  %460 = vmatprep.subr.bf16.mxu0 0
  %461 = vmatpush2.bf16.msra.mxu0 0
  %462 = vmatprep.subr.bf16.mxu0 0
  %463 = vmatpush2.bf16.msra.mxu0 0
  %464 = vmatprep.subr.bf16.mxu0 %v364
  %465 = vmatpush2.bf16.msra.mxu0 %v363
  %466 = vmatprep.subr.bf16.mxu0 %v360
  %467 = vmatpush2.bf16.msra.mxu0 %v359
  %468 = vmatprep.subr.bf16.mxu0 %v356
  %469 = vmatpush2.bf16.msra.mxu0 %v355
  %470 = vmatprep.subr.bf16.mxu0 %v352
  %471 = vmatpush2.bf16.msra.mxu0 %v351
  %472 = vmatprep.mubr.bf16.mxu0 %v417
  %473 = vmatmul.mubr.bf16.gmra.mxu0 %v151
  %v474 = vpop.f32.mrf.mxu0
  %v475 = vadd.f32 0.0, %v474
  %v476 = vpop.f32.mrf.mxu0
  %v477 = vadd.f32 0.0, %v476
  %v478 = vpop.f32.mrf.mxu0
  %v479 = vadd.f32 0.0, %v478
  %v480 = vpop.f32.mrf.mxu0
  %v481 = vadd.f32 0.0, %v480
  %482 = vmatprep.mubr.bf16.mxu0 %v420
  %483 = vmatmul.mubr.bf16.gmra.mxu0 %v153
  %v484 = vpop.f32.mrf.mxu0
  %v485 = vadd.f32 0.0, %v484
  %v486 = vpop.f32.mrf.mxu0
  %v487 = vadd.f32 0.0, %v486
  %v488 = vpop.f32.mrf.mxu0
  %v489 = vadd.f32 0.0, %v488
  %v490 = vpop.f32.mrf.mxu0
  %v491 = vadd.f32 0.0, %v490
  %492 = vmatprep.mubr.bf16.mxu0 %v423
  %493 = vmatmul.mubr.bf16.gmra.mxu0 %v155
  %v494 = vpop.f32.mrf.mxu0
  %v495 = vadd.f32 0.0, %v494
  %v496 = vpop.f32.mrf.mxu0
  %v497 = vadd.f32 0.0, %v496
  %v498 = vpop.f32.mrf.mxu0
  %v499 = vadd.f32 0.0, %v498
  %v500 = vpop.f32.mrf.mxu0
  %v501 = vadd.f32 0.0, %v500
  %502 = vmatprep.mubr.bf16.mxu0 %v426
  %503 = vmatmul.mubr.bf16.gmra.mxu0 %v157
  %v504 = vpop.f32.mrf.mxu0
  %v505 = vadd.f32 0.0, %v504
  %v506 = vpop.f32.mrf.mxu0
  %v507 = vadd.f32 0.0, %v506
  %v508 = vpop.f32.mrf.mxu0
  %v509 = vadd.f32 0.0, %v508
  %v510 = vpop.f32.mrf.mxu0
  %v511 = vadd.f32 0.0, %v510
  %512 = vmatprep.mubr.bf16.mxu0 %v429
  %513 = vmatmul.mubr.bf16.gmra.mxu0 %v159
  %v514 = vpop.f32.mrf.mxu0
  %v515 = vadd.f32 0.0, %v514
  %v516 = vpop.f32.mrf.mxu0
  %v517 = vadd.f32 0.0, %v516
  %v518 = vpop.f32.mrf.mxu0
  %v519 = vadd.f32 0.0, %v518
  %v520 = vpop.f32.mrf.mxu0
  %v521 = vadd.f32 0.0, %v520
  %522 = vmatprep.mubr.bf16.mxu0 %v432
  %523 = vmatmul.mubr.bf16.gmra.mxu0 %v161
  %v524 = vpop.f32.mrf.mxu0
  %v525 = vadd.f32 0.0, %v524
  %v526 = vpop.f32.mrf.mxu0
  %v527 = vadd.f32 0.0, %v526
  %v528 = vpop.f32.mrf.mxu0
  %v529 = vadd.f32 0.0, %v528
  %v530 = vpop.f32.mrf.mxu0
  %v531 = vadd.f32 0.0, %v530
  %532 = vmatprep.mubr.bf16.mxu0 %v435
  %533 = vmatmul.mubr.bf16.gmra.mxu0 %v163
  %v534 = vpop.f32.mrf.mxu0
  %v535 = vadd.f32 0.0, %v534
  %v536 = vpop.f32.mrf.mxu0
  %v537 = vadd.f32 0.0, %v536
  %v538 = vpop.f32.mrf.mxu0
  %v539 = vadd.f32 0.0, %v538
  %v540 = vpop.f32.mrf.mxu0
  %v541 = vadd.f32 0.0, %v540
  %542 = vmatprep.mubr.bf16.mxu0 %v438
  %543 = vmatmul.mubr.bf16.gmra.mxu0 %v165
  %v544 = vpop.f32.mrf.mxu0
  %v545 = vadd.f32 0.0, %v544
  %v546 = vpop.f32.mrf.mxu0
  %v547 = vadd.f32 0.0, %v546
  %v548 = vpop.f32.mrf.mxu0
  %v549 = vadd.f32 0.0, %v548
  %v550 = vpop.f32.mrf.mxu0
  %v551 = vadd.f32 0.0, %v550
  %552 = vdwg.mxu0
  %553 = vmatprep.subr.bf16.mxu0 %v350
  %554 = vmatpush1.bf16.msra.mxu0 %v349
  %555 = vmatprep.subr.bf16.mxu0 %v346
  %556 = vmatpush1.bf16.msra.mxu0 %v345
  %557 = vmatprep.subr.bf16.mxu0 %v342
  %558 = vmatpush1.bf16.msra.mxu0 %v341
  %559 = vmatprep.subr.bf16.mxu0 %v338
  %560 = vmatpush1.bf16.msra.mxu0 %v337
  %561 = vmatprep.subr.bf16.mxu0 %v334
  %562 = vmatpush1.bf16.msra.mxu0 %v333
  %563 = vmatprep.subr.bf16.mxu0 %v330
  %564 = vmatpush1.bf16.msra.mxu0 %v329
  %565 = vmatprep.subr.bf16.mxu0 %v326
  %566 = vmatpush1.bf16.msra.mxu0 %v325
  %567 = vmatprep.subr.bf16.mxu0 %v322
  %568 = vmatpush1.bf16.msra.mxu0 %v321
  %569 = vmatprep.subr.bf16.mxu0 0
  %570 = vmatpush2.bf16.msra.mxu0 0
  %571 = vmatprep.subr.bf16.mxu0 0
  %572 = vmatpush2.bf16.msra.mxu0 0
  %573 = vmatprep.subr.bf16.mxu0 0
  %574 = vmatpush2.bf16.msra.mxu0 0
  %575 = vmatprep.subr.bf16.mxu0 0
  %576 = vmatpush2.bf16.msra.mxu0 0
  %577 = vmatprep.subr.bf16.mxu0 %v366
  %578 = vmatpush2.bf16.msra.mxu0 %v365
  %579 = vmatprep.subr.bf16.mxu0 %v362
  %580 = vmatpush2.bf16.msra.mxu0 %v361
  %581 = vmatprep.subr.bf16.mxu0 %v358
  %582 = vmatpush2.bf16.msra.mxu0 %v357
  %583 = vmatprep.subr.bf16.mxu0 %v354
  %584 = vmatpush2.bf16.msra.mxu0 %v353
  %585 = vmatprep.mubr.bf16.mxu0 %v417
  %586 = vmatmul.mubr.bf16.gmra.mxu0 %v151
  %v587 = vpop.f32.mrf.mxu0
  %v588 = vadd.f32 0.0, %v587
  %v589 = vpop.f32.mrf.mxu0
  %v590 = vadd.f32 0.0, %v589
  %v591 = vpop.f32.mrf.mxu0
  %v592 = vadd.f32 0.0, %v591
  %v593 = vpop.f32.mrf.mxu0
  %v594 = vadd.f32 0.0, %v593
  %595 = vmatprep.mubr.bf16.mxu0 %v420
  %596 = vmatmul.mubr.bf16.gmra.mxu0 %v153
  %v597 = vpop.f32.mrf.mxu0
  %v598 = vadd.f32 0.0, %v597
  %v599 = vpop.f32.mrf.mxu0
  %v600 = vadd.f32 0.0, %v599
  %v601 = vpop.f32.mrf.mxu0
  %v602 = vadd.f32 0.0, %v601
  %v603 = vpop.f32.mrf.mxu0
  %v604 = vadd.f32 0.0, %v603
  %605 = vmatprep.mubr.bf16.mxu0 %v423
  %606 = vmatmul.mubr.bf16.gmra.mxu0 %v155
  %v607 = vpop.f32.mrf.mxu0
  %v608 = vadd.f32 0.0, %v607
  %v609 = vpop.f32.mrf.mxu0
  %v610 = vadd.f32 0.0, %v609
  %v611 = vpop.f32.mrf.mxu0
  %v612 = vadd.f32 0.0, %v611
  %v613 = vpop.f32.mrf.mxu0
  %v614 = vadd.f32 0.0, %v613
  %615 = vmatprep.mubr.bf16.mxu0 %v426
  %616 = vmatmul.mubr.bf16.gmra.mxu0 %v157
  %v617 = vpop.f32.mrf.mxu0
  %v618 = vadd.f32 0.0, %v617
  %v619 = vpop.f32.mrf.mxu0
  %v620 = vadd.f32 0.0, %v619
  %v621 = vpop.f32.mrf.mxu0
  %v622 = vadd.f32 0.0, %v621
  %v623 = vpop.f32.mrf.mxu0
  %v624 = vadd.f32 0.0, %v623
  %625 = vmatprep.mubr.bf16.mxu0 %v429
  %626 = vmatmul.mubr.bf16.gmra.mxu0 %v159
  %v627 = vpop.f32.mrf.mxu0
  %v628 = vadd.f32 0.0, %v627
  %v629 = vpop.f32.mrf.mxu0
  %v630 = vadd.f32 0.0, %v629
  %v631 = vpop.f32.mrf.mxu0
  %v632 = vadd.f32 0.0, %v631
  %v633 = vpop.f32.mrf.mxu0
  %v634 = vadd.f32 0.0, %v633
  %635 = vmatprep.mubr.bf16.mxu0 %v432
  %636 = vmatmul.mubr.bf16.gmra.mxu0 %v161
  %v637 = vpop.f32.mrf.mxu0
  %v638 = vadd.f32 0.0, %v637
  %v639 = vpop.f32.mrf.mxu0
  %v640 = vadd.f32 0.0, %v639
  %v641 = vpop.f32.mrf.mxu0
  %v642 = vadd.f32 0.0, %v641
  %v643 = vpop.f32.mrf.mxu0
  %v644 = vadd.f32 0.0, %v643
  %645 = vmatprep.mubr.bf16.mxu0 %v435
  %646 = vmatmul.mubr.bf16.gmra.mxu0 %v163
  %v647 = vpop.f32.mrf.mxu0
  %v648 = vadd.f32 0.0, %v647
  %v649 = vpop.f32.mrf.mxu0
  %v650 = vadd.f32 0.0, %v649
  %v651 = vpop.f32.mrf.mxu0
  %v652 = vadd.f32 0.0, %v651
  %v653 = vpop.f32.mrf.mxu0
  %v654 = vadd.f32 0.0, %v653
  %655 = vmatprep.mubr.bf16.mxu0 %v438
  %656 = vmatmul.mubr.bf16.gmra.mxu0 %v165
  %v657 = vpop.f32.mrf.mxu0
  %v658 = vadd.f32 0.0, %v657
  %v659 = vpop.f32.mrf.mxu0
  %v660 = vadd.f32 0.0, %v659
  %v661 = vpop.f32.mrf.mxu0
  %v662 = vadd.f32 0.0, %v661
  %v663 = vpop.f32.mrf.mxu0
  %v664 = vadd.f32 0.0, %v663
  %665 = vdwg.mxu0
  %v666 = vmax.f32 %v475, %v477
  %v667 = vmax.f32 %v479, %v481
  %v668 = vmax.f32 %v485, %v487
  %v669 = vmax.f32 %v489, %v491
  %v670 = vmax.f32 %v495, %v497
  %v671 = vmax.f32 %v499, %v501
  %v672 = vmax.f32 %v505, %v507
  %v673 = vmax.f32 %v509, %v511
  %v674 = vmax.f32 %v515, %v517
  %v675 = vmax.f32 %v519, %v521
  %v676 = vmax.f32 %v525, %v527
  %v677 = vmax.f32 %v529, %v531
  %v678 = vmax.f32 %v535, %v537
  %v679 = vmax.f32 %v539, %v541
  %v680 = vmax.f32 %v545, %v547
  %v681 = vmax.f32 %v549, %v551
  %v682 = vmax.f32 %v588, %v590
  %v683 = vmax.f32 %v592, %v594
  %v684 = vmax.f32 %v598, %v600
  %v685 = vmax.f32 %v602, %v604
  %v686 = vmax.f32 %v608, %v610
  %v687 = vmax.f32 %v612, %v614
  %v688 = vmax.f32 %v618, %v620
  %v689 = vmax.f32 %v622, %v624
  %v690 = vmax.f32 %v628, %v630
  %v691 = vmax.f32 %v632, %v634
  %v692 = vmax.f32 %v638, %v640
  %v693 = vmax.f32 %v642, %v644
  %v694 = vmax.f32 %v648, %v650
  %v695 = vmax.f32 %v652, %v654
  %v696 = vmax.f32 %v658, %v660
  %v697 = vmax.f32 %v662, %v664
  %v698 = vmax.f32 %v666, %v682
  %v699 = vmax.f32 %v667, %v683
  %v700 = vmax.f32 %v668, %v684
  %v701 = vmax.f32 %v669, %v685
  %v702 = vmax.f32 %v670, %v686
  %v703 = vmax.f32 %v671, %v687
  %v704 = vmax.f32 %v672, %v688
  %v705 = vmax.f32 %v673, %v689
  %v706 = vmax.f32 %v674, %v690
  %v707 = vmax.f32 %v675, %v691
  %v708 = vmax.f32 %v676, %v692
  %v709 = vmax.f32 %v677, %v693
  %v710 = vmax.f32 %v678, %v694
  %v711 = vmax.f32 %v679, %v695
  %v712 = vmax.f32 %v680, %v696
  %v713 = vmax.f32 %v681, %v697
  %v714 = vld [vmem:[%s2] sm:$0x1]
  %v716 = vlaneseq
  %v717 = vshrl.u32 %v716, 7
  %v718 = vsub.s32 0, %v717
  %v719 = vrot.slane %v714, %v718
  %v721 = vadd.f32 %v698, %v719
  %v722 = vadd.f32 %v699, %v719
  %v723 = vadd.f32 %v700, %v719
  %v724 = vadd.f32 %v701, %v719
  %v725 = vadd.f32 %v702, %v719
  %v726 = vadd.f32 %v703, %v719
  %v727 = vadd.f32 %v704, %v719
  %v728 = vadd.f32 %v705, %v719
  %v729 = vadd.f32 %v706, %v719
  %v730 = vadd.f32 %v707, %v719
  %v731 = vadd.f32 %v708, %v719
  %v732 = vadd.f32 %v709, %v719
  %v733 = vadd.f32 %v710, %v719
  %v734 = vadd.f32 %v711, %v719
  %v735 = vadd.f32 %v712, %v719
  %v736 = vadd.f32 %v713, %v719
  %v737 = vmax.f32 %v721, 0.0
  %v738 = vmax.f32 %v722, 0.0
  %v739 = vmax.f32 %v723, 0.0
  %v740 = vmax.f32 %v724, 0.0
  %v741 = vmax.f32 %v725, 0.0
  %v742 = vmax.f32 %v726, 0.0
  %v743 = vmax.f32 %v727, 0.0
  %v744 = vmax.f32 %v728, 0.0
  %v745 = vmax.f32 %v729, 0.0
  %v746 = vmax.f32 %v730, 0.0
  %v747 = vmax.f32 %v731, 0.0
  %v748 = vmax.f32 %v732, 0.0
  %v749 = vmax.f32 %v733, 0.0
  %v750 = vmax.f32 %v734, 0.0
  %v751 = vmax.f32 %v735, 0.0
  %v752 = vmax.f32 %v736, 0.0
  %753 = vst [vmem:[#allocation2] sm:$0xff] %v737
  %754 = vst [vmem:[#allocation2 + $0x8] sm:$0xff] %v738
  %755 = vst [vmem:[#allocation2 + $0x10] sm:$0xff] %v739
  %756 = vst [vmem:[#allocation2 + $0x18] sm:$0xff] %v740
  %757 = vst [vmem:[#allocation2 + $0x20] sm:$0xff] %v741
  %758 = vst [vmem:[#allocation2 + $0x28] sm:$0xff] %v742
  %759 = vst [vmem:[#allocation2 + $0x30] sm:$0xff] %v743
  %760 = vst [vmem:[#allocation2 + $0x38] sm:$0xff] %v744
  %761 = vst [vmem:[#allocation2 + $0x40] sm:$0xff] %v745
  %762 = vst [vmem:[#allocation2 + $0x48] sm:$0xff] %v746
  %763 = vst [vmem:[#allocation2 + $0x50] sm:$0xff] %v747
  %764 = vst [vmem:[#allocation2 + $0x58] sm:$0xff] %v748
  %765 = vst [vmem:[#allocation2 + $0x60] sm:$0xff] %v749
  %766 = vst [vmem:[#allocation2 + $0x68] sm:$0xff] %v750
  %767 = vst [vmem:[#allocation2 + $0x70] sm:$0xff] %v751
  %768 = vst [vmem:[#allocation2 + $0x78] sm:$0xff] %v752
  %769 = vst [vmem:[#allocation2 + $0x80] sm:$0xff] 0.0
  %v770 = vld [vmem:[#allocation2] sm:$0xff]
  %v771 = vld [vmem:[#allocation2 + $0x8] sm:$0xff]
  %v772 = vld [vmem:[#allocation2 + $0x10] sm:$0xff]
  %v773 = vld [vmem:[#allocation2 + $0x18] sm:$0xff]
  %v774 = vld [vmem:[#allocation2 + $0x20] sm:$0xff]
  %v775 = vld [vmem:[#allocation2 + $0x28] sm:$0xff]
  %v776 = vld [vmem:[#allocation2 + $0x30] sm:$0xff]
  %v777 = vld [vmem:[#allocation2 + $0x38] sm:$0xff]
  %v778 = vld [vmem:[#allocation2 + $0x40] sm:$0xff]
  %v779 = vld [vmem:[#allocation2 + $0x48] sm:$0xff]
  %v780 = vld [vmem:[#allocation2 + $0x50] sm:$0xff]
  %v781 = vld [vmem:[#allocation2 + $0x58] sm:$0xff]
  %v782 = vld [vmem:[#allocation2 + $0x60] sm:$0xff]
  %v783 = vld [vmem:[#allocation2 + $0x68] sm:$0xff]
  %v784 = vld [vmem:[#allocation2 + $0x70] sm:$0xff]
  %v785 = vld [vmem:[#allocation2 + $0x78] sm:$0xff]
  %v786 = vpack.c.bf16 %v771, %v770
  %v787 = vpack.c.bf16 %v773, %v772
  %v788 = vpack.c.bf16 %v775, %v774
  %v789 = vpack.c.bf16 %v777, %v776
  %v790 = vpack.c.bf16 %v779, %v778
  %v791 = vpack.c.bf16 %v781, %v780
  %v792 = vpack.c.bf16 %v783, %v782
  %v793 = vpack.c.bf16 %v785, %v784
  %v794 = vld [vmem:[%s3] sm:$0xff]
  %v795 = vld [vmem:[%s3 + $0x8] sm:$0xff]
  %v796 = vld [vmem:[%s3 + $0x10] sm:$0xff]
  %v797 = vld [vmem:[%s3 + $0x18] sm:$0xff]
  %v798 = vld [vmem:[%s3 + $0x20] sm:$0xff]
  %v799 = vld [vmem:[%s3 + $0x28] sm:$0xff]
  %v800 = vld [vmem:[%s3 + $0x30] sm:$0xff]
  %v801 = vld [vmem:[%s3 + $0x38] sm:$0xff]
  %v802 = vld [vmem:[%s3 + $0x40] sm:$0xff]
  %v803 = vld [vmem:[%s3 + $0x48] sm:$0xff]
  %v804 = vld [vmem:[%s3 + $0x50] sm:$0xff]
  %v805 = vld [vmem:[%s3 + $0x58] sm:$0xff]
  %v806 = vld [vmem:[%s3 + $0x60] sm:$0xff]
  %v807 = vld [vmem:[%s3 + $0x68] sm:$0xff]
  %v808 = vld [vmem:[%s3 + $0x70] sm:$0xff]
  %v809 = vld [vmem:[%s3 + $0x78] sm:$0xff]
  %v810 = vld [vmem:[#allocation2 + $0x1] sm:$0xff]
  %v811 = vld [vmem:[#allocation2 + $0x9] sm:$0xff]
  %v812 = vld [vmem:[#allocation2 + $0x11] sm:$0xff]
  %v813 = vld [vmem:[#allocation2 + $0x19] sm:$0xff]
  %v814 = vld [vmem:[#allocation2 + $0x21] sm:$0xff]
  %v815 = vld [vmem:[#allocation2 + $0x29] sm:$0xff]
  %v816 = vld [vmem:[#allocation2 + $0x31] sm:$0xff]
  %v817 = vld [vmem:[#allocation2 + $0x39] sm:$0xff]
  %v818 = vld [vmem:[#allocation2 + $0x41] sm:$0xff]
  %v819 = vld [vmem:[#allocation2 + $0x49] sm:$0xff]
  %v820 = vld [vmem:[#allocation2 + $0x51] sm:$0xff]
  %v821 = vld [vmem:[#allocation2 + $0x59] sm:$0xff]
  %v822 = vld [vmem:[#allocation2 + $0x61] sm:$0xff]
  %v823 = vld [vmem:[#allocation2 + $0x69] sm:$0xff]
  %v824 = vld [vmem:[#allocation2 + $0x71] sm:$0xff]
  %v825 = vld [vmem:[#allocation2 + $0x79] sm:$0xff]
  %v826 = vpack.c.bf16 %v811, %v810
  %v827 = vpack.c.bf16 %v813, %v812
  %v828 = vpack.c.bf16 %v815, %v814
  %v829 = vpack.c.bf16 %v817, %v816
  %v830 = vpack.c.bf16 %v819, %v818
  %v831 = vpack.c.bf16 %v821, %v820
  %v832 = vpack.c.bf16 %v823, %v822
  %v833 = vpack.c.bf16 %v825, %v824
  %s834 = scalar_lea.vmem %s3, 128
  %v835 = vld [vmem:[%s834] sm:$0xff]
  %v836 = vld [vmem:[%s834 + $0x8] sm:$0xff]
  %v837 = vld [vmem:[%s834 + $0x10] sm:$0xff]
  %v838 = vld [vmem:[%s834 + $0x18] sm:$0xff]
  %v839 = vld [vmem:[%s834 + $0x20] sm:$0xff]
  %v840 = vld [vmem:[%s834 + $0x28] sm:$0xff]
  %v841 = vld [vmem:[%s834 + $0x30] sm:$0xff]
  %v842 = vld [vmem:[%s834 + $0x38] sm:$0xff]
  %v843 = vld [vmem:[%s834 + $0x40] sm:$0xff]
  %v844 = vld [vmem:[%s834 + $0x48] sm:$0xff]
  %v845 = vld [vmem:[%s834 + $0x50] sm:$0xff]
  %v846 = vld [vmem:[%s834 + $0x58] sm:$0xff]
  %v847 = vld [vmem:[%s834 + $0x60] sm:$0xff]
  %v848 = vld [vmem:[%s834 + $0x68] sm:$0xff]
  %v849 = vld [vmem:[%s834 + $0x70] sm:$0xff]
  %v850 = vld [vmem:[%s834 + $0x78] sm:$0xff]
  %v867 = vunpack.c.l.b16 %v835
  %v868 = vunpack.c.h.b16 %v835
  %v869 = vunpack.c.l.b16 %v836
  %v870 = vunpack.c.h.b16 %v836
  %v871 = vunpack.c.l.b16 %v837
  %v872 = vunpack.c.h.b16 %v837
  %v873 = vunpack.c.l.b16 %v838
  %v874 = vunpack.c.h.b16 %v838
  %v875 = vunpack.c.l.b16 %v839
  %v876 = vunpack.c.h.b16 %v839
  %v877 = vunpack.c.l.b16 %v840
  %v878 = vunpack.c.h.b16 %v840
  %v879 = vunpack.c.l.b16 %v841
  %v880 = vunpack.c.h.b16 %v841
  %v881 = vunpack.c.l.b16 %v842
  %v882 = vunpack.c.h.b16 %v842
  %v883 = vunpack.c.l.b16 %v843
  %v884 = vunpack.c.h.b16 %v843
  %v885 = vunpack.c.l.b16 %v844
  %v886 = vunpack.c.h.b16 %v844
  %v887 = vunpack.c.l.b16 %v845
  %v888 = vunpack.c.h.b16 %v845
  %v889 = vunpack.c.l.b16 %v846
  %v890 = vunpack.c.h.b16 %v846
  %v891 = vunpack.c.l.b16 %v847
  %v892 = vunpack.c.h.b16 %v847
  %v893 = vunpack.c.l.b16 %v848
  %v894 = vunpack.c.h.b16 %v848
  %v895 = vunpack.c.l.b16 %v849
  %v896 = vunpack.c.h.b16 %v849
  %v897 = vunpack.c.l.b16 %v850
  %v898 = vunpack.c.h.b16 %v850
  %v899 = vpack.c.b16 %v869, %v867
  %v900 = vpack.c.b16 %v870, %v868
  %v901 = vpack.c.b16 %v873, %v871
  %v902 = vpack.c.b16 %v874, %v872
  %v903 = vpack.c.b16 %v877, %v875
  %v904 = vpack.c.b16 %v878, %v876
  %v905 = vpack.c.b16 %v881, %v879
  %v906 = vpack.c.b16 %v882, %v880
  %v907 = vpack.c.b16 %v885, %v883
  %v908 = vpack.c.b16 %v886, %v884
  %v909 = vpack.c.b16 %v889, %v887
  %v910 = vpack.c.b16 %v890, %v888
  %v911 = vpack.c.b16 %v893, %v891
  %v912 = vpack.c.b16 %v894, %v892
  %v913 = vpack.c.b16 %v897, %v895
  %v914 = vpack.c.b16 %v898, %v896
  %931 = vmatprep.subr.bf16.mxu0 %v914
  %932 = vmatpush1.bf16.msra.mxu0 %v913
  %933 = vmatprep.subr.bf16.mxu0 %v912
  %934 = vmatpush1.bf16.msra.mxu0 %v911
  %935 = vmatprep.subr.bf16.mxu0 %v910
  %936 = vmatpush1.bf16.msra.mxu0 %v909
  %937 = vmatprep.subr.bf16.mxu0 %v908
  %938 = vmatpush1.bf16.msra.mxu0 %v907
  %939 = vmatprep.subr.bf16.mxu0 %v906
  %940 = vmatpush1.bf16.msra.mxu0 %v905
  %941 = vmatprep.subr.bf16.mxu0 %v904
  %942 = vmatpush1.bf16.msra.mxu0 %v903
  %943 = vmatprep.subr.bf16.mxu0 %v902
  %944 = vmatpush1.bf16.msra.mxu0 %v901
  %945 = vmatprep.subr.bf16.mxu0 %v900
  %946 = vmatpush1.bf16.msra.mxu0 %v899
  %947 = vmatprep.subr.bf16.mxu0 0
  %948 = vmatpush2.bf16.msra.mxu0 0
  %949 = vmatprep.subr.bf16.mxu0 0
  %950 = vmatpush2.bf16.msra.mxu0 0
  %951 = vmatprep.subr.bf16.mxu0 0
  %952 = vmatpush2.bf16.msra.mxu0 0
  %953 = vmatprep.subr.bf16.mxu0 0
  %954 = vmatpush2.bf16.msra.mxu0 0
  %955 = vmatprep.subr.bf16.mxu0 0
  %956 = vmatpush2.bf16.msra.mxu0 0
  %957 = vmatprep.subr.bf16.mxu0 0
  %958 = vmatpush2.bf16.msra.mxu0 0
  %959 = vmatprep.subr.bf16.mxu0 0
  %960 = vmatpush2.bf16.msra.mxu0 0
  %961 = vmatprep.subr.bf16.mxu0 0
  %962 = vmatpush2.bf16.msra.mxu0 0
  %963 = vmatprep.mubr.bf16.mxu0 0
  %964 = vmatmul.mubr.bf16.gmra.mxu0 %v826
  %v965 = vpop.f32.mrf.mxu0
  %v966 = vadd.f32 0.0, %v965
  %v967 = vpop.f32.mrf.mxu0
  %v968 = vadd.f32 0.0, %v967
  %v969 = vpop.f32.mrf.mxu0
  %v970 = vadd.f32 0.0, %v969
  %v971 = vpop.f32.mrf.mxu0
  %v972 = vadd.f32 0.0, %v971
  %973 = vmatprep.mubr.bf16.mxu0 0
  %974 = vmatmul.mubr.bf16.gmra.mxu0 %v827
  %v975 = vpop.f32.mrf.mxu0
  %v976 = vadd.f32 0.0, %v975
  %v977 = vpop.f32.mrf.mxu0
  %v978 = vadd.f32 0.0, %v977
  %v979 = vpop.f32.mrf.mxu0
  %v980 = vadd.f32 0.0, %v979
  %v981 = vpop.f32.mrf.mxu0
  %v982 = vadd.f32 0.0, %v981
  %983 = vmatprep.mubr.bf16.mxu0 0
  %984 = vmatmul.mubr.bf16.gmra.mxu0 %v828
  %v985 = vpop.f32.mrf.mxu0
  %v986 = vadd.f32 0.0, %v985
  %v987 = vpop.f32.mrf.mxu0
  %v988 = vadd.f32 0.0, %v987
  %v989 = vpop.f32.mrf.mxu0
  %v990 = vadd.f32 0.0, %v989
  %v991 = vpop.f32.mrf.mxu0
  %v992 = vadd.f32 0.0, %v991
  %993 = vmatprep.mubr.bf16.mxu0 0
  %994 = vmatmul.mubr.bf16.gmra.mxu0 %v829
  %v995 = vpop.f32.mrf.mxu0
  %v996 = vadd.f32 0.0, %v995
  %v997 = vpop.f32.mrf.mxu0
  %v998 = vadd.f32 0.0, %v997
  %v999 = vpop.f32.mrf.mxu0
  %v1000 = vadd.f32 0.0, %v999
  %v1001 = vpop.f32.mrf.mxu0
  %v1002 = vadd.f32 0.0, %v1001
  %1003 = vmatprep.mubr.bf16.mxu0 0
  %1004 = vmatmul.mubr.bf16.gmra.mxu0 %v830
  %v1005 = vpop.f32.mrf.mxu0
  %v1006 = vadd.f32 0.0, %v1005
  %v1007 = vpop.f32.mrf.mxu0
  %v1008 = vadd.f32 0.0, %v1007
  %v1009 = vpop.f32.mrf.mxu0
  %v1010 = vadd.f32 0.0, %v1009
  %v1011 = vpop.f32.mrf.mxu0
  %v1012 = vadd.f32 0.0, %v1011
  %1013 = vmatprep.mubr.bf16.mxu0 0
  %1014 = vmatmul.mubr.bf16.gmra.mxu0 %v831
  %v1015 = vpop.f32.mrf.mxu0
  %v1016 = vadd.f32 0.0, %v1015
  %v1017 = vpop.f32.mrf.mxu0
  %v1018 = vadd.f32 0.0, %v1017
  %v1019 = vpop.f32.mrf.mxu0
  %v1020 = vadd.f32 0.0, %v1019
  %v1021 = vpop.f32.mrf.mxu0
  %v1022 = vadd.f32 0.0, %v1021
  %1023 = vmatprep.mubr.bf16.mxu0 0
  %1024 = vmatmul.mubr.bf16.gmra.mxu0 %v832
  %v1025 = vpop.f32.mrf.mxu0
  %v1026 = vadd.f32 0.0, %v1025
  %v1027 = vpop.f32.mrf.mxu0
  %v1028 = vadd.f32 0.0, %v1027
  %v1029 = vpop.f32.mrf.mxu0
  %v1030 = vadd.f32 0.0, %v1029
  %v1031 = vpop.f32.mrf.mxu0
  %v1032 = vadd.f32 0.0, %v1031
  %1033 = vmatprep.mubr.bf16.mxu0 0
  %1034 = vmatmul.mubr.bf16.gmra.mxu0 %v833
  %v1035 = vpop.f32.mrf.mxu0
  %v1036 = vadd.f32 0.0, %v1035
  %v1037 = vpop.f32.mrf.mxu0
  %v1038 = vadd.f32 0.0, %v1037
  %v1039 = vpop.f32.mrf.mxu0
  %v1040 = vadd.f32 0.0, %v1039
  %v1041 = vpop.f32.mrf.mxu0
  %v1042 = vadd.f32 0.0, %v1041
  %1043 = vdwg.mxu0
  %v1060 = vunpack.c.l.b16 %v794
  %v1061 = vunpack.c.h.b16 %v794
  %v1062 = vunpack.c.l.b16 %v795
  %v1063 = vunpack.c.h.b16 %v795
  %v1064 = vunpack.c.l.b16 %v796
  %v1065 = vunpack.c.h.b16 %v796
  %v1066 = vunpack.c.l.b16 %v797
  %v1067 = vunpack.c.h.b16 %v797
  %v1068 = vunpack.c.l.b16 %v798
  %v1069 = vunpack.c.h.b16 %v798
  %v1070 = vunpack.c.l.b16 %v799
  %v1071 = vunpack.c.h.b16 %v799
  %v1072 = vunpack.c.l.b16 %v800
  %v1073 = vunpack.c.h.b16 %v800
  %v1074 = vunpack.c.l.b16 %v801
  %v1075 = vunpack.c.h.b16 %v801
  %v1076 = vunpack.c.l.b16 %v802
  %v1077 = vunpack.c.h.b16 %v802
  %v1078 = vunpack.c.l.b16 %v803
  %v1079 = vunpack.c.h.b16 %v803
  %v1080 = vunpack.c.l.b16 %v804
  %v1081 = vunpack.c.h.b16 %v804
  %v1082 = vunpack.c.l.b16 %v805
  %v1083 = vunpack.c.h.b16 %v805
  %v1084 = vunpack.c.l.b16 %v806
  %v1085 = vunpack.c.h.b16 %v806
  %v1086 = vunpack.c.l.b16 %v807
  %v1087 = vunpack.c.h.b16 %v807
  %v1088 = vunpack.c.l.b16 %v808
  %v1089 = vunpack.c.h.b16 %v808
  %v1090 = vunpack.c.l.b16 %v809
  %v1091 = vunpack.c.h.b16 %v809
  %v1092 = vpack.c.b16 %v1062, %v1060
  %v1093 = vpack.c.b16 %v1063, %v1061
  %v1094 = vpack.c.b16 %v1066, %v1064
  %v1095 = vpack.c.b16 %v1067, %v1065
  %v1096 = vpack.c.b16 %v1070, %v1068
  %v1097 = vpack.c.b16 %v1071, %v1069
  %v1098 = vpack.c.b16 %v1074, %v1072
  %v1099 = vpack.c.b16 %v1075, %v1073
  %v1100 = vpack.c.b16 %v1078, %v1076
  %v1101 = vpack.c.b16 %v1079, %v1077
  %v1102 = vpack.c.b16 %v1082, %v1080
  %v1103 = vpack.c.b16 %v1083, %v1081
  %v1104 = vpack.c.b16 %v1086, %v1084
  %v1105 = vpack.c.b16 %v1087, %v1085
  %v1106 = vpack.c.b16 %v1090, %v1088
  %v1107 = vpack.c.b16 %v1091, %v1089
  %1124 = vmatprep.subr.bf16.mxu0 %v1107
  %1125 = vmatpush1.bf16.msra.mxu0 %v1106
  %1126 = vmatprep.subr.bf16.mxu0 %v1105
  %1127 = vmatpush1.bf16.msra.mxu0 %v1104
  %1128 = vmatprep.subr.bf16.mxu0 %v1103
  %1129 = vmatpush1.bf16.msra.mxu0 %v1102
  %1130 = vmatprep.subr.bf16.mxu0 %v1101
  %1131 = vmatpush1.bf16.msra.mxu0 %v1100
  %1132 = vmatprep.subr.bf16.mxu0 %v1099
  %1133 = vmatpush1.bf16.msra.mxu0 %v1098
  %1134 = vmatprep.subr.bf16.mxu0 %v1097
  %1135 = vmatpush1.bf16.msra.mxu0 %v1096
  %1136 = vmatprep.subr.bf16.mxu0 %v1095
  %1137 = vmatpush1.bf16.msra.mxu0 %v1094
  %1138 = vmatprep.subr.bf16.mxu0 %v1093
  %1139 = vmatpush1.bf16.msra.mxu0 %v1092
  %1140 = vmatprep.subr.bf16.mxu0 0
  %1141 = vmatpush2.bf16.msra.mxu0 0
  %1142 = vmatprep.subr.bf16.mxu0 0
  %1143 = vmatpush2.bf16.msra.mxu0 0
  %1144 = vmatprep.subr.bf16.mxu0 0
  %1145 = vmatpush2.bf16.msra.mxu0 0
  %1146 = vmatprep.subr.bf16.mxu0 0
  %1147 = vmatpush2.bf16.msra.mxu0 0
  %1148 = vmatprep.subr.bf16.mxu0 0
  %1149 = vmatpush2.bf16.msra.mxu0 0
  %1150 = vmatprep.subr.bf16.mxu0 0
  %1151 = vmatpush2.bf16.msra.mxu0 0
  %1152 = vmatprep.subr.bf16.mxu0 0
  %1153 = vmatpush2.bf16.msra.mxu0 0
  %1154 = vmatprep.subr.bf16.mxu0 0
  %1155 = vmatpush2.bf16.msra.mxu0 0
  %1156 = vmatprep.mubr.bf16.mxu0 0
  %1157 = vmatmul.mubr.bf16.gmra.mxu0 %v786
  %v1158 = vpop.f32.mrf.mxu0
  %v1159 = vadd.f32 %v966, %v1158
  %v1160 = vpop.f32.mrf.mxu0
  %v1161 = vadd.f32 %v968, %v1160
  %v1162 = vpop.f32.mrf.mxu0
  %v1163 = vadd.f32 %v970, %v1162
  %v1164 = vpop.f32.mrf.mxu0
  %v1165 = vadd.f32 %v972, %v1164
  %1166 = vmatprep.mubr.bf16.mxu0 0
  %1167 = vmatmul.mubr.bf16.gmra.mxu0 %v787
  %v1168 = vpop.f32.mrf.mxu0
  %v1169 = vadd.f32 %v976, %v1168
  %v1170 = vpop.f32.mrf.mxu0
  %v1171 = vadd.f32 %v978, %v1170
  %v1172 = vpop.f32.mrf.mxu0
  %v1173 = vadd.f32 %v980, %v1172
  %v1174 = vpop.f32.mrf.mxu0
  %v1175 = vadd.f32 %v982, %v1174
  %1176 = vmatprep.mubr.bf16.mxu0 0
  %1177 = vmatmul.mubr.bf16.gmra.mxu0 %v788
  %v1178 = vpop.f32.mrf.mxu0
  %v1179 = vadd.f32 %v986, %v1178
  %v1180 = vpop.f32.mrf.mxu0
  %v1181 = vadd.f32 %v988, %v1180
  %v1182 = vpop.f32.mrf.mxu0
  %v1183 = vadd.f32 %v990, %v1182
  %v1184 = vpop.f32.mrf.mxu0
  %v1185 = vadd.f32 %v992, %v1184
  %1186 = vmatprep.mubr.bf16.mxu0 0
  %1187 = vmatmul.mubr.bf16.gmra.mxu0 %v789
  %v1188 = vpop.f32.mrf.mxu0
  %v1189 = vadd.f32 %v996, %v1188
  %v1190 = vpop.f32.mrf.mxu0
  %v1191 = vadd.f32 %v998, %v1190
  %v1192 = vpop.f32.mrf.mxu0
  %v1193 = vadd.f32 %v1000, %v1192
  %v1194 = vpop.f32.mrf.mxu0
  %v1195 = vadd.f32 %v1002, %v1194
  %1196 = vmatprep.mubr.bf16.mxu0 0
  %1197 = vmatmul.mubr.bf16.gmra.mxu0 %v790
  %v1198 = vpop.f32.mrf.mxu0
  %v1199 = vadd.f32 %v1006, %v1198
  %v1200 = vpop.f32.mrf.mxu0
  %v1201 = vadd.f32 %v1008, %v1200
  %v1202 = vpop.f32.mrf.mxu0
  %v1203 = vadd.f32 %v1010, %v1202
  %v1204 = vpop.f32.mrf.mxu0
  %v1205 = vadd.f32 %v1012, %v1204
  %1206 = vmatprep.mubr.bf16.mxu0 0
  %1207 = vmatmul.mubr.bf16.gmra.mxu0 %v791
  %v1208 = vpop.f32.mrf.mxu0
  %v1209 = vadd.f32 %v1016, %v1208
  %v1210 = vpop.f32.mrf.mxu0
  %v1211 = vadd.f32 %v1018, %v1210
  %v1212 = vpop.f32.mrf.mxu0
  %v1213 = vadd.f32 %v1020, %v1212
  %v1214 = vpop.f32.mrf.mxu0
  %v1215 = vadd.f32 %v1022, %v1214
  %1216 = vmatprep.mubr.bf16.mxu0 0
  %1217 = vmatmul.mubr.bf16.gmra.mxu0 %v792
  %v1218 = vpop.f32.mrf.mxu0
  %v1219 = vadd.f32 %v1026, %v1218
  %v1220 = vpop.f32.mrf.mxu0
  %v1221 = vadd.f32 %v1028, %v1220
  %v1222 = vpop.f32.mrf.mxu0
  %v1223 = vadd.f32 %v1030, %v1222
  %v1224 = vpop.f32.mrf.mxu0
  %v1225 = vadd.f32 %v1032, %v1224
  %1226 = vmatprep.mubr.bf16.mxu0 0
  %1227 = vmatmul.mubr.bf16.gmra.mxu0 %v793
  %v1228 = vpop.f32.mrf.mxu0
  %v1229 = vadd.f32 %v1036, %v1228
  %v1230 = vpop.f32.mrf.mxu0
  %v1231 = vadd.f32 %v1038, %v1230
  %v1232 = vpop.f32.mrf.mxu0
  %v1233 = vadd.f32 %v1040, %v1232
  %v1234 = vpop.f32.mrf.mxu0
  %v1235 = vadd.f32 %v1042, %v1234
  %1236 = vdwg.mxu0
  %v1237 = vld [vmem:[#allocation2 + $0x2] sm:$0xff]
  %v1238 = vld [vmem:[#allocation2 + $0xa] sm:$0xff]
  %v1239 = vld [vmem:[#allocation2 + $0x12] sm:$0xff]
  %v1240 = vld [vmem:[#allocation2 + $0x1a] sm:$0xff]
  %v1241 = vld [vmem:[#allocation2 + $0x22] sm:$0xff]
  %v1242 = vld [vmem:[#allocation2 + $0x2a] sm:$0xff]
  %v1243 = vld [vmem:[#allocation2 + $0x32] sm:$0xff]
  %v1244 = vld [vmem:[#allocation2 + $0x3a] sm:$0xff]
  %v1245 = vld [vmem:[#allocation2 + $0x42] sm:$0xff]
  %v1246 = vld [vmem:[#allocation2 + $0x4a] sm:$0xff]
  %v1247 = vld [vmem:[#allocation2 + $0x52] sm:$0xff]
  %v1248 = vld [vmem:[#allocation2 + $0x5a] sm:$0xff]
  %v1249 = vld [vmem:[#allocation2 + $0x62] sm:$0xff]
  %v1250 = vld [vmem:[#allocation2 + $0x6a] sm:$0xff]
  %v1251 = vld [vmem:[#allocation2 + $0x72] sm:$0xff]
  %v1252 = vld [vmem:[#allocation2 + $0x7a] sm:$0xff]
  %v1253 = vpack.c.bf16 %v1238, %v1237
  %v1254 = vpack.c.bf16 %v1240, %v1239
  %v1255 = vpack.c.bf16 %v1242, %v1241
  %v1256 = vpack.c.bf16 %v1244, %v1243
  %v1257 = vpack.c.bf16 %v1246, %v1245
  %v1258 = vpack.c.bf16 %v1248, %v1247
  %v1259 = vpack.c.bf16 %v1250, %v1249
  %v1260 = vpack.c.bf16 %v1252, %v1251
  %s1261 = scalar_lea.vmem %s3, 256
  %v1262 = vld [vmem:[%s1261] sm:$0xff]
  %v1263 = vld [vmem:[%s1261 + $0x8] sm:$0xff]
  %v1264 = vld [vmem:[%s1261 + $0x10] sm:$0xff]
  %v1265 = vld [vmem:[%s1261 + $0x18] sm:$0xff]
  %v1266 = vld [vmem:[%s1261 + $0x20] sm:$0xff]
  %v1267 = vld [vmem:[%s1261 + $0x28] sm:$0xff]
  %v1268 = vld [vmem:[%s1261 + $0x30] sm:$0xff]
  %v1269 = vld [vmem:[%s1261 + $0x38] sm:$0xff]
  %v1270 = vld [vmem:[%s1261 + $0x40] sm:$0xff]
  %v1271 = vld [vmem:[%s1261 + $0x48] sm:$0xff]
  %v1272 = vld [vmem:[%s1261 + $0x50] sm:$0xff]
  %v1273 = vld [vmem:[%s1261 + $0x58] sm:$0xff]
  %v1274 = vld [vmem:[%s1261 + $0x60] sm:$0xff]
  %v1275 = vld [vmem:[%s1261 + $0x68] sm:$0xff]
  %v1276 = vld [vmem:[%s1261 + $0x70] sm:$0xff]
  %v1277 = vld [vmem:[%s1261 + $0x78] sm:$0xff]
  %v1294 = vunpack.c.l.b16 %v1262
  %v1295 = vunpack.c.h.b16 %v1262
  %v1296 = vunpack.c.l.b16 %v1263
  %v1297 = vunpack.c.h.b16 %v1263
  %v1298 = vunpack.c.l.b16 %v1264
  %v1299 = vunpack.c.h.b16 %v1264
  %v1300 = vunpack.c.l.b16 %v1265
  %v1301 = vunpack.c.h.b16 %v1265
  %v1302 = vunpack.c.l.b16 %v1266
  %v1303 = vunpack.c.h.b16 %v1266
  %v1304 = vunpack.c.l.b16 %v1267
  %v1305 = vunpack.c.h.b16 %v1267
  %v1306 = vunpack.c.l.b16 %v1268
  %v1307 = vunpack.c.h.b16 %v1268
  %v1308 = vunpack.c.l.b16 %v1269
  %v1309 = vunpack.c.h.b16 %v1269
  %v1310 = vunpack.c.l.b16 %v1270
  %v1311 = vunpack.c.h.b16 %v1270
  %v1312 = vunpack.c.l.b16 %v1271
  %v1313 = vunpack.c.h.b16 %v1271
  %v1314 = vunpack.c.l.b16 %v1272
  %v1315 = vunpack.c.h.b16 %v1272
  %v1316 = vunpack.c.l.b16 %v1273
  %v1317 = vunpack.c.h.b16 %v1273
  %v1318 = vunpack.c.l.b16 %v1274
  %v1319 = vunpack.c.h.b16 %v1274
  %v1320 = vunpack.c.l.b16 %v1275
  %v1321 = vunpack.c.h.b16 %v1275
  %v1322 = vunpack.c.l.b16 %v1276
  %v1323 = vunpack.c.h.b16 %v1276
  %v1324 = vunpack.c.l.b16 %v1277
  %v1325 = vunpack.c.h.b16 %v1277
  %v1326 = vpack.c.b16 %v1296, %v1294
  %v1327 = vpack.c.b16 %v1297, %v1295
  %v1328 = vpack.c.b16 %v1300, %v1298
  %v1329 = vpack.c.b16 %v1301, %v1299
  %v1330 = vpack.c.b16 %v1304, %v1302
  %v1331 = vpack.c.b16 %v1305, %v1303
  %v1332 = vpack.c.b16 %v1308, %v1306
  %v1333 = vpack.c.b16 %v1309, %v1307
  %v1334 = vpack.c.b16 %v1312, %v1310
  %v1335 = vpack.c.b16 %v1313, %v1311
  %v1336 = vpack.c.b16 %v1316, %v1314
  %v1337 = vpack.c.b16 %v1317, %v1315
  %v1338 = vpack.c.b16 %v1320, %v1318
  %v1339 = vpack.c.b16 %v1321, %v1319
  %v1340 = vpack.c.b16 %v1324, %v1322
  %v1341 = vpack.c.b16 %v1325, %v1323
  %1358 = vmatprep.subr.bf16.mxu0 %v1341
  %1359 = vmatpush1.bf16.msra.mxu0 %v1340
  %1360 = vmatprep.subr.bf16.mxu0 %v1339
  %1361 = vmatpush1.bf16.msra.mxu0 %v1338
  %1362 = vmatprep.subr.bf16.mxu0 %v1337
  %1363 = vmatpush1.bf16.msra.mxu0 %v1336
  %1364 = vmatprep.subr.bf16.mxu0 %v1335
  %1365 = vmatpush1.bf16.msra.mxu0 %v1334
  %1366 = vmatprep.subr.bf16.mxu0 %v1333
  %1367 = vmatpush1.bf16.msra.mxu0 %v1332
  %1368 = vmatprep.subr.bf16.mxu0 %v1331
  %1369 = vmatpush1.bf16.msra.mxu0 %v1330
  %1370 = vmatprep.subr.bf16.mxu0 %v1329
  %1371 = vmatpush1.bf16.msra.mxu0 %v1328
  %1372 = vmatprep.subr.bf16.mxu0 %v1327
  %1373 = vmatpush1.bf16.msra.mxu0 %v1326
  %1374 = vmatprep.subr.bf16.mxu0 0
  %1375 = vmatpush2.bf16.msra.mxu0 0
  %1376 = vmatprep.subr.bf16.mxu0 0
  %1377 = vmatpush2.bf16.msra.mxu0 0
  %1378 = vmatprep.subr.bf16.mxu0 0
  %1379 = vmatpush2.bf16.msra.mxu0 0
  %1380 = vmatprep.subr.bf16.mxu0 0
  %1381 = vmatpush2.bf16.msra.mxu0 0
  %1382 = vmatprep.subr.bf16.mxu0 0
  %1383 = vmatpush2.bf16.msra.mxu0 0
  %1384 = vmatprep.subr.bf16.mxu0 0
  %1385 = vmatpush2.bf16.msra.mxu0 0
  %1386 = vmatprep.subr.bf16.mxu0 0
  %1387 = vmatpush2.bf16.msra.mxu0 0
  %1388 = vmatprep.subr.bf16.mxu0 0
  %1389 = vmatpush2.bf16.msra.mxu0 0
  %1390 = vmatprep.mubr.bf16.mxu0 0
  %1391 = vmatmul.mubr.bf16.gmra.mxu0 %v1253
  %v1392 = vpop.f32.mrf.mxu0
  %v1393 = vadd.f32 0.0, %v1392
  %v1394 = vpop.f32.mrf.mxu0
  %v1395 = vadd.f32 0.0, %v1394
  %v1396 = vpop.f32.mrf.mxu0
  %v1397 = vadd.f32 0.0, %v1396
  %v1398 = vpop.f32.mrf.mxu0
  %v1399 = vadd.f32 0.0, %v1398
  %1400 = vmatprep.mubr.bf16.mxu0 0
  %1401 = vmatmul.mubr.bf16.gmra.mxu0 %v1254
  %v1402 = vpop.f32.mrf.mxu0
  %v1403 = vadd.f32 0.0, %v1402
  %v1404 = vpop.f32.mrf.mxu0
  %v1405 = vadd.f32 0.0, %v1404
  %v1406 = vpop.f32.mrf.mxu0
  %v1407 = vadd.f32 0.0, %v1406
  %v1408 = vpop.f32.mrf.mxu0
  %v1409 = vadd.f32 0.0, %v1408
  %1410 = vmatprep.mubr.bf16.mxu0 0
  %1411 = vmatmul.mubr.bf16.gmra.mxu0 %v1255
  %v1412 = vpop.f32.mrf.mxu0
  %v1413 = vadd.f32 0.0, %v1412
  %v1414 = vpop.f32.mrf.mxu0
  %v1415 = vadd.f32 0.0, %v1414
  %v1416 = vpop.f32.mrf.mxu0
  %v1417 = vadd.f32 0.0, %v1416
  %v1418 = vpop.f32.mrf.mxu0
  %v1419 = vadd.f32 0.0, %v1418
  %1420 = vmatprep.mubr.bf16.mxu0 0
  %1421 = vmatmul.mubr.bf16.gmra.mxu0 %v1256
  %v1422 = vpop.f32.mrf.mxu0
  %v1423 = vadd.f32 0.0, %v1422
  %v1424 = vpop.f32.mrf.mxu0
  %v1425 = vadd.f32 0.0, %v1424
  %v1426 = vpop.f32.mrf.mxu0
  %v1427 = vadd.f32 0.0, %v1426
  %v1428 = vpop.f32.mrf.mxu0
  %v1429 = vadd.f32 0.0, %v1428
  %1430 = vmatprep.mubr.bf16.mxu0 0
  %1431 = vmatmul.mubr.bf16.gmra.mxu0 %v1257
  %v1432 = vpop.f32.mrf.mxu0
  %v1433 = vadd.f32 0.0, %v1432
  %v1434 = vpop.f32.mrf.mxu0
  %v1435 = vadd.f32 0.0, %v1434
  %v1436 = vpop.f32.mrf.mxu0
  %v1437 = vadd.f32 0.0, %v1436
  %v1438 = vpop.f32.mrf.mxu0
  %v1439 = vadd.f32 0.0, %v1438
  %1440 = vmatprep.mubr.bf16.mxu0 0
  %1441 = vmatmul.mubr.bf16.gmra.mxu0 %v1258
  %v1442 = vpop.f32.mrf.mxu0
  %v1443 = vadd.f32 0.0, %v1442
  %v1444 = vpop.f32.mrf.mxu0
  %v1445 = vadd.f32 0.0, %v1444
  %v1446 = vpop.f32.mrf.mxu0
  %v1447 = vadd.f32 0.0, %v1446
  %v1448 = vpop.f32.mrf.mxu0
  %v1449 = vadd.f32 0.0, %v1448
  %1450 = vmatprep.mubr.bf16.mxu0 0
  %1451 = vmatmul.mubr.bf16.gmra.mxu0 %v1259
  %v1452 = vpop.f32.mrf.mxu0
  %v1453 = vadd.f32 0.0, %v1452
  %v1454 = vpop.f32.mrf.mxu0
  %v1455 = vadd.f32 0.0, %v1454
  %v1456 = vpop.f32.mrf.mxu0
  %v1457 = vadd.f32 0.0, %v1456
  %v1458 = vpop.f32.mrf.mxu0
  %v1459 = vadd.f32 0.0, %v1458
  %1460 = vmatprep.mubr.bf16.mxu0 0
  %1461 = vmatmul.mubr.bf16.gmra.mxu0 %v1260
  %v1462 = vpop.f32.mrf.mxu0
  %v1463 = vadd.f32 0.0, %v1462
  %v1464 = vpop.f32.mrf.mxu0
  %v1465 = vadd.f32 0.0, %v1464
  %v1466 = vpop.f32.mrf.mxu0
  %v1467 = vadd.f32 0.0, %v1466
  %v1468 = vpop.f32.mrf.mxu0
  %v1469 = vadd.f32 0.0, %v1468
  %1470 = vdwg.mxu0
  %v1471 = vadd.f32 %v1159, %v1393
  %v1472 = vadd.f32 %v1161, %v1395
  %v1473 = vadd.f32 %v1163, %v1397
  %v1474 = vadd.f32 %v1165, %v1399
  %v1475 = vadd.f32 %v1169, %v1403
  %v1476 = vadd.f32 %v1171, %v1405
  %v1477 = vadd.f32 %v1173, %v1407
  %v1478 = vadd.f32 %v1175, %v1409
  %v1479 = vadd.f32 %v1179, %v1413
  %v1480 = vadd.f32 %v1181, %v1415
  %v1481 = vadd.f32 %v1183, %v1417
  %v1482 = vadd.f32 %v1185, %v1419
  %v1483 = vadd.f32 %v1189, %v1423
  %v1484 = vadd.f32 %v1191, %v1425
  %v1485 = vadd.f32 %v1193, %v1427
  %v1486 = vadd.f32 %v1195, %v1429
  %v1487 = vadd.f32 %v1199, %v1433
  %v1488 = vadd.f32 %v1201, %v1435
  %v1489 = vadd.f32 %v1203, %v1437
  %v1490 = vadd.f32 %v1205, %v1439
  %v1491 = vadd.f32 %v1209, %v1443
  %v1492 = vadd.f32 %v1211, %v1445
  %v1493 = vadd.f32 %v1213, %v1447
  %v1494 = vadd.f32 %v1215, %v1449
  %v1495 = vadd.f32 %v1219, %v1453
  %v1496 = vadd.f32 %v1221, %v1455
  %v1497 = vadd.f32 %v1223, %v1457
  %v1498 = vadd.f32 %v1225, %v1459
  %v1499 = vadd.f32 %v1229, %v1463
  %v1500 = vadd.f32 %v1231, %v1465
  %v1501 = vadd.f32 %v1233, %v1467
  %v1502 = vadd.f32 %v1235, %v1469
  %v1503 = vld [vmem:[#allocation2 + $0x3] sm:$0xff]
  %v1504 = vld [vmem:[#allocation2 + $0xb] sm:$0xff]
  %v1505 = vld [vmem:[#allocation2 + $0x13] sm:$0xff]
  %v1506 = vld [vmem:[#allocation2 + $0x1b] sm:$0xff]
  %v1507 = vld [vmem:[#allocation2 + $0x23] sm:$0xff]
  %v1508 = vld [vmem:[#allocation2 + $0x2b] sm:$0xff]
  %v1509 = vld [vmem:[#allocation2 + $0x33] sm:$0xff]
  %v1510 = vld [vmem:[#allocation2 + $0x3b] sm:$0xff]
  %v1511 = vld [vmem:[#allocation2 + $0x43] sm:$0xff]
  %v1512 = vld [vmem:[#allocation2 + $0x4b] sm:$0xff]
  %v1513 = vld [vmem:[#allocation2 + $0x53] sm:$0xff]
  %v1514 = vld [vmem:[#allocation2 + $0x5b] sm:$0xff]
  %v1515 = vld [vmem:[#allocation2 + $0x63] sm:$0xff]
  %v1516 = vld [vmem:[#allocation2 + $0x6b] sm:$0xff]
  %v1517 = vld [vmem:[#allocation2 + $0x73] sm:$0xff]
  %v1518 = vld [vmem:[#allocation2 + $0x7b] sm:$0xff]
  %v1519 = vpack.c.bf16 %v1504, %v1503
  %v1520 = vpack.c.bf16 %v1506, %v1505
  %v1521 = vpack.c.bf16 %v1508, %v1507
  %v1522 = vpack.c.bf16 %v1510, %v1509
  %v1523 = vpack.c.bf16 %v1512, %v1511
  %v1524 = vpack.c.bf16 %v1514, %v1513
  %v1525 = vpack.c.bf16 %v1516, %v1515
  %v1526 = vpack.c.bf16 %v1518, %v1517
  %s1527 = scalar_lea.vmem %s3, 384
  %v1528 = vld [vmem:[%s1527] sm:$0xff]
  %v1529 = vld [vmem:[%s1527 + $0x8] sm:$0xff]
  %v1530 = vld [vmem:[%s1527 + $0x10] sm:$0xff]
  %v1531 = vld [vmem:[%s1527 + $0x18] sm:$0xff]
  %v1532 = vld [vmem:[%s1527 + $0x20] sm:$0xff]
  %v1533 = vld [vmem:[%s1527 + $0x28] sm:$0xff]
  %v1534 = vld [vmem:[%s1527 + $0x30] sm:$0xff]
  %v1535 = vld [vmem:[%s1527 + $0x38] sm:$0xff]
  %v1536 = vld [vmem:[%s1527 + $0x40] sm:$0xff]
  %v1537 = vld [vmem:[%s1527 + $0x48] sm:$0xff]
  %v1538 = vld [vmem:[%s1527 + $0x50] sm:$0xff]
  %v1539 = vld [vmem:[%s1527 + $0x58] sm:$0xff]
  %v1540 = vld [vmem:[%s1527 + $0x60] sm:$0xff]
  %v1541 = vld [vmem:[%s1527 + $0x68] sm:$0xff]
  %v1542 = vld [vmem:[%s1527 + $0x70] sm:$0xff]
  %v1543 = vld [vmem:[%s1527 + $0x78] sm:$0xff]
  %v1560 = vunpack.c.l.b16 %v1528
  %v1561 = vunpack.c.h.b16 %v1528
  %v1562 = vunpack.c.l.b16 %v1529
  %v1563 = vunpack.c.h.b16 %v1529
  %v1564 = vunpack.c.l.b16 %v1530
  %v1565 = vunpack.c.h.b16 %v1530
  %v1566 = vunpack.c.l.b16 %v1531
  %v1567 = vunpack.c.h.b16 %v1531
  %v1568 = vunpack.c.l.b16 %v1532
  %v1569 = vunpack.c.h.b16 %v1532
  %v1570 = vunpack.c.l.b16 %v1533
  %v1571 = vunpack.c.h.b16 %v1533
  %v1572 = vunpack.c.l.b16 %v1534
  %v1573 = vunpack.c.h.b16 %v1534
  %v1574 = vunpack.c.l.b16 %v1535
  %v1575 = vunpack.c.h.b16 %v1535
  %v1576 = vunpack.c.l.b16 %v1536
  %v1577 = vunpack.c.h.b16 %v1536
  %v1578 = vunpack.c.l.b16 %v1537
  %v1579 = vunpack.c.h.b16 %v1537
  %v1580 = vunpack.c.l.b16 %v1538
  %v1581 = vunpack.c.h.b16 %v1538
  %v1582 = vunpack.c.l.b16 %v1539
  %v1583 = vunpack.c.h.b16 %v1539
  %v1584 = vunpack.c.l.b16 %v1540
  %v1585 = vunpack.c.h.b16 %v1540
  %v1586 = vunpack.c.l.b16 %v1541
  %v1587 = vunpack.c.h.b16 %v1541
  %v1588 = vunpack.c.l.b16 %v1542
  %v1589 = vunpack.c.h.b16 %v1542
  %v1590 = vunpack.c.l.b16 %v1543
  %v1591 = vunpack.c.h.b16 %v1543
  %v1592 = vpack.c.b16 %v1562, %v1560
  %v1593 = vpack.c.b16 %v1563, %v1561
  %v1594 = vpack.c.b16 %v1566, %v1564
  %v1595 = vpack.c.b16 %v1567, %v1565
  %v1596 = vpack.c.b16 %v1570, %v1568
  %v1597 = vpack.c.b16 %v1571, %v1569
  %v1598 = vpack.c.b16 %v1574, %v1572
  %v1599 = vpack.c.b16 %v1575, %v1573
  %v1600 = vpack.c.b16 %v1578, %v1576
  %v1601 = vpack.c.b16 %v1579, %v1577
  %v1602 = vpack.c.b16 %v1582, %v1580
  %v1603 = vpack.c.b16 %v1583, %v1581
  %v1604 = vpack.c.b16 %v1586, %v1584
  %v1605 = vpack.c.b16 %v1587, %v1585
  %v1606 = vpack.c.b16 %v1590, %v1588
  %v1607 = vpack.c.b16 %v1591, %v1589
  %1624 = vmatprep.subr.bf16.mxu0 %v1607
  %1625 = vmatpush1.bf16.msra.mxu0 %v1606
  %1626 = vmatprep.subr.bf16.mxu0 %v1605
  %1627 = vmatpush1.bf16.msra.mxu0 %v1604
  %1628 = vmatprep.subr.bf16.mxu0 %v1603
  %1629 = vmatpush1.bf16.msra.mxu0 %v1602
  %1630 = vmatprep.subr.bf16.mxu0 %v1601
  %1631 = vmatpush1.bf16.msra.mxu0 %v1600
  %1632 = vmatprep.subr.bf16.mxu0 %v1599
  %1633 = vmatpush1.bf16.msra.mxu0 %v1598
  %1634 = vmatprep.subr.bf16.mxu0 %v1597
  %1635 = vmatpush1.bf16.msra.mxu0 %v1596
  %1636 = vmatprep.subr.bf16.mxu0 %v1595
  %1637 = vmatpush1.bf16.msra.mxu0 %v1594
  %1638 = vmatprep.subr.bf16.mxu0 %v1593
  %1639 = vmatpush1.bf16.msra.mxu0 %v1592
  %1640 = vmatprep.subr.bf16.mxu0 0
  %1641 = vmatpush2.bf16.msra.mxu0 0
  %1642 = vmatprep.subr.bf16.mxu0 0
  %1643 = vmatpush2.bf16.msra.mxu0 0
  %1644 = vmatprep.subr.bf16.mxu0 0
  %1645 = vmatpush2.bf16.msra.mxu0 0
  %1646 = vmatprep.subr.bf16.mxu0 0
  %1647 = vmatpush2.bf16.msra.mxu0 0
  %1648 = vmatprep.subr.bf16.mxu0 0
  %1649 = vmatpush2.bf16.msra.mxu0 0
  %1650 = vmatprep.subr.bf16.mxu0 0
  %1651 = vmatpush2.bf16.msra.mxu0 0
  %1652 = vmatprep.subr.bf16.mxu0 0
  %1653 = vmatpush2.bf16.msra.mxu0 0
  %1654 = vmatprep.subr.bf16.mxu0 0
  %1655 = vmatpush2.bf16.msra.mxu0 0
  %1656 = vmatprep.mubr.bf16.mxu0 0
  %1657 = vmatmul.mubr.bf16.gmra.mxu0 %v1519
  %v1658 = vpop.f32.mrf.mxu0
  %v1659 = vadd.f32 0.0, %v1658
  %v1660 = vpop.f32.mrf.mxu0
  %v1661 = vadd.f32 0.0, %v1660
  %v1662 = vpop.f32.mrf.mxu0
  %v1663 = vadd.f32 0.0, %v1662
  %v1664 = vpop.f32.mrf.mxu0
  %v1665 = vadd.f32 0.0, %v1664
  %1666 = vmatprep.mubr.bf16.mxu0 0
  %1667 = vmatmul.mubr.bf16.gmra.mxu0 %v1520
  %v1668 = vpop.f32.mrf.mxu0
  %v1669 = vadd.f32 0.0, %v1668
  %v1670 = vpop.f32.mrf.mxu0
  %v1671 = vadd.f32 0.0, %v1670
  %v1672 = vpop.f32.mrf.mxu0
  %v1673 = vadd.f32 0.0, %v1672
  %v1674 = vpop.f32.mrf.mxu0
  %v1675 = vadd.f32 0.0, %v1674
  %1676 = vmatprep.mubr.bf16.mxu0 0
  %1677 = vmatmul.mubr.bf16.gmra.mxu0 %v1521
  %v1678 = vpop.f32.mrf.mxu0
  %v1679 = vadd.f32 0.0, %v1678
  %v1680 = vpop.f32.mrf.mxu0
  %v1681 = vadd.f32 0.0, %v1680
  %v1682 = vpop.f32.mrf.mxu0
  %v1683 = vadd.f32 0.0, %v1682
  %v1684 = vpop.f32.mrf.mxu0
  %v1685 = vadd.f32 0.0, %v1684
  %1686 = vmatprep.mubr.bf16.mxu0 0
  %1687 = vmatmul.mubr.bf16.gmra.mxu0 %v1522
  %v1688 = vpop.f32.mrf.mxu0
  %v1689 = vadd.f32 0.0, %v1688
  %v1690 = vpop.f32.mrf.mxu0
  %v1691 = vadd.f32 0.0, %v1690
  %v1692 = vpop.f32.mrf.mxu0
  %v1693 = vadd.f32 0.0, %v1692
  %v1694 = vpop.f32.mrf.mxu0
  %v1695 = vadd.f32 0.0, %v1694
  %1696 = vmatprep.mubr.bf16.mxu0 0
  %1697 = vmatmul.mubr.bf16.gmra.mxu0 %v1523
  %v1698 = vpop.f32.mrf.mxu0
  %v1699 = vadd.f32 0.0, %v1698
  %v1700 = vpop.f32.mrf.mxu0
  %v1701 = vadd.f32 0.0, %v1700
  %v1702 = vpop.f32.mrf.mxu0
  %v1703 = vadd.f32 0.0, %v1702
  %v1704 = vpop.f32.mrf.mxu0
  %v1705 = vadd.f32 0.0, %v1704
  %1706 = vmatprep.mubr.bf16.mxu0 0
  %1707 = vmatmul.mubr.bf16.gmra.mxu0 %v1524
  %v1708 = vpop.f32.mrf.mxu0
  %v1709 = vadd.f32 0.0, %v1708
  %v1710 = vpop.f32.mrf.mxu0
  %v1711 = vadd.f32 0.0, %v1710
  %v1712 = vpop.f32.mrf.mxu0
  %v1713 = vadd.f32 0.0, %v1712
  %v1714 = vpop.f32.mrf.mxu0
  %v1715 = vadd.f32 0.0, %v1714
  %1716 = vmatprep.mubr.bf16.mxu0 0
  %1717 = vmatmul.mubr.bf16.gmra.mxu0 %v1525
  %v1718 = vpop.f32.mrf.mxu0
  %v1719 = vadd.f32 0.0, %v1718
  %v1720 = vpop.f32.mrf.mxu0
  %v1721 = vadd.f32 0.0, %v1720
  %v1722 = vpop.f32.mrf.mxu0
  %v1723 = vadd.f32 0.0, %v1722
  %v1724 = vpop.f32.mrf.mxu0
  %v1725 = vadd.f32 0.0, %v1724
  %1726 = vmatprep.mubr.bf16.mxu0 0
  %1727 = vmatmul.mubr.bf16.gmra.mxu0 %v1526
  %v1728 = vpop.f32.mrf.mxu0
  %v1729 = vadd.f32 0.0, %v1728
  %v1730 = vpop.f32.mrf.mxu0
  %v1731 = vadd.f32 0.0, %v1730
  %v1732 = vpop.f32.mrf.mxu0
  %v1733 = vadd.f32 0.0, %v1732
  %v1734 = vpop.f32.mrf.mxu0
  %v1735 = vadd.f32 0.0, %v1734
  %1736 = vdwg.mxu0
  %v1737 = vadd.f32 %v1471, %v1659
  %v1738 = vadd.f32 %v1472, %v1661
  %v1739 = vadd.f32 %v1473, %v1663
  %v1740 = vadd.f32 %v1474, %v1665
  %v1741 = vadd.f32 %v1475, %v1669
  %v1742 = vadd.f32 %v1476, %v1671
  %v1743 = vadd.f32 %v1477, %v1673
  %v1744 = vadd.f32 %v1478, %v1675
  %v1745 = vadd.f32 %v1479, %v1679
  %v1746 = vadd.f32 %v1480, %v1681
  %v1747 = vadd.f32 %v1481, %v1683
  %v1748 = vadd.f32 %v1482, %v1685
  %v1749 = vadd.f32 %v1483, %v1689
  %v1750 = vadd.f32 %v1484, %v1691
  %v1751 = vadd.f32 %v1485, %v1693
  %v1752 = vadd.f32 %v1486, %v1695
  %v1753 = vadd.f32 %v1487, %v1699
  %v1754 = vadd.f32 %v1488, %v1701
  %v1755 = vadd.f32 %v1489, %v1703
  %v1756 = vadd.f32 %v1490, %v1705
  %v1757 = vadd.f32 %v1491, %v1709
  %v1758 = vadd.f32 %v1492, %v1711
  %v1759 = vadd.f32 %v1493, %v1713
  %v1760 = vadd.f32 %v1494, %v1715
  %v1761 = vadd.f32 %v1495, %v1719
  %v1762 = vadd.f32 %v1496, %v1721
  %v1763 = vadd.f32 %v1497, %v1723
  %v1764 = vadd.f32 %v1498, %v1725
  %v1765 = vadd.f32 %v1499, %v1729
  %v1766 = vadd.f32 %v1500, %v1731
  %v1767 = vadd.f32 %v1501, %v1733
  %v1768 = vadd.f32 %v1502, %v1735
  %v1769 = vld [vmem:[#allocation2 + $0x4] sm:$0xff]
  %v1770 = vld [vmem:[#allocation2 + $0xc] sm:$0xff]
  %v1771 = vld [vmem:[#allocation2 + $0x14] sm:$0xff]
  %v1772 = vld [vmem:[#allocation2 + $0x1c] sm:$0xff]
  %v1773 = vld [vmem:[#allocation2 + $0x24] sm:$0xff]
  %v1774 = vld [vmem:[#allocation2 + $0x2c] sm:$0xff]
  %v1775 = vld [vmem:[#allocation2 + $0x34] sm:$0xff]
  %v1776 = vld [vmem:[#allocation2 + $0x3c] sm:$0xff]
  %v1777 = vld [vmem:[#allocation2 + $0x44] sm:$0xff]
  %v1778 = vld [vmem:[#allocation2 + $0x4c] sm:$0xff]
  %v1779 = vld [vmem:[#allocation2 + $0x54] sm:$0xff]
  %v1780 = vld [vmem:[#allocation2 + $0x5c] sm:$0xff]
  %v1781 = vld [vmem:[#allocation2 + $0x64] sm:$0xff]
  %v1782 = vld [vmem:[#allocation2 + $0x6c] sm:$0xff]
  %v1783 = vld [vmem:[#allocation2 + $0x74] sm:$0xff]
  %v1784 = vld [vmem:[#allocation2 + $0x7c] sm:$0xff]
  %v1785 = vpack.c.bf16 %v1770, %v1769
  %v1786 = vpack.c.bf16 %v1772, %v1771
  %v1787 = vpack.c.bf16 %v1774, %v1773
  %v1788 = vpack.c.bf16 %v1776, %v1775
  %v1789 = vpack.c.bf16 %v1778, %v1777
  %v1790 = vpack.c.bf16 %v1780, %v1779
  %v1791 = vpack.c.bf16 %v1782, %v1781
  %v1792 = vpack.c.bf16 %v1784, %v1783
  %s1793 = scalar_lea.vmem %s3, 512
  %v1794 = vld [vmem:[%s1793] sm:$0xff]
  %v1795 = vld [vmem:[%s1793 + $0x8] sm:$0xff]
  %v1796 = vld [vmem:[%s1793 + $0x10] sm:$0xff]
  %v1797 = vld [vmem:[%s1793 + $0x18] sm:$0xff]
  %v1798 = vld [vmem:[%s1793 + $0x20] sm:$0xff]
  %v1799 = vld [vmem:[%s1793 + $0x28] sm:$0xff]
  %v1800 = vld [vmem:[%s1793 + $0x30] sm:$0xff]
  %v1801 = vld [vmem:[%s1793 + $0x38] sm:$0xff]
  %v1802 = vld [vmem:[%s1793 + $0x40] sm:$0xff]
  %v1803 = vld [vmem:[%s1793 + $0x48] sm:$0xff]
  %v1804 = vld [vmem:[%s1793 + $0x50] sm:$0xff]
  %v1805 = vld [vmem:[%s1793 + $0x58] sm:$0xff]
  %v1806 = vld [vmem:[%s1793 + $0x60] sm:$0xff]
  %v1807 = vld [vmem:[%s1793 + $0x68] sm:$0xff]
  %v1808 = vld [vmem:[%s1793 + $0x70] sm:$0xff]
  %v1809 = vld [vmem:[%s1793 + $0x78] sm:$0xff]
  %v1826 = vunpack.c.l.b16 %v1794
  %v1827 = vunpack.c.h.b16 %v1794
  %v1828 = vunpack.c.l.b16 %v1795
  %v1829 = vunpack.c.h.b16 %v1795
  %v1830 = vunpack.c.l.b16 %v1796
  %v1831 = vunpack.c.h.b16 %v1796
  %v1832 = vunpack.c.l.b16 %v1797
  %v1833 = vunpack.c.h.b16 %v1797
  %v1834 = vunpack.c.l.b16 %v1798
  %v1835 = vunpack.c.h.b16 %v1798
  %v1836 = vunpack.c.l.b16 %v1799
  %v1837 = vunpack.c.h.b16 %v1799
  %v1838 = vunpack.c.l.b16 %v1800
  %v1839 = vunpack.c.h.b16 %v1800
  %v1840 = vunpack.c.l.b16 %v1801
  %v1841 = vunpack.c.h.b16 %v1801
  %v1842 = vunpack.c.l.b16 %v1802
  %v1843 = vunpack.c.h.b16 %v1802
  %v1844 = vunpack.c.l.b16 %v1803
  %v1845 = vunpack.c.h.b16 %v1803
  %v1846 = vunpack.c.l.b16 %v1804
  %v1847 = vunpack.c.h.b16 %v1804
  %v1848 = vunpack.c.l.b16 %v1805
  %v1849 = vunpack.c.h.b16 %v1805
  %v1850 = vunpack.c.l.b16 %v1806
  %v1851 = vunpack.c.h.b16 %v1806
  %v1852 = vunpack.c.l.b16 %v1807
  %v1853 = vunpack.c.h.b16 %v1807
  %v1854 = vunpack.c.l.b16 %v1808
  %v1855 = vunpack.c.h.b16 %v1808
  %v1856 = vunpack.c.l.b16 %v1809
  %v1857 = vunpack.c.h.b16 %v1809
  %v1858 = vpack.c.b16 %v1828, %v1826
  %v1859 = vpack.c.b16 %v1829, %v1827
  %v1860 = vpack.c.b16 %v1832, %v1830
  %v1861 = vpack.c.b16 %v1833, %v1831
  %v1862 = vpack.c.b16 %v1836, %v1834
  %v1863 = vpack.c.b16 %v1837, %v1835
  %v1864 = vpack.c.b16 %v1840, %v1838
  %v1865 = vpack.c.b16 %v1841, %v1839
  %v1866 = vpack.c.b16 %v1844, %v1842
  %v1867 = vpack.c.b16 %v1845, %v1843
  %v1868 = vpack.c.b16 %v1848, %v1846
  %v1869 = vpack.c.b16 %v1849, %v1847
  %v1870 = vpack.c.b16 %v1852, %v1850
  %v1871 = vpack.c.b16 %v1853, %v1851
  %v1872 = vpack.c.b16 %v1856, %v1854
  %v1873 = vpack.c.b16 %v1857, %v1855
  %1890 = vmatprep.subr.bf16.mxu0 %v1873
  %1891 = vmatpush1.bf16.msra.mxu0 %v1872
  %1892 = vmatprep.subr.bf16.mxu0 %v1871
  %1893 = vmatpush1.bf16.msra.mxu0 %v1870
  %1894 = vmatprep.subr.bf16.mxu0 %v1869
  %1895 = vmatpush1.bf16.msra.mxu0 %v1868
  %1896 = vmatprep.subr.bf16.mxu0 %v1867
  %1897 = vmatpush1.bf16.msra.mxu0 %v1866
  %1898 = vmatprep.subr.bf16.mxu0 %v1865
  %1899 = vmatpush1.bf16.msra.mxu0 %v1864
  %1900 = vmatprep.subr.bf16.mxu0 %v1863
  %1901 = vmatpush1.bf16.msra.mxu0 %v1862
  %1902 = vmatprep.subr.bf16.mxu0 %v1861
  %1903 = vmatpush1.bf16.msra.mxu0 %v1860
  %1904 = vmatprep.subr.bf16.mxu0 %v1859
  %1905 = vmatpush1.bf16.msra.mxu0 %v1858
  %1906 = vmatprep.subr.bf16.mxu0 0
  %1907 = vmatpush2.bf16.msra.mxu0 0
  %1908 = vmatprep.subr.bf16.mxu0 0
  %1909 = vmatpush2.bf16.msra.mxu0 0
  %1910 = vmatprep.subr.bf16.mxu0 0
  %1911 = vmatpush2.bf16.msra.mxu0 0
  %1912 = vmatprep.subr.bf16.mxu0 0
  %1913 = vmatpush2.bf16.msra.mxu0 0
  %1914 = vmatprep.subr.bf16.mxu0 0
  %1915 = vmatpush2.bf16.msra.mxu0 0
  %1916 = vmatprep.subr.bf16.mxu0 0
  %1917 = vmatpush2.bf16.msra.mxu0 0
  %1918 = vmatprep.subr.bf16.mxu0 0
  %1919 = vmatpush2.bf16.msra.mxu0 0
  %1920 = vmatprep.subr.bf16.mxu0 0
  %1921 = vmatpush2.bf16.msra.mxu0 0
  %1922 = vmatprep.mubr.bf16.mxu0 0
  %1923 = vmatmul.mubr.bf16.gmra.mxu0 %v1785
  %v1924 = vpop.f32.mrf.mxu0
  %v1925 = vadd.f32 0.0, %v1924
  %v1926 = vpop.f32.mrf.mxu0
  %v1927 = vadd.f32 0.0, %v1926
  %v1928 = vpop.f32.mrf.mxu0
  %v1929 = vadd.f32 0.0, %v1928
  %v1930 = vpop.f32.mrf.mxu0
  %v1931 = vadd.f32 0.0, %v1930
  %1932 = vmatprep.mubr.bf16.mxu0 0
  %1933 = vmatmul.mubr.bf16.gmra.mxu0 %v1786
  %v1934 = vpop.f32.mrf.mxu0
  %v1935 = vadd.f32 0.0, %v1934
  %v1936 = vpop.f32.mrf.mxu0
  %v1937 = vadd.f32 0.0, %v1936
  %v1938 = vpop.f32.mrf.mxu0
  %v1939 = vadd.f32 0.0, %v1938
  %v1940 = vpop.f32.mrf.mxu0
  %v1941 = vadd.f32 0.0, %v1940
  %1942 = vmatprep.mubr.bf16.mxu0 0
  %1943 = vmatmul.mubr.bf16.gmra.mxu0 %v1787
  %v1944 = vpop.f32.mrf.mxu0
  %v1945 = vadd.f32 0.0, %v1944
  %v1946 = vpop.f32.mrf.mxu0
  %v1947 = vadd.f32 0.0, %v1946
  %v1948 = vpop.f32.mrf.mxu0
  %v1949 = vadd.f32 0.0, %v1948
  %v1950 = vpop.f32.mrf.mxu0
  %v1951 = vadd.f32 0.0, %v1950
  %1952 = vmatprep.mubr.bf16.mxu0 0
  %1953 = vmatmul.mubr.bf16.gmra.mxu0 %v1788
  %v1954 = vpop.f32.mrf.mxu0
  %v1955 = vadd.f32 0.0, %v1954
  %v1956 = vpop.f32.mrf.mxu0
  %v1957 = vadd.f32 0.0, %v1956
  %v1958 = vpop.f32.mrf.mxu0
  %v1959 = vadd.f32 0.0, %v1958
  %v1960 = vpop.f32.mrf.mxu0
  %v1961 = vadd.f32 0.0, %v1960
  %1962 = vmatprep.mubr.bf16.mxu0 0
  %1963 = vmatmul.mubr.bf16.gmra.mxu0 %v1789
  %v1964 = vpop.f32.mrf.mxu0
  %v1965 = vadd.f32 0.0, %v1964
  %v1966 = vpop.f32.mrf.mxu0
  %v1967 = vadd.f32 0.0, %v1966
  %v1968 = vpop.f32.mrf.mxu0
  %v1969 = vadd.f32 0.0, %v1968
  %v1970 = vpop.f32.mrf.mxu0
  %v1971 = vadd.f32 0.0, %v1970
  %1972 = vmatprep.mubr.bf16.mxu0 0
  %1973 = vmatmul.mubr.bf16.gmra.mxu0 %v1790
  %v1974 = vpop.f32.mrf.mxu0
  %v1975 = vadd.f32 0.0, %v1974
  %v1976 = vpop.f32.mrf.mxu0
  %v1977 = vadd.f32 0.0, %v1976
  %v1978 = vpop.f32.mrf.mxu0
  %v1979 = vadd.f32 0.0, %v1978
  %v1980 = vpop.f32.mrf.mxu0
  %v1981 = vadd.f32 0.0, %v1980
  %1982 = vmatprep.mubr.bf16.mxu0 0
  %1983 = vmatmul.mubr.bf16.gmra.mxu0 %v1791
  %v1984 = vpop.f32.mrf.mxu0
  %v1985 = vadd.f32 0.0, %v1984
  %v1986 = vpop.f32.mrf.mxu0
  %v1987 = vadd.f32 0.0, %v1986
  %v1988 = vpop.f32.mrf.mxu0
  %v1989 = vadd.f32 0.0, %v1988
  %v1990 = vpop.f32.mrf.mxu0
  %v1991 = vadd.f32 0.0, %v1990
  %1992 = vmatprep.mubr.bf16.mxu0 0
  %1993 = vmatmul.mubr.bf16.gmra.mxu0 %v1792
  %v1994 = vpop.f32.mrf.mxu0
  %v1995 = vadd.f32 0.0, %v1994
  %v1996 = vpop.f32.mrf.mxu0
  %v1997 = vadd.f32 0.0, %v1996
  %v1998 = vpop.f32.mrf.mxu0
  %v1999 = vadd.f32 0.0, %v1998
  %v2000 = vpop.f32.mrf.mxu0
  %v2001 = vadd.f32 0.0, %v2000
  %2002 = vdwg.mxu0
  %v2003 = vadd.f32 %v1737, %v1925
  %v2004 = vadd.f32 %v1738, %v1927
  %v2005 = vadd.f32 %v1739, %v1929
  %v2006 = vadd.f32 %v1740, %v1931
  %v2007 = vadd.f32 %v1741, %v1935
  %v2008 = vadd.f32 %v1742, %v1937
  %v2009 = vadd.f32 %v1743, %v1939
  %v2010 = vadd.f32 %v1744, %v1941
  %v2011 = vadd.f32 %v1745, %v1945
  %v2012 = vadd.f32 %v1746, %v1947
  %v2013 = vadd.f32 %v1747, %v1949
  %v2014 = vadd.f32 %v1748, %v1951
  %v2015 = vadd.f32 %v1749, %v1955
  %v2016 = vadd.f32 %v1750, %v1957
  %v2017 = vadd.f32 %v1751, %v1959
  %v2018 = vadd.f32 %v1752, %v1961
  %v2019 = vadd.f32 %v1753, %v1965
  %v2020 = vadd.f32 %v1754, %v1967
  %v2021 = vadd.f32 %v1755, %v1969
  %v2022 = vadd.f32 %v1756, %v1971
  %v2023 = vadd.f32 %v1757, %v1975
  %v2024 = vadd.f32 %v1758, %v1977
  %v2025 = vadd.f32 %v1759, %v1979
  %v2026 = vadd.f32 %v1760, %v1981
  %v2027 = vadd.f32 %v1761, %v1985
  %v2028 = vadd.f32 %v1762, %v1987
  %v2029 = vadd.f32 %v1763, %v1989
  %v2030 = vadd.f32 %v1764, %v1991
  %v2031 = vadd.f32 %v1765, %v1995
  %v2032 = vadd.f32 %v1766, %v1997
  %v2033 = vadd.f32 %v1767, %v1999
  %v2034 = vadd.f32 %v1768, %v2001
  %v2035 = vmax.f32 %v2003, %v2004
  %v2036 = vmax.f32 %v2005, %v2006
  %v2037 = vmax.f32 %v2007, %v2008
  %v2038 = vmax.f32 %v2009, %v2010
  %v2039 = vmax.f32 %v2011, %v2012
  %v2040 = vmax.f32 %v2013, %v2014
  %v2041 = vmax.f32 %v2015, %v2016
  %v2042 = vmax.f32 %v2017, %v2018
  %v2043 = vmax.f32 %v2019, %v2020
  %v2044 = vmax.f32 %v2021, %v2022
  %v2045 = vmax.f32 %v2023, %v2024
  %v2046 = vmax.f32 %v2025, %v2026
  %v2047 = vmax.f32 %v2027, %v2028
  %v2048 = vmax.f32 %v2029, %v2030
  %v2049 = vmax.f32 %v2031, %v2032
  %v2050 = vmax.f32 %v2033, %v2034
  %2051 = vst [vmem:[#allocation3] sm:$0xff] %v2035
  %2052 = vst [vmem:[#allocation3 + $0x8] sm:$0xff] %v2036
  %2053 = vst [vmem:[#allocation3 + $0x10] sm:$0xff] %v2037
  %2054 = vst [vmem:[#allocation3 + $0x18] sm:$0xff] %v2038
  %2055 = vst [vmem:[#allocation3 + $0x20] sm:$0xff] %v2039
  %2056 = vst [vmem:[#allocation3 + $0x28] sm:$0xff] %v2040
  %2057 = vst [vmem:[#allocation3 + $0x30] sm:$0xff] %v2041
  %2058 = vst [vmem:[#allocation3 + $0x38] sm:$0xff] %v2042
  %2059 = vst [vmem:[#allocation3 + $0x40] sm:$0xff] %v2043
  %2060 = vst [vmem:[#allocation3 + $0x48] sm:$0xff] %v2044
  %2061 = vst [vmem:[#allocation3 + $0x50] sm:$0xff] %v2045
  %2062 = vst [vmem:[#allocation3 + $0x58] sm:$0xff] %v2046
  %2063 = vst [vmem:[#allocation3 + $0x60] sm:$0xff] %v2047
  %2064 = vst [vmem:[#allocation3 + $0x68] sm:$0xff] %v2048
  %2065 = vst [vmem:[#allocation3 + $0x70] sm:$0xff] %v2049
  %2066 = vst [vmem:[#allocation3 + $0x78] sm:$0xff] %v2050
  %v2067 = vld [vmem:[#allocation3] ss:$16 sm:$0x3]
  %v2068 = vld [vmem:[#allocation3] ss:$16 sm:$0xc]
  %v2069 = vor.u32 %v2067, %v2068
  %v2070 = vld [vmem:[#allocation3] ss:$16 sm:$0x30]
  %v2071 = vor.u32 %v2069, %v2070
  %v2072 = vld [vmem:[#allocation3] ss:$16 sm:$0xc0]
  %v2073 = vor.u32 %v2071, %v2072
  %s2074 = scalar_lea.vmem [#allocation3], 1
  %v2075 = vld [vmem:[%s2074] ss:$16 sm:$0x3]
  %v2076 = vld [vmem:[%s2074] ss:$16 sm:$0xc]
  %v2077 = vor.u32 %v2075, %v2076
  %v2078 = vld [vmem:[%s2074] ss:$16 sm:$0x30]
  %v2079 = vor.u32 %v2077, %v2078
  %v2080 = vld [vmem:[%s2074] ss:$16 sm:$0xc0]
  %v2081 = vor.u32 %v2079, %v2080
  %v2082 = vmax.f32 %v2073, %v2081
  %v2083 = vld [vmem:[%s4] sm:$0x1]
  %v2085 = vlaneseq
  %v2086 = vshrl.u32 %v2085, 7
  %v2087 = vsub.s32 0, %v2086
  %v2088 = vrot.slane %v2083, %v2087
  %v2090 = vadd.f32 %v2082, %v2088
  %v2091 = vmax.f32 %v2090, 0.0
  %v2092 = vpack.c.bf16 %v2091, %v2091
  %v2093 = vld [vmem:[%s5] sm:$0xf]
  %v2094 = vld [vmem:[%s5 + $0x4] sm:$0xf]
  %v2095 = vld [vmem:[%s5 + $0x8] sm:$0xf]
  %v2096 = vld [vmem:[%s5 + $0xc] sm:$0xf]
  %v2097 = vld [vmem:[%s5 + $0x10] sm:$0xf]
  %v2098 = vld [vmem:[%s5 + $0x14] sm:$0xf]
  %v2099 = vld [vmem:[%s5 + $0x18] sm:$0xf]
  %v2100 = vld [vmem:[%s5 + $0x1c] sm:$0xf]
  %v2101 = vld [vmem:[%s5 + $0x20] sm:$0xf]
  %v2102 = vld [vmem:[%s5 + $0x24] sm:$0xf]
  %v2103 = vld [vmem:[%s5 + $0x28] sm:$0xf]
  %v2104 = vld [vmem:[%s5 + $0x2c] sm:$0xf]
  %v2105 = vld [vmem:[%s5 + $0x30] sm:$0xf]
  %v2106 = vld [vmem:[%s5 + $0x34] sm:$0xf]
  %v2107 = vld [vmem:[%s5 + $0x38] sm:$0xf]
  %v2108 = vld [vmem:[%s5 + $0x3c] sm:$0xf]
  %s2109 = scalar_lea.vmem [#allocation3], 2
  %v2110 = vld [vmem:[%s2109] ss:$16 sm:$0x3]
  %v2111 = vld [vmem:[%s2109] ss:$16 sm:$0xc]
  %v2112 = vor.u32 %v2110, %v2111
  %v2113 = vld [vmem:[%s2109] ss:$16 sm:$0x30]
  %v2114 = vor.u32 %v2112, %v2113
  %v2115 = vld [vmem:[%s2109] ss:$16 sm:$0xc0]
  %v2116 = vor.u32 %v2114, %v2115
  %s2117 = scalar_lea.vmem [#allocation3], 3
  %v2118 = vld [vmem:[%s2117] ss:$16 sm:$0x3]
  %v2119 = vld [vmem:[%s2117] ss:$16 sm:$0xc]
  %v2120 = vor.u32 %v2118, %v2119
  %v2121 = vld [vmem:[%s2117] ss:$16 sm:$0x30]
  %v2122 = vor.u32 %v2120, %v2121
  %v2123 = vld [vmem:[%s2117] ss:$16 sm:$0xc0]
  %v2124 = vor.u32 %v2122, %v2123
  %v2125 = vmax.f32 %v2116, %v2124
  %v2126 = vadd.f32 %v2125, %v2088
  %v2127 = vmax.f32 %v2126, 0.0
  %v2128 = vpack.c.bf16 %v2127, %v2127
  %s2129 = scalar_lea.vmem %s5, 64
  %v2130 = vld [vmem:[%s2129] sm:$0xf]
  %v2131 = vld [vmem:[%s2129 + $0x4] sm:$0xf]
  %v2132 = vld [vmem:[%s2129 + $0x8] sm:$0xf]
  %v2133 = vld [vmem:[%s2129 + $0xc] sm:$0xf]
  %v2134 = vld [vmem:[%s2129 + $0x10] sm:$0xf]
  %v2135 = vld [vmem:[%s2129 + $0x14] sm:$0xf]
  %v2136 = vld [vmem:[%s2129 + $0x18] sm:$0xf]
  %v2137 = vld [vmem:[%s2129 + $0x1c] sm:$0xf]
  %v2138 = vld [vmem:[%s2129 + $0x20] sm:$0xf]
  %v2139 = vld [vmem:[%s2129 + $0x24] sm:$0xf]
  %v2140 = vld [vmem:[%s2129 + $0x28] sm:$0xf]
  %v2141 = vld [vmem:[%s2129 + $0x2c] sm:$0xf]
  %v2142 = vld [vmem:[%s2129 + $0x30] sm:$0xf]
  %v2143 = vld [vmem:[%s2129 + $0x34] sm:$0xf]
  %v2144 = vld [vmem:[%s2129 + $0x38] sm:$0xf]
  %v2145 = vld [vmem:[%s2129 + $0x3c] sm:$0xf]
  %v2162 = vunpack.c.l.b16 %v2130
  %v2163 = vunpack.c.l.b16 %v2131
  %v2164 = vunpack.c.l.b16 %v2132
  %v2165 = vunpack.c.l.b16 %v2133
  %v2166 = vunpack.c.l.b16 %v2134
  %v2167 = vunpack.c.l.b16 %v2135
  %v2168 = vunpack.c.l.b16 %v2136
  %v2169 = vunpack.c.l.b16 %v2137
  %v2170 = vunpack.c.l.b16 %v2138
  %v2171 = vunpack.c.l.b16 %v2139
  %v2172 = vunpack.c.l.b16 %v2140
  %v2173 = vunpack.c.l.b16 %v2141
  %v2174 = vunpack.c.l.b16 %v2142
  %v2175 = vunpack.c.l.b16 %v2143
  %v2176 = vunpack.c.l.b16 %v2144
  %v2177 = vunpack.c.l.b16 %v2145
  %v2178 = vpack.c.b16 %v2163, %v2162
  %v2179 = vpack.c.b16 %v2165, %v2164
  %v2180 = vpack.c.b16 %v2167, %v2166
  %v2181 = vpack.c.b16 %v2169, %v2168
  %v2182 = vpack.c.b16 %v2171, %v2170
  %v2183 = vpack.c.b16 %v2173, %v2172
  %v2184 = vpack.c.b16 %v2175, %v2174
  %v2185 = vpack.c.b16 %v2177, %v2176
  %2194 = vmatprep.subr.bf16.mxu0 0
  %2195 = vmatpush1.bf16.msra.mxu0 %v2185
  %2196 = vmatprep.subr.bf16.mxu0 0
  %2197 = vmatpush1.bf16.msra.mxu0 %v2184
  %2198 = vmatprep.subr.bf16.mxu0 0
  %2199 = vmatpush1.bf16.msra.mxu0 %v2183
  %2200 = vmatprep.subr.bf16.mxu0 0
  %2201 = vmatpush1.bf16.msra.mxu0 %v2182
  %2202 = vmatprep.subr.bf16.mxu0 0
  %2203 = vmatpush1.bf16.msra.mxu0 %v2181
  %2204 = vmatprep.subr.bf16.mxu0 0
  %2205 = vmatpush1.bf16.msra.mxu0 %v2180
  %2206 = vmatprep.subr.bf16.mxu0 0
  %2207 = vmatpush1.bf16.msra.mxu0 %v2179
  %2208 = vmatprep.subr.bf16.mxu0 0
  %2209 = vmatpush1.bf16.msra.mxu0 %v2178
  %2210 = vmatprep.subr.bf16.mxu0 0
  %2211 = vmatpush2.bf16.msra.mxu0 0
  %2212 = vmatprep.subr.bf16.mxu0 0
  %2213 = vmatpush2.bf16.msra.mxu0 0
  %2214 = vmatprep.subr.bf16.mxu0 0
  %2215 = vmatpush2.bf16.msra.mxu0 0
  %2216 = vmatprep.subr.bf16.mxu0 0
  %2217 = vmatpush2.bf16.msra.mxu0 0
  %2218 = vmatprep.subr.bf16.mxu0 0
  %2219 = vmatpush2.bf16.msra.mxu0 0
  %2220 = vmatprep.subr.bf16.mxu0 0
  %2221 = vmatpush2.bf16.msra.mxu0 0
  %2222 = vmatprep.subr.bf16.mxu0 0
  %2223 = vmatpush2.bf16.msra.mxu0 0
  %2224 = vmatprep.subr.bf16.mxu0 0
  %2225 = vmatpush2.bf16.msra.mxu0 0
  %2226 = vmatprep.mubr.bf16.mxu0 0
  %2227 = vmatmul.mubr.bf16.gmra.mxu0 %v2128
  %v2228 = vpop.f32.mrf.mxu0
  %v2229 = vadd.f32 0.0, %v2228
  %v2230 = vpop.f32.mrf.mxu0
  %v2231 = vpop.f32.mrf.mxu0
  %v2232 = vpop.f32.mrf.mxu0
  %2233 = vdwg.mxu0
  %v2250 = vunpack.c.l.b16 %v2093
  %v2251 = vunpack.c.l.b16 %v2094
  %v2252 = vunpack.c.l.b16 %v2095
  %v2253 = vunpack.c.l.b16 %v2096
  %v2254 = vunpack.c.l.b16 %v2097
  %v2255 = vunpack.c.l.b16 %v2098
  %v2256 = vunpack.c.l.b16 %v2099
  %v2257 = vunpack.c.l.b16 %v2100
  %v2258 = vunpack.c.l.b16 %v2101
  %v2259 = vunpack.c.l.b16 %v2102
  %v2260 = vunpack.c.l.b16 %v2103
  %v2261 = vunpack.c.l.b16 %v2104
  %v2262 = vunpack.c.l.b16 %v2105
  %v2263 = vunpack.c.l.b16 %v2106
  %v2264 = vunpack.c.l.b16 %v2107
  %v2265 = vunpack.c.l.b16 %v2108
  %v2266 = vpack.c.b16 %v2251, %v2250
  %v2267 = vpack.c.b16 %v2253, %v2252
  %v2268 = vpack.c.b16 %v2255, %v2254
  %v2269 = vpack.c.b16 %v2257, %v2256
  %v2270 = vpack.c.b16 %v2259, %v2258
  %v2271 = vpack.c.b16 %v2261, %v2260
  %v2272 = vpack.c.b16 %v2263, %v2262
  %v2273 = vpack.c.b16 %v2265, %v2264
  %2282 = vmatprep.subr.bf16.mxu0 0
  %2283 = vmatpush1.bf16.msra.mxu0 %v2273
  %2284 = vmatprep.subr.bf16.mxu0 0
  %2285 = vmatpush1.bf16.msra.mxu0 %v2272
  %2286 = vmatprep.subr.bf16.mxu0 0
  %2287 = vmatpush1.bf16.msra.mxu0 %v2271
  %2288 = vmatprep.subr.bf16.mxu0 0
  %2289 = vmatpush1.bf16.msra.mxu0 %v2270
  %2290 = vmatprep.subr.bf16.mxu0 0
  %2291 = vmatpush1.bf16.msra.mxu0 %v2269
  %2292 = vmatprep.subr.bf16.mxu0 0
  %2293 = vmatpush1.bf16.msra.mxu0 %v2268
  %2294 = vmatprep.subr.bf16.mxu0 0
  %2295 = vmatpush1.bf16.msra.mxu0 %v2267
  %2296 = vmatprep.subr.bf16.mxu0 0
  %2297 = vmatpush1.bf16.msra.mxu0 %v2266
  %2298 = vmatprep.subr.bf16.mxu0 0
  %2299 = vmatpush2.bf16.msra.mxu0 0
  %2300 = vmatprep.subr.bf16.mxu0 0
  %2301 = vmatpush2.bf16.msra.mxu0 0
  %2302 = vmatprep.subr.bf16.mxu0 0
  %2303 = vmatpush2.bf16.msra.mxu0 0
  %2304 = vmatprep.subr.bf16.mxu0 0
  %2305 = vmatpush2.bf16.msra.mxu0 0
  %2306 = vmatprep.subr.bf16.mxu0 0
  %2307 = vmatpush2.bf16.msra.mxu0 0
  %2308 = vmatprep.subr.bf16.mxu0 0
  %2309 = vmatpush2.bf16.msra.mxu0 0
  %2310 = vmatprep.subr.bf16.mxu0 0
  %2311 = vmatpush2.bf16.msra.mxu0 0
  %2312 = vmatprep.subr.bf16.mxu0 0
  %2313 = vmatpush2.bf16.msra.mxu0 0
  %2314 = vmatprep.mubr.bf16.mxu0 0
  %2315 = vmatmul.mubr.bf16.gmra.mxu0 %v2092
  %v2316 = vpop.f32.mrf.mxu0
  %v2317 = vadd.f32 %v2229, %v2316
  %v2318 = vpop.f32.mrf.mxu0
  %v2319 = vpop.f32.mrf.mxu0
  %v2320 = vpop.f32.mrf.mxu0
  %2321 = vdwg.mxu0
  %s2322 = scalar_lea.vmem [#allocation3], 4
  %v2323 = vld [vmem:[%s2322] ss:$16 sm:$0x3]
  %v2324 = vld [vmem:[%s2322] ss:$16 sm:$0xc]
  %v2325 = vor.u32 %v2323, %v2324
  %v2326 = vld [vmem:[%s2322] ss:$16 sm:$0x30]
  %v2327 = vor.u32 %v2325, %v2326
  %v2328 = vld [vmem:[%s2322] ss:$16 sm:$0xc0]
  %v2329 = vor.u32 %v2327, %v2328
  %s2330 = scalar_lea.vmem [#allocation3], 5
  %v2331 = vld [vmem:[%s2330] ss:$16 sm:$0x3]
  %v2332 = vld [vmem:[%s2330] ss:$16 sm:$0xc]
  %v2333 = vor.u32 %v2331, %v2332
  %v2334 = vld [vmem:[%s2330] ss:$16 sm:$0x30]
  %v2335 = vor.u32 %v2333, %v2334
  %v2336 = vld [vmem:[%s2330] ss:$16 sm:$0xc0]
  %v2337 = vor.u32 %v2335, %v2336
  %v2338 = vmax.f32 %v2329, %v2337
  %v2339 = vadd.f32 %v2338, %v2088
  %v2340 = vmax.f32 %v2339, 0.0
  %v2341 = vpack.c.bf16 %v2340, %v2340
  %s2342 = scalar_lea.vmem %s5, 128
  %v2343 = vld [vmem:[%s2342] sm:$0xf]
  %v2344 = vld [vmem:[%s2342 + $0x4] sm:$0xf]
  %v2345 = vld [vmem:[%s2342 + $0x8] sm:$0xf]
  %v2346 = vld [vmem:[%s2342 + $0xc] sm:$0xf]
  %v2347 = vld [vmem:[%s2342 + $0x10] sm:$0xf]
  %v2348 = vld [vmem:[%s2342 + $0x14] sm:$0xf]
  %v2349 = vld [vmem:[%s2342 + $0x18] sm:$0xf]
  %v2350 = vld [vmem:[%s2342 + $0x1c] sm:$0xf]
  %v2351 = vld [vmem:[%s2342 + $0x20] sm:$0xf]
  %v2352 = vld [vmem:[%s2342 + $0x24] sm:$0xf]
  %v2353 = vld [vmem:[%s2342 + $0x28] sm:$0xf]
  %v2354 = vld [vmem:[%s2342 + $0x2c] sm:$0xf]
  %v2355 = vld [vmem:[%s2342 + $0x30] sm:$0xf]
  %v2356 = vld [vmem:[%s2342 + $0x34] sm:$0xf]
  %v2357 = vld [vmem:[%s2342 + $0x38] sm:$0xf]
  %v2358 = vld [vmem:[%s2342 + $0x3c] sm:$0xf]
  %v2375 = vunpack.c.l.b16 %v2343
  %v2376 = vunpack.c.l.b16 %v2344
  %v2377 = vunpack.c.l.b16 %v2345
  %v2378 = vunpack.c.l.b16 %v2346
  %v2379 = vunpack.c.l.b16 %v2347
  %v2380 = vunpack.c.l.b16 %v2348
  %v2381 = vunpack.c.l.b16 %v2349
  %v2382 = vunpack.c.l.b16 %v2350
  %v2383 = vunpack.c.l.b16 %v2351
  %v2384 = vunpack.c.l.b16 %v2352
  %v2385 = vunpack.c.l.b16 %v2353
  %v2386 = vunpack.c.l.b16 %v2354
  %v2387 = vunpack.c.l.b16 %v2355
  %v2388 = vunpack.c.l.b16 %v2356
  %v2389 = vunpack.c.l.b16 %v2357
  %v2390 = vunpack.c.l.b16 %v2358
  %v2391 = vpack.c.b16 %v2376, %v2375
  %v2392 = vpack.c.b16 %v2378, %v2377
  %v2393 = vpack.c.b16 %v2380, %v2379
  %v2394 = vpack.c.b16 %v2382, %v2381
  %v2395 = vpack.c.b16 %v2384, %v2383
  %v2396 = vpack.c.b16 %v2386, %v2385
  %v2397 = vpack.c.b16 %v2388, %v2387
  %v2398 = vpack.c.b16 %v2390, %v2389
  %2407 = vmatprep.subr.bf16.mxu0 0
  %2408 = vmatpush1.bf16.msra.mxu0 %v2398
  %2409 = vmatprep.subr.bf16.mxu0 0
  %2410 = vmatpush1.bf16.msra.mxu0 %v2397
  %2411 = vmatprep.subr.bf16.mxu0 0
  %2412 = vmatpush1.bf16.msra.mxu0 %v2396
  %2413 = vmatprep.subr.bf16.mxu0 0
  %2414 = vmatpush1.bf16.msra.mxu0 %v2395
  %2415 = vmatprep.subr.bf16.mxu0 0
  %2416 = vmatpush1.bf16.msra.mxu0 %v2394
  %2417 = vmatprep.subr.bf16.mxu0 0
  %2418 = vmatpush1.bf16.msra.mxu0 %v2393
  %2419 = vmatprep.subr.bf16.mxu0 0
  %2420 = vmatpush1.bf16.msra.mxu0 %v2392
  %2421 = vmatprep.subr.bf16.mxu0 0
  %2422 = vmatpush1.bf16.msra.mxu0 %v2391
  %2423 = vmatprep.subr.bf16.mxu0 0
  %2424 = vmatpush2.bf16.msra.mxu0 0
  %2425 = vmatprep.subr.bf16.mxu0 0
  %2426 = vmatpush2.bf16.msra.mxu0 0
  %2427 = vmatprep.subr.bf16.mxu0 0
  %2428 = vmatpush2.bf16.msra.mxu0 0
  %2429 = vmatprep.subr.bf16.mxu0 0
  %2430 = vmatpush2.bf16.msra.mxu0 0
  %2431 = vmatprep.subr.bf16.mxu0 0
  %2432 = vmatpush2.bf16.msra.mxu0 0
  %2433 = vmatprep.subr.bf16.mxu0 0
  %2434 = vmatpush2.bf16.msra.mxu0 0
  %2435 = vmatprep.subr.bf16.mxu0 0
  %2436 = vmatpush2.bf16.msra.mxu0 0
  %2437 = vmatprep.subr.bf16.mxu0 0
  %2438 = vmatpush2.bf16.msra.mxu0 0
  %2439 = vmatprep.mubr.bf16.mxu0 0
  %2440 = vmatmul.mubr.bf16.gmra.mxu0 %v2341
  %v2441 = vpop.f32.mrf.mxu0
  %v2442 = vadd.f32 0.0, %v2441
  %v2443 = vpop.f32.mrf.mxu0
  %v2444 = vpop.f32.mrf.mxu0
  %v2445 = vpop.f32.mrf.mxu0
  %2446 = vdwg.mxu0
  %v2447 = vadd.f32 %v2317, %v2442
  %s2448 = scalar_lea.vmem [#allocation3], 6
  %v2449 = vld [vmem:[%s2448] ss:$16 sm:$0x3]
  %v2450 = vld [vmem:[%s2448] ss:$16 sm:$0xc]
  %v2451 = vor.u32 %v2449, %v2450
  %v2452 = vld [vmem:[%s2448] ss:$16 sm:$0x30]
  %v2453 = vor.u32 %v2451, %v2452
  %v2454 = vld [vmem:[%s2448] ss:$16 sm:$0xc0]
  %v2455 = vor.u32 %v2453, %v2454
  %s2456 = scalar_lea.vmem [#allocation3], 7
  %v2457 = vld [vmem:[%s2456] ss:$16 sm:$0x3]
  %v2458 = vld [vmem:[%s2456] ss:$16 sm:$0xc]
  %v2459 = vor.u32 %v2457, %v2458
  %v2460 = vld [vmem:[%s2456] ss:$16 sm:$0x30]
  %v2461 = vor.u32 %v2459, %v2460
  %v2462 = vld [vmem:[%s2456] ss:$16 sm:$0xc0]
  %v2463 = vor.u32 %v2461, %v2462
  %v2464 = vmax.f32 %v2455, %v2463
  %v2465 = vadd.f32 %v2464, %v2088
  %v2466 = vmax.f32 %v2465, 0.0
  %v2467 = vpack.c.bf16 %v2466, %v2466
  %s2468 = scalar_lea.vmem %s5, 192
  %v2469 = vld [vmem:[%s2468] sm:$0xf]
  %v2470 = vld [vmem:[%s2468 + $0x4] sm:$0xf]
  %v2471 = vld [vmem:[%s2468 + $0x8] sm:$0xf]
  %v2472 = vld [vmem:[%s2468 + $0xc] sm:$0xf]
  %v2473 = vld [vmem:[%s2468 + $0x10] sm:$0xf]
  %v2474 = vld [vmem:[%s2468 + $0x14] sm:$0xf]
  %v2475 = vld [vmem:[%s2468 + $0x18] sm:$0xf]
  %v2476 = vld [vmem:[%s2468 + $0x1c] sm:$0xf]
  %v2477 = vld [vmem:[%s2468 + $0x20] sm:$0xf]
  %v2478 = vld [vmem:[%s2468 + $0x24] sm:$0xf]
  %v2479 = vld [vmem:[%s2468 + $0x28] sm:$0xf]
  %v2480 = vld [vmem:[%s2468 + $0x2c] sm:$0xf]
  %v2481 = vld [vmem:[%s2468 + $0x30] sm:$0xf]
  %v2482 = vld [vmem:[%s2468 + $0x34] sm:$0xf]
  %v2483 = vld [vmem:[%s2468 + $0x38] sm:$0xf]
  %v2484 = vld [vmem:[%s2468 + $0x3c] sm:$0xf]
  %v2501 = vunpack.c.l.b16 %v2469
  %v2502 = vunpack.c.l.b16 %v2470
  %v2503 = vunpack.c.l.b16 %v2471
  %v2504 = vunpack.c.l.b16 %v2472
  %v2505 = vunpack.c.l.b16 %v2473
  %v2506 = vunpack.c.l.b16 %v2474
  %v2507 = vunpack.c.l.b16 %v2475
  %v2508 = vunpack.c.l.b16 %v2476
  %v2509 = vunpack.c.l.b16 %v2477
  %v2510 = vunpack.c.l.b16 %v2478
  %v2511 = vunpack.c.l.b16 %v2479
  %v2512 = vunpack.c.l.b16 %v2480
  %v2513 = vunpack.c.l.b16 %v2481
  %v2514 = vunpack.c.l.b16 %v2482
  %v2515 = vunpack.c.l.b16 %v2483
  %v2516 = vunpack.c.l.b16 %v2484
  %v2517 = vpack.c.b16 %v2502, %v2501
  %v2518 = vpack.c.b16 %v2504, %v2503
  %v2519 = vpack.c.b16 %v2506, %v2505
  %v2520 = vpack.c.b16 %v2508, %v2507
  %v2521 = vpack.c.b16 %v2510, %v2509
  %v2522 = vpack.c.b16 %v2512, %v2511
  %v2523 = vpack.c.b16 %v2514, %v2513
  %v2524 = vpack.c.b16 %v2516, %v2515
  %2533 = vmatprep.subr.bf16.mxu0 0
  %2534 = vmatpush1.bf16.msra.mxu0 %v2524
  %2535 = vmatprep.subr.bf16.mxu0 0
  %2536 = vmatpush1.bf16.msra.mxu0 %v2523
  %2537 = vmatprep.subr.bf16.mxu0 0
  %2538 = vmatpush1.bf16.msra.mxu0 %v2522
  %2539 = vmatprep.subr.bf16.mxu0 0
  %2540 = vmatpush1.bf16.msra.mxu0 %v2521
  %2541 = vmatprep.subr.bf16.mxu0 0
  %2542 = vmatpush1.bf16.msra.mxu0 %v2520
  %2543 = vmatprep.subr.bf16.mxu0 0
  %2544 = vmatpush1.bf16.msra.mxu0 %v2519
  %2545 = vmatprep.subr.bf16.mxu0 0
  %2546 = vmatpush1.bf16.msra.mxu0 %v2518
  %2547 = vmatprep.subr.bf16.mxu0 0
  %2548 = vmatpush1.bf16.msra.mxu0 %v2517
  %2549 = vmatprep.subr.bf16.mxu0 0
  %2550 = vmatpush2.bf16.msra.mxu0 0
  %2551 = vmatprep.subr.bf16.mxu0 0
  %2552 = vmatpush2.bf16.msra.mxu0 0
  %2553 = vmatprep.subr.bf16.mxu0 0
  %2554 = vmatpush2.bf16.msra.mxu0 0
  %2555 = vmatprep.subr.bf16.mxu0 0
  %2556 = vmatpush2.bf16.msra.mxu0 0
  %2557 = vmatprep.subr.bf16.mxu0 0
  %2558 = vmatpush2.bf16.msra.mxu0 0
  %2559 = vmatprep.subr.bf16.mxu0 0
  %2560 = vmatpush2.bf16.msra.mxu0 0
  %2561 = vmatprep.subr.bf16.mxu0 0
  %2562 = vmatpush2.bf16.msra.mxu0 0
  %2563 = vmatprep.subr.bf16.mxu0 0
  %2564 = vmatpush2.bf16.msra.mxu0 0
  %2565 = vmatprep.mubr.bf16.mxu0 0
  %2566 = vmatmul.mubr.bf16.gmra.mxu0 %v2467
  %v2567 = vpop.f32.mrf.mxu0
  %v2568 = vadd.f32 0.0, %v2567
  %v2569 = vpop.f32.mrf.mxu0
  %v2570 = vpop.f32.mrf.mxu0
  %v2571 = vpop.f32.mrf.mxu0
  %2572 = vdwg.mxu0
  %v2573 = vadd.f32 %v2447, %v2568
  %s2574 = scalar_lea.vmem [#allocation3], 8
  %v2575 = vld [vmem:[%s2574] ss:$16 sm:$0x3]
  %v2576 = vld [vmem:[%s2574] ss:$16 sm:$0xc]
  %v2577 = vor.u32 %v2575, %v2576
  %v2578 = vld [vmem:[%s2574] ss:$16 sm:$0x30]
  %v2579 = vor.u32 %v2577, %v2578
  %v2580 = vld [vmem:[%s2574] ss:$16 sm:$0xc0]
  %v2581 = vor.u32 %v2579, %v2580
  %s2582 = scalar_lea.vmem [#allocation3], 9
  %v2583 = vld [vmem:[%s2582] ss:$16 sm:$0x3]
  %v2584 = vld [vmem:[%s2582] ss:$16 sm:$0xc]
  %v2585 = vor.u32 %v2583, %v2584
  %v2586 = vld [vmem:[%s2582] ss:$16 sm:$0x30]
  %v2587 = vor.u32 %v2585, %v2586
  %v2588 = vld [vmem:[%s2582] ss:$16 sm:$0xc0]
  %v2589 = vor.u32 %v2587, %v2588
  %v2590 = vmax.f32 %v2581, %v2589
  %v2591 = vadd.f32 %v2590, %v2088
  %v2592 = vmax.f32 %v2591, 0.0
  %v2593 = vpack.c.bf16 %v2592, %v2592
  %s2594 = scalar_lea.vmem %s5, 256
  %v2595 = vld [vmem:[%s2594] sm:$0xf]
  %v2596 = vld [vmem:[%s2594 + $0x4] sm:$0xf]
  %v2597 = vld [vmem:[%s2594 + $0x8] sm:$0xf]
  %v2598 = vld [vmem:[%s2594 + $0xc] sm:$0xf]
  %v2599 = vld [vmem:[%s2594 + $0x10] sm:$0xf]
  %v2600 = vld [vmem:[%s2594 + $0x14] sm:$0xf]
  %v2601 = vld [vmem:[%s2594 + $0x18] sm:$0xf]
  %v2602 = vld [vmem:[%s2594 + $0x1c] sm:$0xf]
  %v2603 = vld [vmem:[%s2594 + $0x20] sm:$0xf]
  %v2604 = vld [vmem:[%s2594 + $0x24] sm:$0xf]
  %v2605 = vld [vmem:[%s2594 + $0x28] sm:$0xf]
  %v2606 = vld [vmem:[%s2594 + $0x2c] sm:$0xf]
  %v2607 = vld [vmem:[%s2594 + $0x30] sm:$0xf]
  %v2608 = vld [vmem:[%s2594 + $0x34] sm:$0xf]
  %v2609 = vld [vmem:[%s2594 + $0x38] sm:$0xf]
  %v2610 = vld [vmem:[%s2594 + $0x3c] sm:$0xf]
  %v2627 = vunpack.c.l.b16 %v2595
  %v2628 = vunpack.c.l.b16 %v2596
  %v2629 = vunpack.c.l.b16 %v2597
  %v2630 = vunpack.c.l.b16 %v2598
  %v2631 = vunpack.c.l.b16 %v2599
  %v2632 = vunpack.c.l.b16 %v2600
  %v2633 = vunpack.c.l.b16 %v2601
  %v2634 = vunpack.c.l.b16 %v2602
  %v2635 = vunpack.c.l.b16 %v2603
  %v2636 = vunpack.c.l.b16 %v2604
  %v2637 = vunpack.c.l.b16 %v2605
  %v2638 = vunpack.c.l.b16 %v2606
  %v2639 = vunpack.c.l.b16 %v2607
  %v2640 = vunpack.c.l.b16 %v2608
  %v2641 = vunpack.c.l.b16 %v2609
  %v2642 = vunpack.c.l.b16 %v2610
  %v2643 = vpack.c.b16 %v2628, %v2627
  %v2644 = vpack.c.b16 %v2630, %v2629
  %v2645 = vpack.c.b16 %v2632, %v2631
  %v2646 = vpack.c.b16 %v2634, %v2633
  %v2647 = vpack.c.b16 %v2636, %v2635
  %v2648 = vpack.c.b16 %v2638, %v2637
  %v2649 = vpack.c.b16 %v2640, %v2639
  %v2650 = vpack.c.b16 %v2642, %v2641
  %2659 = vmatprep.subr.bf16.mxu0 0
  %2660 = vmatpush1.bf16.msra.mxu0 %v2650
  %2661 = vmatprep.subr.bf16.mxu0 0
  %2662 = vmatpush1.bf16.msra.mxu0 %v2649
  %2663 = vmatprep.subr.bf16.mxu0 0
  %2664 = vmatpush1.bf16.msra.mxu0 %v2648
  %2665 = vmatprep.subr.bf16.mxu0 0
  %2666 = vmatpush1.bf16.msra.mxu0 %v2647
  %2667 = vmatprep.subr.bf16.mxu0 0
  %2668 = vmatpush1.bf16.msra.mxu0 %v2646
  %2669 = vmatprep.subr.bf16.mxu0 0
  %2670 = vmatpush1.bf16.msra.mxu0 %v2645
  %2671 = vmatprep.subr.bf16.mxu0 0
  %2672 = vmatpush1.bf16.msra.mxu0 %v2644
  %2673 = vmatprep.subr.bf16.mxu0 0
  %2674 = vmatpush1.bf16.msra.mxu0 %v2643
  %2675 = vmatprep.subr.bf16.mxu0 0
  %2676 = vmatpush2.bf16.msra.mxu0 0
  %2677 = vmatprep.subr.bf16.mxu0 0
  %2678 = vmatpush2.bf16.msra.mxu0 0
  %2679 = vmatprep.subr.bf16.mxu0 0
  %2680 = vmatpush2.bf16.msra.mxu0 0
  %2681 = vmatprep.subr.bf16.mxu0 0
  %2682 = vmatpush2.bf16.msra.mxu0 0
  %2683 = vmatprep.subr.bf16.mxu0 0
  %2684 = vmatpush2.bf16.msra.mxu0 0
  %2685 = vmatprep.subr.bf16.mxu0 0
  %2686 = vmatpush2.bf16.msra.mxu0 0
  %2687 = vmatprep.subr.bf16.mxu0 0
  %2688 = vmatpush2.bf16.msra.mxu0 0
  %2689 = vmatprep.subr.bf16.mxu0 0
  %2690 = vmatpush2.bf16.msra.mxu0 0
  %2691 = vmatprep.mubr.bf16.mxu0 0
  %2692 = vmatmul.mubr.bf16.gmra.mxu0 %v2593
  %v2693 = vpop.f32.mrf.mxu0
  %v2694 = vadd.f32 0.0, %v2693
  %v2695 = vpop.f32.mrf.mxu0
  %v2696 = vpop.f32.mrf.mxu0
  %v2697 = vpop.f32.mrf.mxu0
  %2698 = vdwg.mxu0
  %v2699 = vadd.f32 %v2573, %v2694
  %v2700 = vld [vmem:[%s6] sm:$0x1]
  %v2702 = vlaneseq
  %v2703 = vshrl.u32 %v2702, 7
  %v2704 = vsub.s32 0, %v2703
  %v2705 = vrot.slane %v2700, %v2704
  %v2707 = vadd.f32 %v2699, %v2705
  %v2708 = vmax.f32 %v2707, 0.0
  %v2709 = vpack.c.bf16 %v2708, %v2708
  %v2710 = vld [vmem:[%s7] sm:$0xf]
  %v2711 = vld [vmem:[%s7 + $0x4] sm:$0xf]
  %v2712 = vld [vmem:[%s7 + $0x8] sm:$0xf]
  %v2713 = vld [vmem:[%s7 + $0xc] sm:$0xf]
  %v2714 = vld [vmem:[%s7 + $0x10] sm:$0xf]
  %v2715 = vld [vmem:[%s7 + $0x14] sm:$0xf]
  %v2716 = vld [vmem:[%s7 + $0x18] sm:$0xf]
  %v2717 = vld [vmem:[%s7 + $0x1c] sm:$0xf]
  %v2718 = vld [vmem:[%s7 + $0x20] sm:$0xf]
  %v2719 = vld [vmem:[%s7 + $0x24] sm:$0xf]
  %v2720 = vld [vmem:[%s7 + $0x28] sm:$0xf]
  %v2721 = vld [vmem:[%s7 + $0x2c] sm:$0xf]
  %v2722 = vld [vmem:[%s7 + $0x30] sm:$0xf]
  %v2723 = vld [vmem:[%s7 + $0x34] sm:$0xf]
  %v2724 = vld [vmem:[%s7 + $0x38] sm:$0xf]
  %v2725 = vld [vmem:[%s7 + $0x3c] sm:$0xf]
  %v2726 = vld [vmem:[%s8] sm:$0x1]
  %v2728 = vlaneseq
  %v2729 = vshrl.u32 %v2728, 7
  %v2730 = vsub.s32 0, %v2729
  %v2731 = vrot.slane %v2726, %v2730
  %v2749 = vunpack.c.l.b16 %v2710
  %v2750 = vunpack.c.l.b16 %v2711
  %v2751 = vunpack.c.l.b16 %v2712
  %v2752 = vunpack.c.l.b16 %v2713
  %v2753 = vunpack.c.l.b16 %v2714
  %v2754 = vunpack.c.l.b16 %v2715
  %v2755 = vunpack.c.l.b16 %v2716
  %v2756 = vunpack.c.l.b16 %v2717
  %v2757 = vunpack.c.l.b16 %v2718
  %v2758 = vunpack.c.l.b16 %v2719
  %v2759 = vunpack.c.l.b16 %v2720
  %v2760 = vunpack.c.l.b16 %v2721
  %v2761 = vunpack.c.l.b16 %v2722
  %v2762 = vunpack.c.l.b16 %v2723
  %v2763 = vunpack.c.l.b16 %v2724
  %v2764 = vunpack.c.l.b16 %v2725
  %v2765 = vpack.c.b16 %v2750, %v2749
  %v2766 = vpack.c.b16 %v2752, %v2751
  %v2767 = vpack.c.b16 %v2754, %v2753
  %v2768 = vpack.c.b16 %v2756, %v2755
  %v2769 = vpack.c.b16 %v2758, %v2757
  %v2770 = vpack.c.b16 %v2760, %v2759
  %v2771 = vpack.c.b16 %v2762, %v2761
  %v2772 = vpack.c.b16 %v2764, %v2763
  %2781 = vmatprep.subr.bf16.mxu0 0
  %2782 = vmatpush1.bf16.msra.mxu0 %v2772
  %2783 = vmatprep.subr.bf16.mxu0 0
  %2784 = vmatpush1.bf16.msra.mxu0 %v2771
  %2785 = vmatprep.subr.bf16.mxu0 0
  %2786 = vmatpush1.bf16.msra.mxu0 %v2770
  %2787 = vmatprep.subr.bf16.mxu0 0
  %2788 = vmatpush1.bf16.msra.mxu0 %v2769
  %2789 = vmatprep.subr.bf16.mxu0 0
  %2790 = vmatpush1.bf16.msra.mxu0 %v2768
  %2791 = vmatprep.subr.bf16.mxu0 0
  %2792 = vmatpush1.bf16.msra.mxu0 %v2767
  %2793 = vmatprep.subr.bf16.mxu0 0
  %2794 = vmatpush1.bf16.msra.mxu0 %v2766
  %2795 = vmatprep.subr.bf16.mxu0 0
  %2796 = vmatpush1.bf16.msra.mxu0 %v2765
  %2797 = vmatprep.subr.bf16.mxu0 0
  %2798 = vmatpush2.bf16.msra.mxu0 0
  %2799 = vmatprep.subr.bf16.mxu0 0
  %2800 = vmatpush2.bf16.msra.mxu0 0
  %2801 = vmatprep.subr.bf16.mxu0 0
  %2802 = vmatpush2.bf16.msra.mxu0 0
  %2803 = vmatprep.subr.bf16.mxu0 0
  %2804 = vmatpush2.bf16.msra.mxu0 0
  %2805 = vmatprep.subr.bf16.mxu0 0
  %2806 = vmatpush2.bf16.msra.mxu0 0
  %2807 = vmatprep.subr.bf16.mxu0 0
  %2808 = vmatpush2.bf16.msra.mxu0 0
  %2809 = vmatprep.subr.bf16.mxu0 0
  %2810 = vmatpush2.bf16.msra.mxu0 0
  %2811 = vmatprep.subr.bf16.mxu0 0
  %2812 = vmatpush2.bf16.msra.mxu0 0
  %2813 = vmatprep.mubr.bf16.mxu0 0
  %2814 = vmatmul.mubr.bf16.gmra.mxu0 %v2709
  %v2815 = vpop.f32.mrf.mxu0
  %v2816 = vadd.f32 %v2731, %v2815
  %v2817 = vpop.f32.mrf.mxu0
  %v2818 = vpop.f32.mrf.mxu0
  %v2819 = vpop.f32.mrf.mxu0
  %2820 = vdwg.mxu0
  %v2821 = vmax.f32 %v2816, 0.0
  %v2822 = vpack.c.bf16 %v2821, %v2821
  %v2823 = vld [vmem:[%s9] sm:$0xf]
  %v2824 = vld [vmem:[%s9 + $0x4] sm:$0xf]
  %v2825 = vld [vmem:[%s9 + $0x8] sm:$0xf]
  %v2826 = vld [vmem:[%s9 + $0xc] sm:$0xf]
  %v2827 = vld [vmem:[%s9 + $0x10] sm:$0xf]
  %v2828 = vld [vmem:[%s9 + $0x14] sm:$0xf]
  %v2829 = vld [vmem:[%s9 + $0x18] sm:$0xf]
  %v2830 = vld [vmem:[%s9 + $0x1c] sm:$0xf]
  %v2831 = vld [vmem:[%s9 + $0x20] sm:$0xf]
  %v2832 = vld [vmem:[%s9 + $0x24] sm:$0xf]
  %v2833 = vld [vmem:[%s9 + $0x28] sm:$0xf]
  %v2834 = vld [vmem:[%s9 + $0x2c] sm:$0xf]
  %v2835 = vld [vmem:[%s9 + $0x30] sm:$0xf]
  %v2836 = vld [vmem:[%s9 + $0x34] sm:$0xf]
  %v2837 = vld [vmem:[%s9 + $0x38] sm:$0xf]
  %v2838 = vld [vmem:[%s9 + $0x3c] sm:$0xf]
  %v2839 = vld [vmem:[%s10] sm:$0x1]
  %v2841 = vlaneseq
  %v2842 = vshrl.u32 %v2841, 7
  %v2843 = vsub.s32 0, %v2842
  %v2844 = vrot.slane %v2839, %v2843
  %v2862 = vunpack.c.l.b16 %v2823
  %v2863 = vunpack.c.l.b16 %v2824
  %v2864 = vunpack.c.l.b16 %v2825
  %v2865 = vunpack.c.l.b16 %v2826
  %v2866 = vunpack.c.l.b16 %v2827
  %v2867 = vunpack.c.l.b16 %v2828
  %v2868 = vunpack.c.l.b16 %v2829
  %v2869 = vunpack.c.l.b16 %v2830
  %v2870 = vunpack.c.l.b16 %v2831
  %v2871 = vunpack.c.l.b16 %v2832
  %v2872 = vunpack.c.l.b16 %v2833
  %v2873 = vunpack.c.l.b16 %v2834
  %v2874 = vunpack.c.l.b16 %v2835
  %v2875 = vunpack.c.l.b16 %v2836
  %v2876 = vunpack.c.l.b16 %v2837
  %v2877 = vunpack.c.l.b16 %v2838
  %v2878 = vpack.c.b16 %v2863, %v2862
  %v2879 = vpack.c.b16 %v2865, %v2864
  %v2880 = vpack.c.b16 %v2867, %v2866
  %v2881 = vpack.c.b16 %v2869, %v2868
  %v2882 = vpack.c.b16 %v2871, %v2870
  %v2883 = vpack.c.b16 %v2873, %v2872
  %v2884 = vpack.c.b16 %v2875, %v2874
  %v2885 = vpack.c.b16 %v2877, %v2876
  %2894 = vmatprep.subr.bf16.mxu0 0
  %2895 = vmatpush1.bf16.msra.mxu0 %v2885
  %2896 = vmatprep.subr.bf16.mxu0 0
  %2897 = vmatpush1.bf16.msra.mxu0 %v2884
  %2898 = vmatprep.subr.bf16.mxu0 0
  %2899 = vmatpush1.bf16.msra.mxu0 %v2883
  %2900 = vmatprep.subr.bf16.mxu0 0
  %2901 = vmatpush1.bf16.msra.mxu0 %v2882
  %2902 = vmatprep.subr.bf16.mxu0 0
  %2903 = vmatpush1.bf16.msra.mxu0 %v2881
  %2904 = vmatprep.subr.bf16.mxu0 0
  %2905 = vmatpush1.bf16.msra.mxu0 %v2880
  %2906 = vmatprep.subr.bf16.mxu0 0
  %2907 = vmatpush1.bf16.msra.mxu0 %v2879
  %2908 = vmatprep.subr.bf16.mxu0 0
  %2909 = vmatpush1.bf16.msra.mxu0 %v2878
  %2910 = vmatprep.subr.bf16.mxu0 0
  %2911 = vmatpush2.bf16.msra.mxu0 0
  %2912 = vmatprep.subr.bf16.mxu0 0
  %2913 = vmatpush2.bf16.msra.mxu0 0
  %2914 = vmatprep.subr.bf16.mxu0 0
  %2915 = vmatpush2.bf16.msra.mxu0 0
  %2916 = vmatprep.subr.bf16.mxu0 0
  %2917 = vmatpush2.bf16.msra.mxu0 0
  %2918 = vmatprep.subr.bf16.mxu0 0
  %2919 = vmatpush2.bf16.msra.mxu0 0
  %2920 = vmatprep.subr.bf16.mxu0 0
  %2921 = vmatpush2.bf16.msra.mxu0 0
  %2922 = vmatprep.subr.bf16.mxu0 0
  %2923 = vmatpush2.bf16.msra.mxu0 0
  %2924 = vmatprep.subr.bf16.mxu0 0
  %2925 = vmatpush2.bf16.msra.mxu0 0
  %2926 = vmatprep.mubr.bf16.mxu0 0
  %2927 = vmatmul.mubr.bf16.gmra.mxu0 %v2822
  %v2928 = vpop.f32.mrf.mxu0
  %v2929 = vadd.f32 %v2844, %v2928
  %v2930 = vpop.f32.mrf.mxu0
  %v2931 = vpop.f32.mrf.mxu0
  %v2932 = vpop.f32.mrf.mxu0
  %2933 = vdwg.mxu0
  %2934 = vst [vmem:[%s11] sm:$0xff] %v2929
  // Predicated region
  $region46: #{lenet5_forward.1} parent=0 // pred_check
    _
  $region47: #{lenet5_forward.1} parent=0 // pred_check_branch
    %2936 = sbr.rel (0) target = $region49
  $region48: #{lenet5_forward.1} parent=0 // pred_region
    _
  $region49: #{lenet5_forward.1} parent=0 // pred_fallthru
    _
  // Predicated region
  $region50: #{lenet5_forward.1} parent=0 // pred_check
    _
  $region51: #{lenet5_forward.1} parent=0 // pred_check_branch
    %2938 = sbr.rel (0) target = $region53
  $region52: #{lenet5_forward.1} parent=0 // pred_region
    _
  $region53: #{lenet5_forward.1} parent=0 // pred_fallthru
    _

</llo_original>
